<compile_context>
chip_gen: v7x
topology: tpu7x:2x2x1
jax: 0.10.0
libtpu: 0.0.40
codegen_flags: <defaults>
</compile_context>

<pallas_src>
import functools

import jax
import jax.numpy as jnp
import numpy as np
from jax import lax
from jax.experimental import pallas as pl
from jax.experimental.pallas import tpu as pltpu


# ----------------------------------------------------------------------------
# Net geometry (fixed by the 16*5*5 flatten in the PyTorch module)
# ----------------------------------------------------------------------------
H0, W0, C0 = 32, 32, 3                  # input H, W, Cin
K = 5                                   # conv kernel size
C1 = 6                                  # conv1 out channels
OH1, OW1 = H0 - K + 1, W0 - K + 1       # 28, 28
PH1, PW1 = OH1 // 2, OW1 // 2           # 14, 14
C2 = 16                                 # conv2 out channels
OH2, OW2 = PH1 - K + 1, PW1 - K + 1     # 10, 10
PH2, PW2 = OH2 // 2, OW2 // 2           # 5, 5
NFLAT = C2 * PH2 * PW2                  # 400
F1, F2, F3 = 120, 84, 10
LANE = 128                              # lane-dense FC width
N1 = PW1 * C1                           # 84  (conv1 even/odd slab width)
N2 = PW2 * C2                           # 80  (conv2 even/odd slab width)


# ----------------------------------------------------------------------------
# Fused Pallas kernel: one block of Bt images per grid step
# ----------------------------------------------------------------------------
def _net_kernel(x_ref, wc1_ref, wc2_ref, wf1_ref, wf23_ref, bias_ref, o_ref):
    """x_ref   : (32, Bt, 96)   input, (H, batch, W*Cin); batch is the fast axis
       wc1_ref : (10, 96, 84)   conv1 band slabs, [2i]=even cols, [2i+1]=odd, bf16
       wc2_ref : (10, 84, 80)   conv2 band slabs, bf16
       wf1_ref : (5, 80, 128)   fc1 row slabs (flatten order folded in), bf16
       wf23_ref: (2, 128, 128)  fc2 / fc3 (zero-padded), bf16
       bias_ref: (5, 128)       rows: conv1, conv2, fc1, fc2, fc3 biases, f32
       o_ref   : (Bt, 128)      logits (lanes >= 10 are zero)
    """
    bt = x_ref.shape[1]

    b1 = bias_ref[0:1, :N1]
    b2 = bias_ref[1:2, :N2]
    fb1 = bias_ref[2:3, :]
    fb2 = bias_ref[3:4, :]
    fb3 = bias_ref[4:5, :]

    # ---- conv1: 5 kernel-row band matmuls, even/odd output columns split so
    # ---- the W-pool is a plain jnp.maximum (no lane relayout).
    acc1e = jnp.zeros((OH1 * bt, N1), jnp.float32)
    acc1o = jnp.zeros((OH1 * bt, N1), jnp.float32)
    for i in range(K):
        # Shifted view straight from the ref; (28, Bt, 96) -> (28*Bt, 96) is
        # tile-aligned (Bt % 8 == 0) -> no data movement.
        lhs = x_ref[i:i + OH1, :, :].reshape(OH1 * bt, W0 * C0)
        lhs = lhs.astype(jnp.bfloat16)
        acc1e += jnp.dot(lhs, wc1_ref[2 * i], preferred_element_type=jnp.float32)
        acc1o += jnp.dot(lhs, wc1_ref[2 * i + 1], preferred_element_type=jnp.float32)
    # bias + ReLU + W-pool (pool commutes with the monotone ReLU)
    pw1 = jnp.maximum(jnp.maximum(acc1e + b1, acc1o + b1), 0.0)   # (28*Bt, 84)
    # H-pool: pair of whole (Bt, 84) row-slabs -> tile-aligned, pure VPU max.
    v1 = pw1.reshape(PH1, 2, bt, N1)
    p1 = jnp.maximum(v1[:, 0], v1[:, 1])                          # (14, Bt, 84)

    # ---- conv2: same structure on the pooled map.
    acc2e = jnp.zeros((OH2 * bt, N2), jnp.float32)
    acc2o = jnp.zeros((OH2 * bt, N2), jnp.float32)
    for i in range(K):
        lhs = p1[i:i + OH2, :, :].reshape(OH2 * bt, N1).astype(jnp.bfloat16)
        acc2e += jnp.dot(lhs, wc2_ref[2 * i], preferred_element_type=jnp.float32)
        acc2o += jnp.dot(lhs, wc2_ref[2 * i + 1], preferred_element_type=jnp.float32)
    pw2 = jnp.maximum(jnp.maximum(acc2e + b2, acc2o + b2), 0.0)   # (10*Bt, 80)
    v2 = pw2.reshape(PH2, 2, bt, N2)
    p2 = jnp.maximum(v2[:, 0], v2[:, 1])                          # (5, Bt, 80)

    # ---- fc1 as 5 row-slab matmuls (no sublane->lane flatten), then fc2, fc3.
    z = jnp.zeros((bt, LANE), jnp.float32)
    for h in range(PH2):
        z += jnp.dot(p2[h].astype(jnp.bfloat16), wf1_ref[h],
                     preferred_element_type=jnp.float32)
    h1 = jnp.maximum(z + fb1, 0.0)
    h2 = jnp.maximum(jnp.dot(h1.astype(jnp.bfloat16), wf23_ref[0],
                             preferred_element_type=jnp.float32) + fb2, 0.0)
    logits = jnp.dot(h2.astype(jnp.bfloat16), wf23_ref[1],
                     preferred_element_type=jnp.float32) + fb3
    o_ref[...] = logits.astype(o_ref.dtype)


# ----------------------------------------------------------------------------
# Wrapper
# ----------------------------------------------------------------------------
@functools.partial(jax.jit, static_argnames=("block_b",))
def net_forward(x_nchw, kp, block_b=8):
    B = x_nchw.shape[0]
    bt = max(8, ((block_b + 7) // 8) * 8)          # multiple of 8 (tile-aligned)
    Bp = ((B + bt - 1) // bt) * bt
    x = jnp.pad(x_nchw, ((0, Bp - B), (0, 0), (0, 0), (0, 0)))
    # NCHW -> (H, B, W*Cin): batch in the fast position so Bt images stack
    # along the matmul M dimension inside the kernel.
    x = jnp.transpose(x, (2, 0, 3, 1)).reshape(H0, Bp, W0 * C0)

    out = pl.pallas_call(
        _net_kernel,
        out_shape=jax.ShapeDtypeStruct((Bp, LANE), jnp.float32),
        grid=(Bp // bt,),
        in_specs=[
            pl.BlockSpec((H0, bt, W0 * C0), lambda g: (0, g, 0)),      # x
            pl.BlockSpec((2 * K, W0 * C0, N1), lambda g: (0, 0, 0)),    # wc1
            pl.BlockSpec((2 * K, PW1 * C1, N2), lambda g: (0, 0, 0)),   # wc2
            pl.BlockSpec((PH2, N2, LANE), lambda g: (0, 0, 0)),         # wf1
            pl.BlockSpec((2, LANE, LANE), lambda g: (0, 0, 0)),         # wf23
            pl.BlockSpec((5, LANE), lambda g: (0, 0)),                  # biases
        ],
        out_specs=pl.BlockSpec((bt, LANE), lambda g: (g, 0)),
        compiler_params=pltpu.CompilerParams(
            dimension_semantics=("parallel",)),
    )(x, kp["wc1"], kp["wc2"], kp["wf1"], kp["wf23"], kp["bias"])

    return out[:B, :F3]                            # drop batch pad + lane pad


# ----------------------------------------------------------------------------
# Parameter init (PyTorch-default-like) and one-time kernel-format prep
# ----------------------------------------------------------------------------
def init_params(key):
    def uni(k, shape, fan_in):
        bound = 1.0 / np.sqrt(fan_in)
        return jax.random.uniform(k, shape, jnp.float32, -bound, bound)

    ks = jax.random.split(key, 10)
    return {
        "w1": uni(ks[0], (K, K, C0, C1), C0 * K * K), "b1": uni(ks[1], (C1,), C0 * K * K),
        "w2": uni(ks[2], (K, K, C1, C2), C1 * K * K), "b2": uni(ks[3], (C2,), C1 * K * K),
        "fw1": uni(ks[4], (NFLAT, F1), NFLAT), "fb1": uni(ks[5], (F1,), NFLAT),
        "fw2": uni(ks[6], (F1, F2), F1),       "fb2": uni(ks[7], (F2,), F1),
        "fw3": uni(ks[8], (F2, F3), F2),       "fb3": uni(ks[9], (F3,), F2),
    }


def prepare_kernel_params(p):
    """One-time host-side repack of parameters into the kernel's layouts."""

    def band_eo(w_hwio, w_in):
        # Block-Toeplitz slab per kernel row, output columns split by parity:
        #   wb[2i+par, (o+j)*Cin + ci, (o//2)*Cout + co] = w[i, j, ci, co]
        # so  sum_i X[rows r+i] @ wb[2i+par]  is the conv output at cols of
        # that parity, and the 2x2 W-pool is max(even, odd).
        w = np.asarray(w_hwio, np.float32)
        kh, kw, cin, cout = w.shape
        ow = w_in - kw + 1
        wb = np.zeros((2 * kh, w_in * cin, (ow // 2) * cout), np.float32)
        for i in range(kh):
            for j in range(kw):
                for o in range(ow):
                    par, pw = o % 2, o // 2
                    wb[2 * i + par, (o + j) * cin:(o + j + 1) * cin,
                       pw * cout:(pw + 1) * cout] = w[i, j]
        return jnp.asarray(wb, jnp.bfloat16)

    # fc1 row slabs: fold the PyTorch NCHW flatten order (c*25 + h*5 + w) into
    # the kernel's pooled layout (row h, lane = w*16 + c); pad cols to 128.
    fw1 = np.asarray(p["fw1"], np.float32)
    wf1 = np.zeros((PH2, N2, LANE), np.float32)
    for h in range(PH2):
        for w in range(PW2):
            for c in range(C2):
                wf1[h, w * C2 + c, :F1] = fw1[c * (PH2 * PW2) + h * PW2 + w, :]

    def pad2(a, rows, cols):
        a = np.asarray(a, np.float32)
        out = np.zeros((rows, cols), np.float32)
        out[:a.shape[0], :a.shape[1]] = a
        return out

    wf23 = np.stack([pad2(p["fw2"], LANE, LANE), pad2(p["fw3"], LANE, LANE)])

    bias = np.zeros((5, LANE), np.float32)
    bias[0, :N1] = np.tile(np.asarray(p["b1"], np.float32), PW1)   # lane = pw*6 + co
    bias[1, :N2] = np.tile(np.asarray(p["b2"], np.float32), PW2)   # lane = pw*16 + co
    bias[2, :F1] = np.asarray(p["fb1"], np.float32)
    bias[3, :F2] = np.asarray(p["fb2"], np.float32)
    bias[4, :F3] = np.asarray(p["fb3"], np.float32)

    return {
        "wc1": band_eo(p["w1"], W0),                 # (10, 96, 84)  bf16
        "wc2": band_eo(p["w2"], PW1),                # (10, 84, 80)  bf16
        "wf1": jnp.asarray(wf1, jnp.bfloat16),       # (5, 80, 128)  bf16
        "wf23": jnp.asarray(wf23, jnp.bfloat16),     # (2, 128, 128) bf16
        "bias": jnp.asarray(bias, jnp.float32),      # (5, 128)      f32
    }


# ----------------------------------------------------------------------------
# Pure-JAX f32 reference (correctness check only)
# ----------------------------------------------------------------------------
def reference_forward(x_nchw, p):
    def conv(x, w_hwio, b):
        w_oihw = jnp.transpose(jnp.asarray(w_hwio), (3, 2, 0, 1))
        y = lax.conv_general_dilated(x, w_oihw, (1, 1), "VALID",
                                     dimension_numbers=("NCHW", "OIHW", "NCHW"))
        return y + jnp.asarray(b).reshape(1, -1, 1, 1)

    def pool(x):
        return lax.reduce_window(x, -jnp.inf, lax.max,
                                 (1, 1, 2, 2), (1, 1, 2, 2), "VALID")

    x = pool(jnp.maximum(conv(x_nchw, p["w1"], p["b1"]), 0.0))
    x = pool(jnp.maximum(conv(x, p["w2"], p["b2"]), 0.0))
    x = x.reshape(x.shape[0], NFLAT)
    x = jnp.maximum(x @ p["fw1"] + p["fb1"], 0.0)
    x = jnp.maximum(x @ p["fw2"] + p["fb2"], 0.0)
    return x @ p["fw3"] + p["fb3"]


if __name__ == "__main__":
    key = jax.random.PRNGKey(0)
    k_x, k_p = jax.random.split(key)
    # The module's 16*5*5 flatten fixes the spatial size at 32x32, Cin=3.
    # B=16 with Bt=8 -> 2 grid steps (keeps both v7x TensorCores busy).
    B = 16
    x = jax.random.normal(k_x, (B, C0, H0, W0), jnp.float32)
    params = init_params(k_p)
    kparams = prepare_kernel_params(params)

    out = jax.block_until_ready(net_forward(x, kparams, block_b=8))
    assert out.shape == (B, F3), out.shape

    ref = jax.block_until_ready(reference_forward(x, params))
    out_np, ref_np = np.asarray(out), np.asarray(ref)
    # bf16 matmul operands vs f32 reference -> loosened tolerance.
    assert np.allclose(out_np, ref_np, rtol=5e-2, atol=5e-2), (
        np.max(np.abs(out_np - ref_np)))

    print("KERNEL_OK")
</pallas_src>

<mosaic_0001>
module attributes {stable_mosaic.version = 11 : i64} {
  func.func @_net_kernel(%arg0: i32, %arg1: memref<32x8x96xf32, #tpu.memory_space<vmem>>, %arg2: memref<10x96x84xbf16, #tpu.memory_space<vmem>>, %arg3: memref<10x84x80xbf16, #tpu.memory_space<vmem>>, %arg4: memref<5x80x128xbf16, #tpu.memory_space<vmem>>, %arg5: memref<2x128x128xbf16, #tpu.memory_space<vmem>>, %arg6: memref<5x128xf32, #tpu.memory_space<vmem>>, %arg7: memref<8x128xf32, #tpu.memory_space<vmem>>) attributes {dimension_semantics = [#tpu.dimension_semantics<parallel>], iteration_bounds = array<i64: 2>, scalar_prefetch = 0 : i64, scratch_operands = 0 : i64, tpu.core_type = #tpu.core_type<tc>, window_params = [{transform_indices = @transform_0, window_bounds = array<i64: 32, 8, 96>}, {pipeline_mode = #tpu.pipeline_mode<synchronous>, transform_indices = @transform_1, window_bounds = array<i64: 10, 96, 84>}, {pipeline_mode = #tpu.pipeline_mode<synchronous>, transform_indices = @transform_2, window_bounds = array<i64: 10, 84, 80>}, {pipeline_mode = #tpu.pipeline_mode<synchronous>, transform_indices = @transform_3, window_bounds = array<i64: 5, 80, 128>}, {pipeline_mode = #tpu.pipeline_mode<synchronous>, transform_indices = @transform_4, window_bounds = array<i64: 2, 128, 128>}, {pipeline_mode = #tpu.pipeline_mode<synchronous>, transform_indices = @transform_5, window_bounds = array<i64: 5, 128>}, {transform_indices = @transform_6, window_bounds = array<i64: 8, 128>}]} {
    %c0 = arith.constant 0 : index
    %c0_0 = arith.constant 0 : index
    %0 = vector.load %arg6[%c0, %c0_0] : memref<5x128xf32, #tpu.memory_space<vmem>>, vector<1x84xf32>
    %c1 = arith.constant 1 : index
    %c0_1 = arith.constant 0 : index
    %1 = vector.load %arg6[%c1, %c0_1] : memref<5x128xf32, #tpu.memory_space<vmem>>, vector<1x80xf32>
    %c2 = arith.constant 2 : index
    %c0_2 = arith.constant 0 : index
    %2 = vector.load %arg6[%c2, %c0_2] : memref<5x128xf32, #tpu.memory_space<vmem>>, vector<1x128xf32>
    %c3 = arith.constant 3 : index
    %c0_3 = arith.constant 0 : index
    %3 = vector.load %arg6[%c3, %c0_3] : memref<5x128xf32, #tpu.memory_space<vmem>>, vector<1x128xf32>
    %c4 = arith.constant 4 : index
    %c0_4 = arith.constant 0 : index
    %4 = vector.load %arg6[%c4, %c0_4] : memref<5x128xf32, #tpu.memory_space<vmem>>, vector<1x128xf32>
    %cst = arith.constant 0.000000e+00 : f32
    %5 = vector.broadcast %cst : f32 to vector<224x84xf32>
    %cst_5 = arith.constant 0.000000e+00 : f32
    %6 = vector.broadcast %cst_5 : f32 to vector<224x84xf32>
    %c0_6 = arith.constant 0 : index
    %c0_7 = arith.constant 0 : index
    %c0_8 = arith.constant 0 : index
    %7 = vector.load %arg1[%c0_6, %c0_7, %c0_8] : memref<32x8x96xf32, #tpu.memory_space<vmem>>, vector<28x8x96xf32>
    %8 = vector.shape_cast %7 : vector<28x8x96xf32> to vector<224x96xf32>
    %9 = arith.truncf %8 : vector<224x96xf32> to vector<224x96xbf16>
    %c0_9 = arith.constant 0 : index
    %c0_10 = arith.constant 0 : index
    %c0_11 = arith.constant 0 : index
    %10 = vector.load %arg2[%c0_9, %c0_10, %c0_11] : memref<10x96x84xbf16, #tpu.memory_space<vmem>>, vector<1x96x84xbf16>
    %11 = vector.shape_cast %10 : vector<1x96x84xbf16> to vector<96x84xbf16>
    %cst_12 = arith.constant dense<0.000000e+00> : vector<224x84xf32>
    %12 = tpu.matmul %9, %11, %cst_12 {dimension_numbers = #tpu.dot_dimension_numbers<[1], [0], [0], [1], [0, 0, 1, 1], [], []>} : vector<224x96xbf16>, vector<96x84xbf16>, vector<224x84xf32> -> vector<224x84xf32>
    %13 = arith.addf %5, %12 : vector<224x84xf32>
    %c1_13 = arith.constant 1 : index
    %c0_14 = arith.constant 0 : index
    %c0_15 = arith.constant 0 : index
    %14 = vector.load %arg2[%c1_13, %c0_14, %c0_15] : memref<10x96x84xbf16, #tpu.memory_space<vmem>>, vector<1x96x84xbf16>
    %15 = vector.shape_cast %14 : vector<1x96x84xbf16> to vector<96x84xbf16>
    %cst_16 = arith.constant dense<0.000000e+00> : vector<224x84xf32>
    %16 = tpu.matmul %9, %15, %cst_16 {dimension_numbers = #tpu.dot_dimension_numbers<[1], [0], [0], [1], [0, 0, 1, 1], [], []>} : vector<224x96xbf16>, vector<96x84xbf16>, vector<224x84xf32> -> vector<224x84xf32>
    %17 = arith.addf %6, %16 : vector<224x84xf32>
    %c1_17 = arith.constant 1 : index
    %c0_18 = arith.constant 0 : index
    %c0_19 = arith.constant 0 : index
    %18 = vector.load %arg1[%c1_17, %c0_18, %c0_19] : memref<32x8x96xf32, #tpu.memory_space<vmem>>, vector<28x8x96xf32>
    %19 = vector.shape_cast %18 : vector<28x8x96xf32> to vector<224x96xf32>
    %20 = arith.truncf %19 : vector<224x96xf32> to vector<224x96xbf16>
    %c2_20 = arith.constant 2 : index
    %c0_21 = arith.constant 0 : index
    %c0_22 = arith.constant 0 : index
    %21 = vector.load %arg2[%c2_20, %c0_21, %c0_22] : memref<10x96x84xbf16, #tpu.memory_space<vmem>>, vector<1x96x84xbf16>
    %22 = vector.shape_cast %21 : vector<1x96x84xbf16> to vector<96x84xbf16>
    %cst_23 = arith.constant dense<0.000000e+00> : vector<224x84xf32>
    %23 = tpu.matmul %20, %22, %cst_23 {dimension_numbers = #tpu.dot_dimension_numbers<[1], [0], [0], [1], [0, 0, 1, 1], [], []>} : vector<224x96xbf16>, vector<96x84xbf16>, vector<224x84xf32> -> vector<224x84xf32>
    %24 = arith.addf %13, %23 : vector<224x84xf32>
    %c3_24 = arith.constant 3 : index
    %c0_25 = arith.constant 0 : index
    %c0_26 = arith.constant 0 : index
    %25 = vector.load %arg2[%c3_24, %c0_25, %c0_26] : memref<10x96x84xbf16, #tpu.memory_space<vmem>>, vector<1x96x84xbf16>
    %26 = vector.shape_cast %25 : vector<1x96x84xbf16> to vector<96x84xbf16>
    %cst_27 = arith.constant dense<0.000000e+00> : vector<224x84xf32>
    %27 = tpu.matmul %20, %26, %cst_27 {dimension_numbers = #tpu.dot_dimension_numbers<[1], [0], [0], [1], [0, 0, 1, 1], [], []>} : vector<224x96xbf16>, vector<96x84xbf16>, vector<224x84xf32> -> vector<224x84xf32>
    %28 = arith.addf %17, %27 : vector<224x84xf32>
    %c2_28 = arith.constant 2 : index
    %c0_29 = arith.constant 0 : index
    %c0_30 = arith.constant 0 : index
    %29 = vector.load %arg1[%c2_28, %c0_29, %c0_30] : memref<32x8x96xf32, #tpu.memory_space<vmem>>, vector<28x8x96xf32>
    %30 = vector.shape_cast %29 : vector<28x8x96xf32> to vector<224x96xf32>
    %31 = arith.truncf %30 : vector<224x96xf32> to vector<224x96xbf16>
    %c4_31 = arith.constant 4 : index
    %c0_32 = arith.constant 0 : index
    %c0_33 = arith.constant 0 : index
    %32 = vector.load %arg2[%c4_31, %c0_32, %c0_33] : memref<10x96x84xbf16, #tpu.memory_space<vmem>>, vector<1x96x84xbf16>
    %33 = vector.shape_cast %32 : vector<1x96x84xbf16> to vector<96x84xbf16>
    %cst_34 = arith.constant dense<0.000000e+00> : vector<224x84xf32>
    %34 = tpu.matmul %31, %33, %cst_34 {dimension_numbers = #tpu.dot_dimension_numbers<[1], [0], [0], [1], [0, 0, 1, 1], [], []>} : vector<224x96xbf16>, vector<96x84xbf16>, vector<224x84xf32> -> vector<224x84xf32>
    %35 = arith.addf %24, %34 : vector<224x84xf32>
    %c5 = arith.constant 5 : index
    %c0_35 = arith.constant 0 : index
    %c0_36 = arith.constant 0 : index
    %36 = vector.load %arg2[%c5, %c0_35, %c0_36] : memref<10x96x84xbf16, #tpu.memory_space<vmem>>, vector<1x96x84xbf16>
    %37 = vector.shape_cast %36 : vector<1x96x84xbf16> to vector<96x84xbf16>
    %cst_37 = arith.constant dense<0.000000e+00> : vector<224x84xf32>
    %38 = tpu.matmul %31, %37, %cst_37 {dimension_numbers = #tpu.dot_dimension_numbers<[1], [0], [0], [1], [0, 0, 1, 1], [], []>} : vector<224x96xbf16>, vector<96x84xbf16>, vector<224x84xf32> -> vector<224x84xf32>
    %39 = arith.addf %28, %38 : vector<224x84xf32>
    %c3_38 = arith.constant 3 : index
    %c0_39 = arith.constant 0 : index
    %c0_40 = arith.constant 0 : index
    %40 = vector.load %arg1[%c3_38, %c0_39, %c0_40] : memref<32x8x96xf32, #tpu.memory_space<vmem>>, vector<28x8x96xf32>
    %41 = vector.shape_cast %40 : vector<28x8x96xf32> to vector<224x96xf32>
    %42 = arith.truncf %41 : vector<224x96xf32> to vector<224x96xbf16>
    %c6 = arith.constant 6 : index
    %c0_41 = arith.constant 0 : index
    %c0_42 = arith.constant 0 : index
    %43 = vector.load %arg2[%c6, %c0_41, %c0_42] : memref<10x96x84xbf16, #tpu.memory_space<vmem>>, vector<1x96x84xbf16>
    %44 = vector.shape_cast %43 : vector<1x96x84xbf16> to vector<96x84xbf16>
    %cst_43 = arith.constant dense<0.000000e+00> : vector<224x84xf32>
    %45 = tpu.matmul %42, %44, %cst_43 {dimension_numbers = #tpu.dot_dimension_numbers<[1], [0], [0], [1], [0, 0, 1, 1], [], []>} : vector<224x96xbf16>, vector<96x84xbf16>, vector<224x84xf32> -> vector<224x84xf32>
    %46 = arith.addf %35, %45 : vector<224x84xf32>
    %c7 = arith.constant 7 : index
    %c0_44 = arith.constant 0 : index
    %c0_45 = arith.constant 0 : index
    %47 = vector.load %arg2[%c7, %c0_44, %c0_45] : memref<10x96x84xbf16, #tpu.memory_space<vmem>>, vector<1x96x84xbf16>
    %48 = vector.shape_cast %47 : vector<1x96x84xbf16> to vector<96x84xbf16>
    %cst_46 = arith.constant dense<0.000000e+00> : vector<224x84xf32>
    %49 = tpu.matmul %42, %48, %cst_46 {dimension_numbers = #tpu.dot_dimension_numbers<[1], [0], [0], [1], [0, 0, 1, 1], [], []>} : vector<224x96xbf16>, vector<96x84xbf16>, vector<224x84xf32> -> vector<224x84xf32>
    %50 = arith.addf %39, %49 : vector<224x84xf32>
    %c4_47 = arith.constant 4 : index
    %c0_48 = arith.constant 0 : index
    %c0_49 = arith.constant 0 : index
    %51 = vector.load %arg1[%c4_47, %c0_48, %c0_49] : memref<32x8x96xf32, #tpu.memory_space<vmem>>, vector<28x8x96xf32>
    %52 = vector.shape_cast %51 : vector<28x8x96xf32> to vector<224x96xf32>
    %53 = arith.truncf %52 : vector<224x96xf32> to vector<224x96xbf16>
    %c8 = arith.constant 8 : index
    %c0_50 = arith.constant 0 : index
    %c0_51 = arith.constant 0 : index
    %54 = vector.load %arg2[%c8, %c0_50, %c0_51] : memref<10x96x84xbf16, #tpu.memory_space<vmem>>, vector<1x96x84xbf16>
    %55 = vector.shape_cast %54 : vector<1x96x84xbf16> to vector<96x84xbf16>
    %cst_52 = arith.constant dense<0.000000e+00> : vector<224x84xf32>
    %56 = tpu.matmul %53, %55, %cst_52 {dimension_numbers = #tpu.dot_dimension_numbers<[1], [0], [0], [1], [0, 0, 1, 1], [], []>} : vector<224x96xbf16>, vector<96x84xbf16>, vector<224x84xf32> -> vector<224x84xf32>
    %57 = arith.addf %46, %56 : vector<224x84xf32>
    %c9 = arith.constant 9 : index
    %c0_53 = arith.constant 0 : index
    %c0_54 = arith.constant 0 : index
    %58 = vector.load %arg2[%c9, %c0_53, %c0_54] : memref<10x96x84xbf16, #tpu.memory_space<vmem>>, vector<1x96x84xbf16>
    %59 = vector.shape_cast %58 : vector<1x96x84xbf16> to vector<96x84xbf16>
    %cst_55 = arith.constant dense<0.000000e+00> : vector<224x84xf32>
    %60 = tpu.matmul %53, %59, %cst_55 {dimension_numbers = #tpu.dot_dimension_numbers<[1], [0], [0], [1], [0, 0, 1, 1], [], []>} : vector<224x96xbf16>, vector<96x84xbf16>, vector<224x84xf32> -> vector<224x84xf32>
    %61 = arith.addf %50, %60 : vector<224x84xf32>
    %62 = vector.broadcast %0 : vector<1x84xf32> to vector<224x84xf32>
    %63 = arith.addf %57, %62 : vector<224x84xf32>
    %64 = vector.broadcast %0 : vector<1x84xf32> to vector<224x84xf32>
    %65 = arith.addf %61, %64 : vector<224x84xf32>
    %66 = arith.maximumf %63, %65 : vector<224x84xf32>
    %cst_56 = arith.constant 0.000000e+00 : f32
    %67 = vector.broadcast %cst_56 : f32 to vector<224x84xf32>
    %68 = arith.maximumf %66, %67 : vector<224x84xf32>
    %69 = vector.shape_cast %68 : vector<224x84xf32> to vector<14x2x8x84xf32>
    %70 = vector.extract_strided_slice %69 {offsets = [0, 0, 0, 0], sizes = [14, 1, 8, 84], strides = [1, 1, 1, 1]} : vector<14x2x8x84xf32> to vector<14x1x8x84xf32>
    %71 = vector.shape_cast %70 : vector<14x1x8x84xf32> to vector<14x8x84xf32>
    %72 = vector.extract_strided_slice %69 {offsets = [0, 1, 0, 0], sizes = [14, 1, 8, 84], strides = [1, 1, 1, 1]} : vector<14x2x8x84xf32> to vector<14x1x8x84xf32>
    %73 = vector.shape_cast %72 : vector<14x1x8x84xf32> to vector<14x8x84xf32>
    %74 = arith.maximumf %71, %73 : vector<14x8x84xf32>
    %cst_57 = arith.constant 0.000000e+00 : f32
    %75 = vector.broadcast %cst_57 : f32 to vector<80x80xf32>
    %cst_58 = arith.constant 0.000000e+00 : f32
    %76 = vector.broadcast %cst_58 : f32 to vector<80x80xf32>
    %77 = vector.extract_strided_slice %74 {offsets = [0, 0, 0], sizes = [10, 8, 84], strides = [1, 1, 1]} : vector<14x8x84xf32> to vector<10x8x84xf32>
    %78 = vector.shape_cast %77 : vector<10x8x84xf32> to vector<80x84xf32>
    %79 = arith.truncf %78 : vector<80x84xf32> to vector<80x84xbf16>
    %c0_59 = arith.constant 0 : index
    %c0_60 = arith.constant 0 : index
    %c0_61 = arith.constant 0 : index
    %80 = vector.load %arg3[%c0_59, %c0_60, %c0_61] : memref<10x84x80xbf16, #tpu.memory_space<vmem>>, vector<1x84x80xbf16>
    %81 = vector.shape_cast %80 : vector<1x84x80xbf16> to vector<84x80xbf16>
    %cst_62 = arith.constant dense<0.000000e+00> : vector<80x80xf32>
    %82 = tpu.matmul %79, %81, %cst_62 {dimension_numbers = #tpu.dot_dimension_numbers<[1], [0], [0], [1], [0, 0, 1, 1], [], []>} : vector<80x84xbf16>, vector<84x80xbf16>, vector<80x80xf32> -> vector<80x80xf32>
    %83 = arith.addf %75, %82 : vector<80x80xf32>
    %c1_63 = arith.constant 1 : index
    %c0_64 = arith.constant 0 : index
    %c0_65 = arith.constant 0 : index
    %84 = vector.load %arg3[%c1_63, %c0_64, %c0_65] : memref<10x84x80xbf16, #tpu.memory_space<vmem>>, vector<1x84x80xbf16>
    %85 = vector.shape_cast %84 : vector<1x84x80xbf16> to vector<84x80xbf16>
    %cst_66 = arith.constant dense<0.000000e+00> : vector<80x80xf32>
    %86 = tpu.matmul %79, %85, %cst_66 {dimension_numbers = #tpu.dot_dimension_numbers<[1], [0], [0], [1], [0, 0, 1, 1], [], []>} : vector<80x84xbf16>, vector<84x80xbf16>, vector<80x80xf32> -> vector<80x80xf32>
    %87 = arith.addf %76, %86 : vector<80x80xf32>
    %88 = vector.extract_strided_slice %74 {offsets = [1, 0, 0], sizes = [10, 8, 84], strides = [1, 1, 1]} : vector<14x8x84xf32> to vector<10x8x84xf32>
    %89 = vector.shape_cast %88 : vector<10x8x84xf32> to vector<80x84xf32>
    %90 = arith.truncf %89 : vector<80x84xf32> to vector<80x84xbf16>
    %c2_67 = arith.constant 2 : index
    %c0_68 = arith.constant 0 : index
    %c0_69 = arith.constant 0 : index
    %91 = vector.load %arg3[%c2_67, %c0_68, %c0_69] : memref<10x84x80xbf16, #tpu.memory_space<vmem>>, vector<1x84x80xbf16>
    %92 = vector.shape_cast %91 : vector<1x84x80xbf16> to vector<84x80xbf16>
    %cst_70 = arith.constant dense<0.000000e+00> : vector<80x80xf32>
    %93 = tpu.matmul %90, %92, %cst_70 {dimension_numbers = #tpu.dot_dimension_numbers<[1], [0], [0], [1], [0, 0, 1, 1], [], []>} : vector<80x84xbf16>, vector<84x80xbf16>, vector<80x80xf32> -> vector<80x80xf32>
    %94 = arith.addf %83, %93 : vector<80x80xf32>
    %c3_71 = arith.constant 3 : index
    %c0_72 = arith.constant 0 : index
    %c0_73 = arith.constant 0 : index
    %95 = vector.load %arg3[%c3_71, %c0_72, %c0_73] : memref<10x84x80xbf16, #tpu.memory_space<vmem>>, vector<1x84x80xbf16>
    %96 = vector.shape_cast %95 : vector<1x84x80xbf16> to vector<84x80xbf16>
    %cst_74 = arith.constant dense<0.000000e+00> : vector<80x80xf32>
    %97 = tpu.matmul %90, %96, %cst_74 {dimension_numbers = #tpu.dot_dimension_numbers<[1], [0], [0], [1], [0, 0, 1, 1], [], []>} : vector<80x84xbf16>, vector<84x80xbf16>, vector<80x80xf32> -> vector<80x80xf32>
    %98 = arith.addf %87, %97 : vector<80x80xf32>
    %99 = vector.extract_strided_slice %74 {offsets = [2, 0, 0], sizes = [10, 8, 84], strides = [1, 1, 1]} : vector<14x8x84xf32> to vector<10x8x84xf32>
    %100 = vector.shape_cast %99 : vector<10x8x84xf32> to vector<80x84xf32>
    %101 = arith.truncf %100 : vector<80x84xf32> to vector<80x84xbf16>
    %c4_75 = arith.constant 4 : index
    %c0_76 = arith.constant 0 : index
    %c0_77 = arith.constant 0 : index
    %102 = vector.load %arg3[%c4_75, %c0_76, %c0_77] : memref<10x84x80xbf16, #tpu.memory_space<vmem>>, vector<1x84x80xbf16>
    %103 = vector.shape_cast %102 : vector<1x84x80xbf16> to vector<84x80xbf16>
    %cst_78 = arith.constant dense<0.000000e+00> : vector<80x80xf32>
    %104 = tpu.matmul %101, %103, %cst_78 {dimension_numbers = #tpu.dot_dimension_numbers<[1], [0], [0], [1], [0, 0, 1, 1], [], []>} : vector<80x84xbf16>, vector<84x80xbf16>, vector<80x80xf32> -> vector<80x80xf32>
    %105 = arith.addf %94, %104 : vector<80x80xf32>
    %c5_79 = arith.constant 5 : index
    %c0_80 = arith.constant 0 : index
    %c0_81 = arith.constant 0 : index
    %106 = vector.load %arg3[%c5_79, %c0_80, %c0_81] : memref<10x84x80xbf16, #tpu.memory_space<vmem>>, vector<1x84x80xbf16>
    %107 = vector.shape_cast %106 : vector<1x84x80xbf16> to vector<84x80xbf16>
    %cst_82 = arith.constant dense<0.000000e+00> : vector<80x80xf32>
    %108 = tpu.matmul %101, %107, %cst_82 {dimension_numbers = #tpu.dot_dimension_numbers<[1], [0], [0], [1], [0, 0, 1, 1], [], []>} : vector<80x84xbf16>, vector<84x80xbf16>, vector<80x80xf32> -> vector<80x80xf32>
    %109 = arith.addf %98, %108 : vector<80x80xf32>
    %110 = vector.extract_strided_slice %74 {offsets = [3, 0, 0], sizes = [10, 8, 84], strides = [1, 1, 1]} : vector<14x8x84xf32> to vector<10x8x84xf32>
    %111 = vector.shape_cast %110 : vector<10x8x84xf32> to vector<80x84xf32>
    %112 = arith.truncf %111 : vector<80x84xf32> to vector<80x84xbf16>
    %c6_83 = arith.constant 6 : index
    %c0_84 = arith.constant 0 : index
    %c0_85 = arith.constant 0 : index
    %113 = vector.load %arg3[%c6_83, %c0_84, %c0_85] : memref<10x84x80xbf16, #tpu.memory_space<vmem>>, vector<1x84x80xbf16>
    %114 = vector.shape_cast %113 : vector<1x84x80xbf16> to vector<84x80xbf16>
    %cst_86 = arith.constant dense<0.000000e+00> : vector<80x80xf32>
    %115 = tpu.matmul %112, %114, %cst_86 {dimension_numbers = #tpu.dot_dimension_numbers<[1], [0], [0], [1], [0, 0, 1, 1], [], []>} : vector<80x84xbf16>, vector<84x80xbf16>, vector<80x80xf32> -> vector<80x80xf32>
    %116 = arith.addf %105, %115 : vector<80x80xf32>
    %c7_87 = arith.constant 7 : index
    %c0_88 = arith.constant 0 : index
    %c0_89 = arith.constant 0 : index
    %117 = vector.load %arg3[%c7_87, %c0_88, %c0_89] : memref<10x84x80xbf16, #tpu.memory_space<vmem>>, vector<1x84x80xbf16>
    %118 = vector.shape_cast %117 : vector<1x84x80xbf16> to vector<84x80xbf16>
    %cst_90 = arith.constant dense<0.000000e+00> : vector<80x80xf32>
    %119 = tpu.matmul %112, %118, %cst_90 {dimension_numbers = #tpu.dot_dimension_numbers<[1], [0], [0], [1], [0, 0, 1, 1], [], []>} : vector<80x84xbf16>, vector<84x80xbf16>, vector<80x80xf32> -> vector<80x80xf32>
    %120 = arith.addf %109, %119 : vector<80x80xf32>
    %121 = vector.extract_strided_slice %74 {offsets = [4, 0, 0], sizes = [10, 8, 84], strides = [1, 1, 1]} : vector<14x8x84xf32> to vector<10x8x84xf32>
    %122 = vector.shape_cast %121 : vector<10x8x84xf32> to vector<80x84xf32>
    %123 = arith.truncf %122 : vector<80x84xf32> to vector<80x84xbf16>
    %c8_91 = arith.constant 8 : index
    %c0_92 = arith.constant 0 : index
    %c0_93 = arith.constant 0 : index
    %124 = vector.load %arg3[%c8_91, %c0_92, %c0_93] : memref<10x84x80xbf16, #tpu.memory_space<vmem>>, vector<1x84x80xbf16>
    %125 = vector.shape_cast %124 : vector<1x84x80xbf16> to vector<84x80xbf16>
    %cst_94 = arith.constant dense<0.000000e+00> : vector<80x80xf32>
    %126 = tpu.matmul %123, %125, %cst_94 {dimension_numbers = #tpu.dot_dimension_numbers<[1], [0], [0], [1], [0, 0, 1, 1], [], []>} : vector<80x84xbf16>, vector<84x80xbf16>, vector<80x80xf32> -> vector<80x80xf32>
    %127 = arith.addf %116, %126 : vector<80x80xf32>
    %c9_95 = arith.constant 9 : index
    %c0_96 = arith.constant 0 : index
    %c0_97 = arith.constant 0 : index
    %128 = vector.load %arg3[%c9_95, %c0_96, %c0_97] : memref<10x84x80xbf16, #tpu.memory_space<vmem>>, vector<1x84x80xbf16>
    %129 = vector.shape_cast %128 : vector<1x84x80xbf16> to vector<84x80xbf16>
    %cst_98 = arith.constant dense<0.000000e+00> : vector<80x80xf32>
    %130 = tpu.matmul %123, %129, %cst_98 {dimension_numbers = #tpu.dot_dimension_numbers<[1], [0], [0], [1], [0, 0, 1, 1], [], []>} : vector<80x84xbf16>, vector<84x80xbf16>, vector<80x80xf32> -> vector<80x80xf32>
    %131 = arith.addf %120, %130 : vector<80x80xf32>
    %132 = vector.broadcast %1 : vector<1x80xf32> to vector<80x80xf32>
    %133 = arith.addf %127, %132 : vector<80x80xf32>
    %134 = vector.broadcast %1 : vector<1x80xf32> to vector<80x80xf32>
    %135 = arith.addf %131, %134 : vector<80x80xf32>
    %136 = arith.maximumf %133, %135 : vector<80x80xf32>
    %cst_99 = arith.constant 0.000000e+00 : f32
    %137 = vector.broadcast %cst_99 : f32 to vector<80x80xf32>
    %138 = arith.maximumf %136, %137 : vector<80x80xf32>
    %139 = vector.shape_cast %138 : vector<80x80xf32> to vector<5x2x8x80xf32>
    %140 = vector.extract_strided_slice %139 {offsets = [0, 0, 0, 0], sizes = [5, 1, 8, 80], strides = [1, 1, 1, 1]} : vector<5x2x8x80xf32> to vector<5x1x8x80xf32>
    %141 = vector.shape_cast %140 : vector<5x1x8x80xf32> to vector<5x8x80xf32>
    %142 = vector.extract_strided_slice %139 {offsets = [0, 1, 0, 0], sizes = [5, 1, 8, 80], strides = [1, 1, 1, 1]} : vector<5x2x8x80xf32> to vector<5x1x8x80xf32>
    %143 = vector.shape_cast %142 : vector<5x1x8x80xf32> to vector<5x8x80xf32>
    %144 = arith.maximumf %141, %143 : vector<5x8x80xf32>
    %cst_100 = arith.constant 0.000000e+00 : f32
    %145 = vector.broadcast %cst_100 : f32 to vector<8x128xf32>
    %146 = vector.extract_strided_slice %144 {offsets = [0, 0, 0], sizes = [1, 8, 80], strides = [1, 1, 1]} : vector<5x8x80xf32> to vector<1x8x80xf32>
    %147 = vector.shape_cast %146 : vector<1x8x80xf32> to vector<8x80xf32>
    %148 = arith.truncf %147 : vector<8x80xf32> to vector<8x80xbf16>
    %c0_101 = arith.constant 0 : index
    %c0_102 = arith.constant 0 : index
    %c0_103 = arith.constant 0 : index
    %149 = vector.load %arg4[%c0_101, %c0_102, %c0_103] : memref<5x80x128xbf16, #tpu.memory_space<vmem>>, vector<1x80x128xbf16>
    %150 = vector.shape_cast %149 : vector<1x80x128xbf16> to vector<80x128xbf16>
    %cst_104 = arith.constant dense<0.000000e+00> : vector<8x128xf32>
    %151 = tpu.matmul %148, %150, %cst_104 {dimension_numbers = #tpu.dot_dimension_numbers<[1], [0], [0], [1], [0, 0, 1, 1], [], []>} : vector<8x80xbf16>, vector<80x128xbf16>, vector<8x128xf32> -> vector<8x128xf32>
    %152 = arith.addf %145, %151 : vector<8x128xf32>
    %153 = vector.extract_strided_slice %144 {offsets = [1, 0, 0], sizes = [1, 8, 80], strides = [1, 1, 1]} : vector<5x8x80xf32> to vector<1x8x80xf32>
    %154 = vector.shape_cast %153 : vector<1x8x80xf32> to vector<8x80xf32>
    %155 = arith.truncf %154 : vector<8x80xf32> to vector<8x80xbf16>
    %c1_105 = arith.constant 1 : index
    %c0_106 = arith.constant 0 : index
    %c0_107 = arith.constant 0 : index
    %156 = vector.load %arg4[%c1_105, %c0_106, %c0_107] : memref<5x80x128xbf16, #tpu.memory_space<vmem>>, vector<1x80x128xbf16>
    %157 = vector.shape_cast %156 : vector<1x80x128xbf16> to vector<80x128xbf16>
    %cst_108 = arith.constant dense<0.000000e+00> : vector<8x128xf32>
    %158 = tpu.matmul %155, %157, %cst_108 {dimension_numbers = #tpu.dot_dimension_numbers<[1], [0], [0], [1], [0, 0, 1, 1], [], []>} : vector<8x80xbf16>, vector<80x128xbf16>, vector<8x128xf32> -> vector<8x128xf32>
    %159 = arith.addf %152, %158 : vector<8x128xf32>
    %160 = vector.extract_strided_slice %144 {offsets = [2, 0, 0], sizes = [1, 8, 80], strides = [1, 1, 1]} : vector<5x8x80xf32> to vector<1x8x80xf32>
    %161 = vector.shape_cast %160 : vector<1x8x80xf32> to vector<8x80xf32>
    %162 = arith.truncf %161 : vector<8x80xf32> to vector<8x80xbf16>
    %c2_109 = arith.constant 2 : index
    %c0_110 = arith.constant 0 : index
    %c0_111 = arith.constant 0 : index
    %163 = vector.load %arg4[%c2_109, %c0_110, %c0_111] : memref<5x80x128xbf16, #tpu.memory_space<vmem>>, vector<1x80x128xbf16>
    %164 = vector.shape_cast %163 : vector<1x80x128xbf16> to vector<80x128xbf16>
    %cst_112 = arith.constant dense<0.000000e+00> : vector<8x128xf32>
    %165 = tpu.matmul %162, %164, %cst_112 {dimension_numbers = #tpu.dot_dimension_numbers<[1], [0], [0], [1], [0, 0, 1, 1], [], []>} : vector<8x80xbf16>, vector<80x128xbf16>, vector<8x128xf32> -> vector<8x128xf32>
    %166 = arith.addf %159, %165 : vector<8x128xf32>
    %167 = vector.extract_strided_slice %144 {offsets = [3, 0, 0], sizes = [1, 8, 80], strides = [1, 1, 1]} : vector<5x8x80xf32> to vector<1x8x80xf32>
    %168 = vector.shape_cast %167 : vector<1x8x80xf32> to vector<8x80xf32>
    %169 = arith.truncf %168 : vector<8x80xf32> to vector<8x80xbf16>
    %c3_113 = arith.constant 3 : index
    %c0_114 = arith.constant 0 : index
    %c0_115 = arith.constant 0 : index
    %170 = vector.load %arg4[%c3_113, %c0_114, %c0_115] : memref<5x80x128xbf16, #tpu.memory_space<vmem>>, vector<1x80x128xbf16>
    %171 = vector.shape_cast %170 : vector<1x80x128xbf16> to vector<80x128xbf16>
    %cst_116 = arith.constant dense<0.000000e+00> : vector<8x128xf32>
    %172 = tpu.matmul %169, %171, %cst_116 {dimension_numbers = #tpu.dot_dimension_numbers<[1], [0], [0], [1], [0, 0, 1, 1], [], []>} : vector<8x80xbf16>, vector<80x128xbf16>, vector<8x128xf32> -> vector<8x128xf32>
    %173 = arith.addf %166, %172 : vector<8x128xf32>
    %174 = vector.extract_strided_slice %144 {offsets = [4, 0, 0], sizes = [1, 8, 80], strides = [1, 1, 1]} : vector<5x8x80xf32> to vector<1x8x80xf32>
    %175 = vector.shape_cast %174 : vector<1x8x80xf32> to vector<8x80xf32>
    %176 = arith.truncf %175 : vector<8x80xf32> to vector<8x80xbf16>
    %c4_117 = arith.constant 4 : index
    %c0_118 = arith.constant 0 : index
    %c0_119 = arith.constant 0 : index
    %177 = vector.load %arg4[%c4_117, %c0_118, %c0_119] : memref<5x80x128xbf16, #tpu.memory_space<vmem>>, vector<1x80x128xbf16>
    %178 = vector.shape_cast %177 : vector<1x80x128xbf16> to vector<80x128xbf16>
    %cst_120 = arith.constant dense<0.000000e+00> : vector<8x128xf32>
    %179 = tpu.matmul %176, %178, %cst_120 {dimension_numbers = #tpu.dot_dimension_numbers<[1], [0], [0], [1], [0, 0, 1, 1], [], []>} : vector<8x80xbf16>, vector<80x128xbf16>, vector<8x128xf32> -> vector<8x128xf32>
    %180 = arith.addf %173, %179 : vector<8x128xf32>
    %181 = vector.broadcast %2 : vector<1x128xf32> to vector<8x128xf32>
    %182 = arith.addf %180, %181 : vector<8x128xf32>
    %cst_121 = arith.constant 0.000000e+00 : f32
    %183 = vector.broadcast %cst_121 : f32 to vector<8x128xf32>
    %184 = arith.maximumf %182, %183 : vector<8x128xf32>
    %185 = arith.truncf %184 : vector<8x128xf32> to vector<8x128xbf16>
    %c0_122 = arith.constant 0 : index
    %c0_123 = arith.constant 0 : index
    %c0_124 = arith.constant 0 : index
    %186 = vector.load %arg5[%c0_122, %c0_123, %c0_124] : memref<2x128x128xbf16, #tpu.memory_space<vmem>>, vector<1x128x128xbf16>
    %187 = vector.shape_cast %186 : vector<1x128x128xbf16> to vector<128x128xbf16>
    %cst_125 = arith.constant dense<0.000000e+00> : vector<8x128xf32>
    %188 = tpu.matmul %185, %187, %cst_125 {dimension_numbers = #tpu.dot_dimension_numbers<[1], [0], [0], [1], [0, 0, 1, 1], [], []>} : vector<8x128xbf16>, vector<128x128xbf16>, vector<8x128xf32> -> vector<8x128xf32>
    %189 = vector.broadcast %3 : vector<1x128xf32> to vector<8x128xf32>
    %190 = arith.addf %188, %189 : vector<8x128xf32>
    %cst_126 = arith.constant 0.000000e+00 : f32
    %191 = vector.broadcast %cst_126 : f32 to vector<8x128xf32>
    %192 = arith.maximumf %190, %191 : vector<8x128xf32>
    %193 = arith.truncf %192 : vector<8x128xf32> to vector<8x128xbf16>
    %c1_127 = arith.constant 1 : index
    %c0_128 = arith.constant 0 : index
    %c0_129 = arith.constant 0 : index
    %194 = vector.load %arg5[%c1_127, %c0_128, %c0_129] : memref<2x128x128xbf16, #tpu.memory_space<vmem>>, vector<1x128x128xbf16>
    %195 = vector.shape_cast %194 : vector<1x128x128xbf16> to vector<128x128xbf16>
    %cst_130 = arith.constant dense<0.000000e+00> : vector<8x128xf32>
    %196 = tpu.matmul %193, %195, %cst_130 {dimension_numbers = #tpu.dot_dimension_numbers<[1], [0], [0], [1], [0, 0, 1, 1], [], []>} : vector<8x128xbf16>, vector<128x128xbf16>, vector<8x128xf32> -> vector<8x128xf32>
    %197 = vector.broadcast %4 : vector<1x128xf32> to vector<8x128xf32>
    %198 = arith.addf %196, %197 : vector<8x128xf32>
    %c0_131 = arith.constant 0 : index
    %c0_132 = arith.constant 0 : index
    %199 = vector.load %arg7[%c0_131, %c0_132] : memref<8x128xf32, #tpu.memory_space<vmem>>, vector<8x128xf32>
    tpu.vector_store %arg7[%c0_131, %c0_132], %198 {strides = array<i32>} : memref<8x128xf32, #tpu.memory_space<vmem>>, vector<8x128xf32>,
    return
  }
  func.func @transform_0(%arg0: i32) -> (i32, i32, i32) {
    %c0_i32 = arith.constant 0 : i32
    %c0_i32_0 = arith.constant 0 : i32
    %c0_i32_1 = arith.constant 0 : i32
    return %c0_i32, %arg0, %c0_i32_0 : i32, i32, i32
  }
  func.func @transform_1(%arg0: i32) -> (i32, i32, i32) {
    %c0_i32 = arith.constant 0 : i32
    %c0_i32_0 = arith.constant 0 : i32
    %c0_i32_1 = arith.constant 0 : i32
    %c0_i32_2 = arith.constant 0 : i32
    return %c0_i32, %c0_i32_0, %c0_i32_1 : i32, i32, i32
  }
  func.func @transform_2(%arg0: i32) -> (i32, i32, i32) {
    %c0_i32 = arith.constant 0 : i32
    %c0_i32_0 = arith.constant 0 : i32
    %c0_i32_1 = arith.constant 0 : i32
    %c0_i32_2 = arith.constant 0 : i32
    return %c0_i32, %c0_i32_0, %c0_i32_1 : i32, i32, i32
  }
  func.func @transform_3(%arg0: i32) -> (i32, i32, i32) {
    %c0_i32 = arith.constant 0 : i32
    %c0_i32_0 = arith.constant 0 : i32
    %c0_i32_1 = arith.constant 0 : i32
    %c0_i32_2 = arith.constant 0 : i32
    return %c0_i32, %c0_i32_0, %c0_i32_1 : i32, i32, i32
  }
  func.func @transform_4(%arg0: i32) -> (i32, i32, i32) {
    %c0_i32 = arith.constant 0 : i32
    %c0_i32_0 = arith.constant 0 : i32
    %c0_i32_1 = arith.constant 0 : i32
    %c0_i32_2 = arith.constant 0 : i32
    return %c0_i32, %c0_i32_0, %c0_i32_1 : i32, i32, i32
  }
  func.func @transform_5(%arg0: i32) -> (i32, i32) {
    %c0_i32 = arith.constant 0 : i32
    %c0_i32_0 = arith.constant 0 : i32
    %c0_i32_1 = arith.constant 0 : i32
    return %c0_i32, %c0_i32_0 : i32, i32
  }
  func.func @transform_6(%arg0: i32) -> (i32, i32) {
    %c0_i32 = arith.constant 0 : i32
    %c0_i32_0 = arith.constant 0 : i32
    return %arg0, %c0_i32 : i32, i32
  }
}

</mosaic_0001>

<llo_original>
// kernel: net_forward.1
$region0: #{net_forward.1}
  #allocation0 [shape = 'u32[]', space=smem, size = 0x4, offset = 0x4, fixed_abs, tag = 'smem constant byte address 0x4 - core index']
  #allocation1 [shape = 'u32[144,128]{1,0:T(1,128)}', space=vmem, size = 0x12000, scoped, tag = 'internal scratch']
  %s0 = inlined_call_operand.vmem [shape: f32[32,16,96], index: 0, kind: input, shape index: {}]
  %s1 = inlined_call_operand.vmem [shape: bf16[10,96,84], index: 1, kind: input, shape index: {}]
  %s2 = inlined_call_operand.vmem [shape: bf16[10,84,80], index: 2, kind: input, shape index: {}]
  %s3 = inlined_call_operand.vmem [shape: bf16[5,80,128], index: 3, kind: input, shape index: {}]
  %s4 = inlined_call_operand.vmem [shape: bf16[2,128,128], index: 4, kind: input, shape index: {}]
  %s5 = inlined_call_operand.vmem [shape: f32[5,128], index: 5, kind: input, shape index: {}]
  %s6 = inlined_call_operand.hbm [shape: f32[16,128], index: 6, kind: output, shape index: {}]
  %s7 = sld [smem:[#allocation0]]
  $region95: #{net_forward.1} parent=0
    _
  %s9 = ssub.s32 1, %s7
  %s10 = scalar_select 0, %s9, %s7
  $region1: #{net_forward.1} parent=0
    #allocation2 [shape = 'u8[262144]{0}', space=vmem, size = 0x40000, scoped, tag = 'input window, operand 0']
    #allocation3 [shape = 'u8[8192]{0}', space=vmem, size = 0x2000, scoped, tag = 'output window, operand 0']
    #allocation4 [shape = 's32[2]{0}', space=sflag, size = 0x8, scoped, tag = 'scoped memory for net_forward.1']
    %11 = vsyncpa [#allocation4], 0
    %s12 = scalar_lea.sflag [#allocation4], 1
    %13 = vsyncpa %s12, 0
    loop: start=0, step=1, limit=4
    $region2: #{net_forward.1} parent=1 // loop_pre_header
      _
    $region3: #{net_forward.1} parent=1 // loop_header
      %s15 = sphi 0, %s19
      %p16 = scmp.ge.s32.totalorder %s15, 4
      %s25 = sphi 0, %s27
      %s28 = sphi 0, %s25
      %s29 = sphi 0, %s28
      %s45 = sphi 0, %s29
      %s49 = sphi 0, %s49
      %s51 = sphi 0, %s49
      %s52 = sphi 0, %s51
      %s66 = sphi 0, %s52
      %s70 = sphi 0, %s70
      %s72 = sphi 0, %s70
      %s73 = sphi 0, %s72
      %s87 = sphi 0, %s73
      %s91 = sphi 0, %s91
      %s93 = sphi 0, %s91
      %s94 = sphi 0, %s93
      %s108 = sphi 0, %s94
      %s112 = sphi 0, %s112
      %s114 = sphi 0, %s112
      %s115 = sphi 0, %s114
      %s129 = sphi 0, %s115
      %s133 = sphi 0, %s133
      %s135 = sphi 0, %s133
      %s136 = sphi 0, %s135
      %s150 = sphi 0, %s136
      %s156 = sphi 0, %s158
      %s159 = sphi 0, %s156
      %s160 = sphi 0, %s159
      %s176 = sphi 0, %s160
    $region4: #{net_forward.1} parent=1 // loop_header_branch
      %18 = sbr.rel (%p16) target = $region8
    $region5: #{net_forward.1} parent=1 // loop_body
      %s20 = ssub.s32 %s15, 1
      %s21 = ssub.s32 %s15, 2
      %s22 = sadd.s32 %s15, 1
      %s23 = ssub.s32 %s15, %s22
      %p24 = scmp.eq.s32.totalorder %s23, 0
      %s26 = sadd.s32 %s25, 1
      %s27 = scalar_select %p24, %s25, %s26
      %p30 = pneg %p24
      %p31 = scmp.eq.s32.totalorder %s15, 1
      %p32 = por %p30, %p31
      %p33 = scmp.ne.s32.totalorder %s25, %s28
      %p34 = scmp.eq.s32.totalorder %s15, 0
      %p35 = por %p33, %p34
      %p36 = scmp.ne.s32.totalorder %s25, %s28
      %p37 = scmp.eq.s32.totalorder %s20, 1
      %p38 = por %p36, %p37
      %p39 = scmp.ne.s32.totalorder %s28, %s29
      %p40 = scmp.eq.s32.totalorder %s20, 0
      %p41 = por %p39, %p40
      %p42 = scmp.ne.s32.totalorder %s28, %s29
      %p43 = scmp.eq.s32.totalorder %s21, 1
      %p44 = por %p42, %p43
      %p46 = scmp.ne.s32.totalorder %s29, %s45
      %p47 = scmp.eq.s32.totalorder %s21, 0
      %p48 = por %p46, %p47
      %s50 = sadd.s32 %s49, 1
      %p53 = scmp.eq.s32.totalorder %s15, 1
      %p54 = scmp.ne.s32.totalorder %s49, %s51
      %p55 = scmp.eq.s32.totalorder %s15, 0
      %p56 = por %p54, %p55
      %p57 = scmp.ne.s32.totalorder %s49, %s51
      %p58 = scmp.eq.s32.totalorder %s20, 1
      %p59 = por %p57, %p58
      %p60 = scmp.ne.s32.totalorder %s51, %s52
      %p61 = scmp.eq.s32.totalorder %s20, 0
      %p62 = por %p60, %p61
      %p63 = scmp.ne.s32.totalorder %s51, %s52
      %p64 = scmp.eq.s32.totalorder %s21, 1
      %p65 = por %p63, %p64
      %p67 = scmp.ne.s32.totalorder %s52, %s66
      %p68 = scmp.eq.s32.totalorder %s21, 0
      %p69 = por %p67, %p68
      %s71 = sadd.s32 %s70, 1
      %p74 = scmp.eq.s32.totalorder %s15, 1
      %p75 = scmp.ne.s32.totalorder %s70, %s72
      %p76 = scmp.eq.s32.totalorder %s15, 0
      %p77 = por %p75, %p76
      %p78 = scmp.ne.s32.totalorder %s70, %s72
      %p79 = scmp.eq.s32.totalorder %s20, 1
      %p80 = por %p78, %p79
      %p81 = scmp.ne.s32.totalorder %s72, %s73
      %p82 = scmp.eq.s32.totalorder %s20, 0
      %p83 = por %p81, %p82
      %p84 = scmp.ne.s32.totalorder %s72, %s73
      %p85 = scmp.eq.s32.totalorder %s21, 1
      %p86 = por %p84, %p85
      %p88 = scmp.ne.s32.totalorder %s73, %s87
      %p89 = scmp.eq.s32.totalorder %s21, 0
      %p90 = por %p88, %p89
      %s92 = sadd.s32 %s91, 1
      %p95 = scmp.eq.s32.totalorder %s15, 1
      %p96 = scmp.ne.s32.totalorder %s91, %s93
      %p97 = scmp.eq.s32.totalorder %s15, 0
      %p98 = por %p96, %p97
      %p99 = scmp.ne.s32.totalorder %s91, %s93
      %p100 = scmp.eq.s32.totalorder %s20, 1
      %p101 = por %p99, %p100
      %p102 = scmp.ne.s32.totalorder %s93, %s94
      %p103 = scmp.eq.s32.totalorder %s20, 0
      %p104 = por %p102, %p103
      %p105 = scmp.ne.s32.totalorder %s93, %s94
      %p106 = scmp.eq.s32.totalorder %s21, 1
      %p107 = por %p105, %p106
      %p109 = scmp.ne.s32.totalorder %s94, %s108
      %p110 = scmp.eq.s32.totalorder %s21, 0
      %p111 = por %p109, %p110
      %s113 = sadd.s32 %s112, 1
      %p116 = scmp.eq.s32.totalorder %s15, 1
      %p117 = scmp.ne.s32.totalorder %s112, %s114
      %p118 = scmp.eq.s32.totalorder %s15, 0
      %p119 = por %p117, %p118
      %p120 = scmp.ne.s32.totalorder %s112, %s114
      %p121 = scmp.eq.s32.totalorder %s20, 1
      %p122 = por %p120, %p121
      %p123 = scmp.ne.s32.totalorder %s114, %s115
      %p124 = scmp.eq.s32.totalorder %s20, 0
      %p125 = por %p123, %p124
      %p126 = scmp.ne.s32.totalorder %s114, %s115
      %p127 = scmp.eq.s32.totalorder %s21, 1
      %p128 = por %p126, %p127
      %p130 = scmp.ne.s32.totalorder %s115, %s129
      %p131 = scmp.eq.s32.totalorder %s21, 0
      %p132 = por %p130, %p131
      %s134 = sadd.s32 %s133, 1
      %p137 = scmp.eq.s32.totalorder %s15, 1
      %p138 = scmp.ne.s32.totalorder %s133, %s135
      %p139 = scmp.eq.s32.totalorder %s15, 0
      %p140 = por %p138, %p139
      %p141 = scmp.ne.s32.totalorder %s133, %s135
      %p142 = scmp.eq.s32.totalorder %s20, 1
      %p143 = por %p141, %p142
      %p144 = scmp.ne.s32.totalorder %s135, %s136
      %p145 = scmp.eq.s32.totalorder %s20, 0
      %p146 = por %p144, %p145
      %p147 = scmp.ne.s32.totalorder %s135, %s136
      %p148 = scmp.eq.s32.totalorder %s21, 1
      %p149 = por %p147, %p148
      %p151 = scmp.ne.s32.totalorder %s136, %s150
      %p152 = scmp.eq.s32.totalorder %s21, 0
      %p153 = por %p151, %p152
      %s154 = ssub.s32 %s15, %s22
      %p155 = scmp.eq.s32.totalorder %s154, 0
      %s157 = sadd.s32 %s156, 1
      %s158 = scalar_select %p155, %s156, %s157
      %p161 = pneg %p155
      %p162 = scmp.eq.s32.totalorder %s15, 1
      %p163 = por %p161, %p162
      %p164 = scmp.ne.s32.totalorder %s156, %s159
      %p165 = scmp.eq.s32.totalorder %s15, 0
      %p166 = por %p164, %p165
      %p167 = scmp.ne.s32.totalorder %s156, %s159
      %p168 = scmp.eq.s32.totalorder %s20, 1
      %p169 = por %p167, %p168
      %p170 = scmp.ne.s32.totalorder %s159, %s160
      %p171 = scmp.eq.s32.totalorder %s20, 0
      %p172 = por %p170, %p171
      %p173 = scmp.ne.s32.totalorder %s159, %s160
      %p174 = scmp.eq.s32.totalorder %s21, 1
      %p175 = por %p173, %p174
      %p177 = scmp.ne.s32.totalorder %s160, %s176
      %p178 = scmp.eq.s32.totalorder %s21, 0
      %p179 = por %p177, %p178
      %p180 = scmp.le.s32.totalorder 1, %s15
      %p181 = scmp.lt.s32.totalorder %s15, 3
      %p182 = pnand %p180, %p181
      %p183 = pneg %p182
      // Predicated region
      $region9: #{net_forward.1} parent=5 // pred_check
        _
      $region10: #{net_forward.1} parent=5 // pred_check_branch
        %185 = sbr.rel (%p182) target = $region12
      $region11: #{net_forward.1} parent=5 // pred_region
        %s186 = ssub.s32 %s15, 1
        // Predicated region
        $region13: #{net_forward.1} parent=11 // pred_check
          %p187 = pneg %p62
        $region14: #{net_forward.1} parent=11 // pred_check_branch
          %189 = sbr.rel (%p187) target = $region16
        $region15: #{net_forward.1} parent=11 // pred_region
          _
        $region16: #{net_forward.1} parent=11 // pred_fallthru
          _
        // Predicated region
        $region17: #{net_forward.1} parent=11 // pred_check
          %p190 = pneg %p83
        $region18: #{net_forward.1} parent=11 // pred_check_branch
          %192 = sbr.rel (%p190) target = $region20
        $region19: #{net_forward.1} parent=11 // pred_region
          _
        $region20: #{net_forward.1} parent=11 // pred_fallthru
          _
        // Predicated region
        $region21: #{net_forward.1} parent=11 // pred_check
          %p193 = pneg %p104
        $region22: #{net_forward.1} parent=11 // pred_check_branch
          %195 = sbr.rel (%p193) target = $region24
        $region23: #{net_forward.1} parent=11 // pred_region
          _
        $region24: #{net_forward.1} parent=11 // pred_fallthru
          _
        // Predicated region
        $region25: #{net_forward.1} parent=11 // pred_check
          %p196 = pneg %p125
        $region26: #{net_forward.1} parent=11 // pred_check_branch
          %198 = sbr.rel (%p196) target = $region28
        $region27: #{net_forward.1} parent=11 // pred_region
          _
        $region28: #{net_forward.1} parent=11 // pred_fallthru
          _
        // Predicated region
        $region29: #{net_forward.1} parent=11 // pred_check
          %p199 = pneg %p146
        $region30: #{net_forward.1} parent=11 // pred_check_branch
          %201 = sbr.rel (%p199) target = $region32
        $region31: #{net_forward.1} parent=11 // pred_region
          _
        $region32: #{net_forward.1} parent=11 // pred_fallthru
          _
      $region12: #{net_forward.1} parent=5 // pred_fallthru
        _
      %p202 = scmp.lt.s32.totalorder %s15, 2
      // Predicated region
      $region33: #{net_forward.1} parent=5 // pred_check
        %p203 = pneg %p202
      $region34: #{net_forward.1} parent=5 // pred_check_branch
        %205 = sbr.rel (%p203) target = $region36
      $region35: #{net_forward.1} parent=5 // pred_region
        // Predicated region
        $region37: #{net_forward.1} parent=35 // pred_check
          %p206 = pneg %p35
        $region38: #{net_forward.1} parent=35 // pred_check_branch
          %208 = sbr.rel (%p206) target = $region40
        $region39: #{net_forward.1} parent=35 // pred_region
          %s209 = sand.u32 %s25, 1
          %s210 = sand.u32 %s25, 1
          %s211 = smul.addr %s210, 256
          %s212 = scalar_lea.vmem [#allocation2], %s211
          %s213 = smul.addr %s15, 8
          %s214 = scalar_lea.vmem %s0, %s213
          // Predicated region
          $region41: #{net_forward.1} parent=39 // pred_check
            _
          $region42: #{net_forward.1} parent=39 // pred_check_branch
            %216 = sbr.rel (0) target = $region44
          $region43: #{net_forward.1} parent=39 // pred_region
            // Predicated region
            $region45: #{net_forward.1} parent=43 // pred_check
              _
            $region46: #{net_forward.1} parent=43 // pred_check_branch
              %218 = sbr.rel (0) target = $region48
            $region47: #{net_forward.1} parent=43 // pred_region
              // Predicated region
              $region60: #{net_forward.1} parent=47 // pred_check
                _
              $region61: #{net_forward.1} parent=47 // pred_check_branch
                %295 = sbr.rel (0) target = $region63
              $region62: #{net_forward.1} parent=47 // pred_region
                loop: start=0, step=1, limit=1
                $region64: #{net_forward.1} parent=62 // loop_pre_header
                  _
                $region65: #{net_forward.1} parent=62 // loop_header
                  %s297 = sphi 0, %s301
                  %p298 = scmp.ge.s32.totalorder %s297, 1
                  %s302 = sphi %s214, %s214
                  %s303 = sphi %s212, %s212
                $region66: #{net_forward.1} parent=62 // loop_header_branch
                  %300 = sbr.rel (%p298) target = $region70
                $region67: #{net_forward.1} parent=62 // loop_body
                  %v304 = vld [vmem:[%s302] sm:$0xff]
                  %305 = vst [vmem:[%s303] sm:$0xff] %v304
                  %v306 = vld [vmem:[%s302 + $0x10] sm:$0xff]
                  %307 = vst [vmem:[%s303 + $0x8] sm:$0xff] %v306
                  %v308 = vld [vmem:[%s302 + $0x20] sm:$0xff]
                  %309 = vst [vmem:[%s303 + $0x10] sm:$0xff] %v308
                  %v310 = vld [vmem:[%s302 + $0x30] sm:$0xff]
                  %311 = vst [vmem:[%s303 + $0x18] sm:$0xff] %v310
                  %v312 = vld [vmem:[%s302 + $0x40] sm:$0xff]
                  %313 = vst [vmem:[%s303 + $0x20] sm:$0xff] %v312
                  %v314 = vld [vmem:[%s302 + $0x50] sm:$0xff]
                  %315 = vst [vmem:[%s303 + $0x28] sm:$0xff] %v314
                  %v316 = vld [vmem:[%s302 + $0x60] sm:$0xff]
                  %317 = vst [vmem:[%s303 + $0x30] sm:$0xff] %v316
                  %v318 = vld [vmem:[%s302 + $0x70] sm:$0xff]
                  %319 = vst [vmem:[%s303 + $0x38] sm:$0xff] %v318
                  %v320 = vld [vmem:[%s302 + $0x80] sm:$0xff]
                  %321 = vst [vmem:[%s303 + $0x40] sm:$0xff] %v320
                  %v322 = vld [vmem:[%s302 + $0x90] sm:$0xff]
                  %323 = vst [vmem:[%s303 + $0x48] sm:$0xff] %v322
                  %v324 = vld [vmem:[%s302 + $0xa0] sm:$0xff]
                  %325 = vst [vmem:[%s303 + $0x50] sm:$0xff] %v324
                  %v326 = vld [vmem:[%s302 + $0xb0] sm:$0xff]
                  %327 = vst [vmem:[%s303 + $0x58] sm:$0xff] %v326
                  %v328 = vld [vmem:[%s302 + $0xc0] sm:$0xff]
                  %329 = vst [vmem:[%s303 + $0x60] sm:$0xff] %v328
                  %v330 = vld [vmem:[%s302 + $0xd0] sm:$0xff]
                  %331 = vst [vmem:[%s303 + $0x68] sm:$0xff] %v330
                  %v332 = vld [vmem:[%s302 + $0xe0] sm:$0xff]
                  %333 = vst [vmem:[%s303 + $0x70] sm:$0xff] %v332
                  %v334 = vld [vmem:[%s302 + $0xf0] sm:$0xff]
                  %335 = vst [vmem:[%s303 + $0x78] sm:$0xff] %v334
                  %v336 = vld [vmem:[%s302 + $0x100] sm:$0xff]
                  %337 = vst [vmem:[%s303 + $0x80] sm:$0xff] %v336
                  %v338 = vld [vmem:[%s302 + $0x110] sm:$0xff]
                  %339 = vst [vmem:[%s303 + $0x88] sm:$0xff] %v338
                  %v340 = vld [vmem:[%s302 + $0x120] sm:$0xff]
                  %341 = vst [vmem:[%s303 + $0x90] sm:$0xff] %v340
                  %v342 = vld [vmem:[%s302 + $0x130] sm:$0xff]
                  %343 = vst [vmem:[%s303 + $0x98] sm:$0xff] %v342
                  %v344 = vld [vmem:[%s302 + $0x140] sm:$0xff]
                  %345 = vst [vmem:[%s303 + $0xa0] sm:$0xff] %v344
                  %v346 = vld [vmem:[%s302 + $0x150] sm:$0xff]
                  %347 = vst [vmem:[%s303 + $0xa8] sm:$0xff] %v346
                  %v348 = vld [vmem:[%s302 + $0x160] sm:$0xff]
                  %349 = vst [vmem:[%s303 + $0xb0] sm:$0xff] %v348
                  %v350 = vld [vmem:[%s302 + $0x170] sm:$0xff]
                  %351 = vst [vmem:[%s303 + $0xb8] sm:$0xff] %v350
                  %v352 = vld [vmem:[%s302 + $0x180] sm:$0xff]
                  %353 = vst [vmem:[%s303 + $0xc0] sm:$0xff] %v352
                  %v354 = vld [vmem:[%s302 + $0x190] sm:$0xff]
                  %355 = vst [vmem:[%s303 + $0xc8] sm:$0xff] %v354
                  %v356 = vld [vmem:[%s302 + $0x1a0] sm:$0xff]
                  %357 = vst [vmem:[%s303 + $0xd0] sm:$0xff] %v356
                  %v358 = vld [vmem:[%s302 + $0x1b0] sm:$0xff]
                  %359 = vst [vmem:[%s303 + $0xd8] sm:$0xff] %v358
                  %v360 = vld [vmem:[%s302 + $0x1c0] sm:$0xff]
                  %361 = vst [vmem:[%s303 + $0xe0] sm:$0xff] %v360
                  %v362 = vld [vmem:[%s302 + $0x1d0] sm:$0xff]
                  %363 = vst [vmem:[%s303 + $0xe8] sm:$0xff] %v362
                  %v364 = vld [vmem:[%s302 + $0x1e0] sm:$0xff]
                  %365 = vst [vmem:[%s303 + $0xf0] sm:$0xff] %v364
                  %v366 = vld [vmem:[%s302 + $0x1f0] sm:$0xff]
                  %367 = vst [vmem:[%s303 + $0xf8] sm:$0xff] %v366
                $region68: #{net_forward.1} parent=62 // loop_footer
                  %s301 = sadd.s32 1, %s297
                $region69: #{net_forward.1} parent=62 // loop_footer_branch
                  %296 = sbr.rel target = $region65
                $region70: #{net_forward.1} parent=62 // loop_exit
                  _
              $region63: #{net_forward.1} parent=47 // pred_fallthru
                _
              // Predicated region
              $region71: #{net_forward.1} parent=47 // pred_check
                _
              $region72: #{net_forward.1} parent=47 // pred_check_branch
                %369 = sbr.rel target = $region74
              $region73: #{net_forward.1} parent=47 // pred_region
                _
              $region74: #{net_forward.1} parent=47 // pred_fallthru
                _
            $region48: #{net_forward.1} parent=43 // pred_fallthru
              _
            // Predicated region
            $region49: #{net_forward.1} parent=43 // pred_check
              _
            $region50: #{net_forward.1} parent=43 // pred_check_branch
              %220 = sbr.rel target = $region52
            $region51: #{net_forward.1} parent=43 // pred_region
              loop: start=0, step=1, limit=1
              $region53: #{net_forward.1} parent=51 // loop_pre_header
                _
              $region54: #{net_forward.1} parent=51 // loop_header
                %s223 = sphi 0, %s227
                %p224 = scmp.ge.s32.totalorder %s223, 1
                %s228 = sphi %s214, %s214
                %s229 = sphi %s212, %s212
              $region55: #{net_forward.1} parent=51 // loop_header_branch
                %226 = sbr.rel (%p224) target = $region59
              $region56: #{net_forward.1} parent=51 // loop_body
                %v230 = vld [vmem:[%s228] sm:$0xff]
                %231 = vst [vmem:[%s229] sm:$0xff] %v230
                %v232 = vld [vmem:[%s228 + $0x10] sm:$0xff]
                %233 = vst [vmem:[%s229 + $0x8] sm:$0xff] %v232
                %v234 = vld [vmem:[%s228 + $0x20] sm:$0xff]
                %235 = vst [vmem:[%s229 + $0x10] sm:$0xff] %v234
                %v236 = vld [vmem:[%s228 + $0x30] sm:$0xff]
                %237 = vst [vmem:[%s229 + $0x18] sm:$0xff] %v236
                %v238 = vld [vmem:[%s228 + $0x40] sm:$0xff]
                %239 = vst [vmem:[%s229 + $0x20] sm:$0xff] %v238
                %v240 = vld [vmem:[%s228 + $0x50] sm:$0xff]
                %241 = vst [vmem:[%s229 + $0x28] sm:$0xff] %v240
                %v242 = vld [vmem:[%s228 + $0x60] sm:$0xff]
                %243 = vst [vmem:[%s229 + $0x30] sm:$0xff] %v242
                %v244 = vld [vmem:[%s228 + $0x70] sm:$0xff]
                %245 = vst [vmem:[%s229 + $0x38] sm:$0xff] %v244
                %v246 = vld [vmem:[%s228 + $0x80] sm:$0xff]
                %247 = vst [vmem:[%s229 + $0x40] sm:$0xff] %v246
                %v248 = vld [vmem:[%s228 + $0x90] sm:$0xff]
                %249 = vst [vmem:[%s229 + $0x48] sm:$0xff] %v248
                %v250 = vld [vmem:[%s228 + $0xa0] sm:$0xff]
                %251 = vst [vmem:[%s229 + $0x50] sm:$0xff] %v250
                %v252 = vld [vmem:[%s228 + $0xb0] sm:$0xff]
                %253 = vst [vmem:[%s229 + $0x58] sm:$0xff] %v252
                %v254 = vld [vmem:[%s228 + $0xc0] sm:$0xff]
                %255 = vst [vmem:[%s229 + $0x60] sm:$0xff] %v254
                %v256 = vld [vmem:[%s228 + $0xd0] sm:$0xff]
                %257 = vst [vmem:[%s229 + $0x68] sm:$0xff] %v256
                %v258 = vld [vmem:[%s228 + $0xe0] sm:$0xff]
                %259 = vst [vmem:[%s229 + $0x70] sm:$0xff] %v258
                %v260 = vld [vmem:[%s228 + $0xf0] sm:$0xff]
                %261 = vst [vmem:[%s229 + $0x78] sm:$0xff] %v260
                %v262 = vld [vmem:[%s228 + $0x100] sm:$0xff]
                %263 = vst [vmem:[%s229 + $0x80] sm:$0xff] %v262
                %v264 = vld [vmem:[%s228 + $0x110] sm:$0xff]
                %265 = vst [vmem:[%s229 + $0x88] sm:$0xff] %v264
                %v266 = vld [vmem:[%s228 + $0x120] sm:$0xff]
                %267 = vst [vmem:[%s229 + $0x90] sm:$0xff] %v266
                %v268 = vld [vmem:[%s228 + $0x130] sm:$0xff]
                %269 = vst [vmem:[%s229 + $0x98] sm:$0xff] %v268
                %v270 = vld [vmem:[%s228 + $0x140] sm:$0xff]
                %271 = vst [vmem:[%s229 + $0xa0] sm:$0xff] %v270
                %v272 = vld [vmem:[%s228 + $0x150] sm:$0xff]
                %273 = vst [vmem:[%s229 + $0xa8] sm:$0xff] %v272
                %v274 = vld [vmem:[%s228 + $0x160] sm:$0xff]
                %275 = vst [vmem:[%s229 + $0xb0] sm:$0xff] %v274
                %v276 = vld [vmem:[%s228 + $0x170] sm:$0xff]
                %277 = vst [vmem:[%s229 + $0xb8] sm:$0xff] %v276
                %v278 = vld [vmem:[%s228 + $0x180] sm:$0xff]
                %279 = vst [vmem:[%s229 + $0xc0] sm:$0xff] %v278
                %v280 = vld [vmem:[%s228 + $0x190] sm:$0xff]
                %281 = vst [vmem:[%s229 + $0xc8] sm:$0xff] %v280
                %v282 = vld [vmem:[%s228 + $0x1a0] sm:$0xff]
                %283 = vst [vmem:[%s229 + $0xd0] sm:$0xff] %v282
                %v284 = vld [vmem:[%s228 + $0x1b0] sm:$0xff]
                %285 = vst [vmem:[%s229 + $0xd8] sm:$0xff] %v284
                %v286 = vld [vmem:[%s228 + $0x1c0] sm:$0xff]
                %287 = vst [vmem:[%s229 + $0xe0] sm:$0xff] %v286
                %v288 = vld [vmem:[%s228 + $0x1d0] sm:$0xff]
                %289 = vst [vmem:[%s229 + $0xe8] sm:$0xff] %v288
                %v290 = vld [vmem:[%s228 + $0x1e0] sm:$0xff]
                %291 = vst [vmem:[%s229 + $0xf0] sm:$0xff] %v290
                %v292 = vld [vmem:[%s228 + $0x1f0] sm:$0xff]
                %293 = vst [vmem:[%s229 + $0xf8] sm:$0xff] %v292
              $region57: #{net_forward.1} parent=51 // loop_footer
                %s227 = sadd.s32 1, %s223
              $region58: #{net_forward.1} parent=51 // loop_footer_branch
                %222 = sbr.rel target = $region54
              $region59: #{net_forward.1} parent=51 // loop_exit
                _
            $region52: #{net_forward.1} parent=43 // pred_fallthru
              _
          $region44: #{net_forward.1} parent=39 // pred_fallthru
            _
          %370 = vnop
        $region40: #{net_forward.1} parent=35 // pred_fallthru
          _
      $region36: #{net_forward.1} parent=5 // pred_fallthru
        _
      %p371 = scmp.le.s32.totalorder 1, %s15
      %p372 = scmp.lt.s32.totalorder %s15, 3
      %p373 = pnand %p371, %p372
      %p374 = pneg %p373
      // Predicated region
      $region75: #{net_forward.1} parent=5 // pred_check
        _
      $region76: #{net_forward.1} parent=5 // pred_check_branch
        %376 = sbr.rel (%p373) target = $region78
      $region77: #{net_forward.1} parent=5 // pred_region
        %s377 = ssub.s32 %s15, 1
        %s378 = sand.u32 %s28, 1
        %s379 = sand.u32 %s28, 1
        %s380 = smul.addr %s379, 256
        %s381 = scalar_lea.vmem [#allocation2], %s380
        // Predicated region
        $region79: #{net_forward.1} parent=77 // pred_check
          %p382 = pneg %p41
        $region80: #{net_forward.1} parent=77 // pred_check_branch
          %384 = sbr.rel (%p382) target = $region82
        $region81: #{net_forward.1} parent=77 // pred_region
          _
        $region82: #{net_forward.1} parent=77 // pred_fallthru
          _
        %s385 = sand.u32 %s28, 1
        %s386 = sand.u32 %s28, 1
        %s387 = smul.addr %s386, 256
        %s388 = scalar_lea.vmem [#allocation2], %s387
        %p389 = pneg %p41
        %p390 = pneg %p38
        %p391 = pneg %p62
        %p392 = pneg %p59
        %p393 = pneg %p83
        %p394 = pneg %p80
        %p395 = pneg %p104
        %p396 = pneg %p101
        %p397 = pneg %p125
        %p398 = pneg %p122
        %p399 = pneg %p146
        %p400 = pneg %p143
        %p401 = pneg %p172
        %p402 = pneg %p169
        %s403 = sand.u32 %s159, 1
        %s404 = scalar_lea.sflag [#allocation4], %s403
        %s405 = sand.u32 %s159, 1
        %s406 = smul.addr %s405, 8
        %s407 = scalar_lea.vmem [#allocation3], %s406
        %v409 = vld [vmem:[%s5] sm:$0x1]
        %v410 = vld [vmem:[%s5 + $0x1] sm:$0x1]
        %v411 = vld [vmem:[%s5 + $0x2] sm:$0x1]
        %v412 = vld [vmem:[%s5 + $0x3] sm:$0x1]
        %v413 = vld [vmem:[%s5 + $0x4] sm:$0x1]
        %v414 = vld [vmem:[%s381] sm:$0xff]
        %v415 = vld [vmem:[%s381 + $0x8] sm:$0xff]
        %v416 = vld [vmem:[%s381 + $0x10] sm:$0xff]
        %v417 = vld [vmem:[%s381 + $0x18] sm:$0xff]
        %v418 = vld [vmem:[%s381 + $0x20] sm:$0xff]
        %v419 = vld [vmem:[%s381 + $0x28] sm:$0xff]
        %v420 = vld [vmem:[%s381 + $0x30] sm:$0xff]
        %v421 = vld [vmem:[%s381 + $0x38] sm:$0xff]
        %v422 = vld [vmem:[%s381 + $0x40] sm:$0xff]
        %v423 = vld [vmem:[%s381 + $0x48] sm:$0xff]
        %v424 = vld [vmem:[%s381 + $0x50] sm:$0xff]
        %v425 = vld [vmem:[%s381 + $0x58] sm:$0xff]
        %v426 = vld [vmem:[%s381 + $0x60] sm:$0xff]
        %v427 = vld [vmem:[%s381 + $0x68] sm:$0xff]
        %v428 = vld [vmem:[%s381 + $0x70] sm:$0xff]
        %v429 = vld [vmem:[%s381 + $0x78] sm:$0xff]
        %v430 = vld [vmem:[%s381 + $0x80] sm:$0xff]
        %v431 = vld [vmem:[%s381 + $0x88] sm:$0xff]
        %v432 = vld [vmem:[%s381 + $0x90] sm:$0xff]
        %v433 = vld [vmem:[%s381 + $0x98] sm:$0xff]
        %v434 = vld [vmem:[%s381 + $0xa0] sm:$0xff]
        %v435 = vld [vmem:[%s381 + $0xa8] sm:$0xff]
        %v436 = vld [vmem:[%s381 + $0xb0] sm:$0xff]
        %v437 = vld [vmem:[%s381 + $0xb8] sm:$0xff]
        %v438 = vld [vmem:[%s381 + $0xc0] sm:$0xff]
        %v439 = vld [vmem:[%s381 + $0xc8] sm:$0xff]
        %v440 = vld [vmem:[%s381 + $0xd0] sm:$0xff]
        %v441 = vld [vmem:[%s381 + $0xd8] sm:$0xff]
        %v442 = vpack.c.bf16 %v415, %v414
        %v443 = vpack.c.bf16 %v417, %v416
        %v444 = vpack.c.bf16 %v419, %v418
        %v445 = vpack.c.bf16 %v421, %v420
        %v446 = vpack.c.bf16 %v423, %v422
        %v447 = vpack.c.bf16 %v425, %v424
        %v448 = vpack.c.bf16 %v427, %v426
        %v449 = vpack.c.bf16 %v429, %v428
        %v450 = vpack.c.bf16 %v431, %v430
        %v451 = vpack.c.bf16 %v433, %v432
        %v452 = vpack.c.bf16 %v435, %v434
        %v453 = vpack.c.bf16 %v437, %v436
        %v454 = vpack.c.bf16 %v439, %v438
        %v455 = vpack.c.bf16 %v441, %v440
        %v456 = vld [vmem:[%s1] sm:$0xf]
        %v457 = vld [vmem:[%s1 + $0x4] sm:$0xf]
        %v458 = vld [vmem:[%s1 + $0x8] sm:$0xf]
        %v459 = vld [vmem:[%s1 + $0xc] sm:$0xf]
        %v460 = vld [vmem:[%s1 + $0x10] sm:$0xf]
        %v461 = vld [vmem:[%s1 + $0x14] sm:$0xf]
        %v462 = vld [vmem:[%s1 + $0x18] sm:$0xf]
        %v463 = vld [vmem:[%s1 + $0x1c] sm:$0xf]
        %v464 = vld [vmem:[%s1 + $0x20] sm:$0xf]
        %v465 = vld [vmem:[%s1 + $0x24] sm:$0xf]
        %v466 = vld [vmem:[%s1 + $0x28] sm:$0xf]
        %v467 = vld [vmem:[%s1 + $0x2c] sm:$0xf]
        %s468 = scalar_lea.vmem %s1, 48
        %v469 = vld [vmem:[%s468] sm:$0xf]
        %v470 = vld [vmem:[%s468 + $0x4] sm:$0xf]
        %v471 = vld [vmem:[%s468 + $0x8] sm:$0xf]
        %v472 = vld [vmem:[%s468 + $0xc] sm:$0xf]
        %v473 = vld [vmem:[%s468 + $0x10] sm:$0xf]
        %v474 = vld [vmem:[%s468 + $0x14] sm:$0xf]
        %v475 = vld [vmem:[%s468 + $0x18] sm:$0xf]
        %v476 = vld [vmem:[%s468 + $0x1c] sm:$0xf]
        %v477 = vld [vmem:[%s468 + $0x20] sm:$0xf]
        %v478 = vld [vmem:[%s468 + $0x24] sm:$0xf]
        %v479 = vld [vmem:[%s468 + $0x28] sm:$0xf]
        %v480 = vld [vmem:[%s468 + $0x2c] sm:$0xf]
        %s481 = scalar_lea.vmem %s381, 8 [#allocation2]
        %v482 = vld [vmem:[%s481] sm:$0xff]
        %v483 = vld [vmem:[%s481 + $0x8] sm:$0xff]
        %v484 = vld [vmem:[%s481 + $0x10] sm:$0xff]
        %v485 = vld [vmem:[%s481 + $0x18] sm:$0xff]
        %v486 = vld [vmem:[%s481 + $0x20] sm:$0xff]
        %v487 = vld [vmem:[%s481 + $0x28] sm:$0xff]
        %v488 = vld [vmem:[%s481 + $0x30] sm:$0xff]
        %v489 = vld [vmem:[%s481 + $0x38] sm:$0xff]
        %v490 = vld [vmem:[%s481 + $0x40] sm:$0xff]
        %v491 = vld [vmem:[%s481 + $0x48] sm:$0xff]
        %v492 = vld [vmem:[%s481 + $0x50] sm:$0xff]
        %v493 = vld [vmem:[%s481 + $0x58] sm:$0xff]
        %v494 = vld [vmem:[%s481 + $0x60] sm:$0xff]
        %v495 = vld [vmem:[%s481 + $0x68] sm:$0xff]
        %v496 = vld [vmem:[%s481 + $0x70] sm:$0xff]
        %v497 = vld [vmem:[%s481 + $0x78] sm:$0xff]
        %v498 = vld [vmem:[%s481 + $0x80] sm:$0xff]
        %v499 = vld [vmem:[%s481 + $0x88] sm:$0xff]
        %v500 = vld [vmem:[%s481 + $0x90] sm:$0xff]
        %v501 = vld [vmem:[%s481 + $0x98] sm:$0xff]
        %v502 = vld [vmem:[%s481 + $0xa0] sm:$0xff]
        %v503 = vld [vmem:[%s481 + $0xa8] sm:$0xff]
        %v504 = vld [vmem:[%s481 + $0xb0] sm:$0xff]
        %v505 = vld [vmem:[%s481 + $0xb8] sm:$0xff]
        %v506 = vld [vmem:[%s481 + $0xc0] sm:$0xff]
        %v507 = vld [vmem:[%s481 + $0xc8] sm:$0xff]
        %v508 = vld [vmem:[%s481 + $0xd0] sm:$0xff]
        %v509 = vld [vmem:[%s481 + $0xd8] sm:$0xff]
        %v510 = vpack.c.bf16 %v483, %v482
        %v511 = vpack.c.bf16 %v485, %v484
        %v512 = vpack.c.bf16 %v487, %v486
        %v513 = vpack.c.bf16 %v489, %v488
        %v514 = vpack.c.bf16 %v491, %v490
        %v515 = vpack.c.bf16 %v493, %v492
        %v516 = vpack.c.bf16 %v495, %v494
        %v517 = vpack.c.bf16 %v497, %v496
        %v518 = vpack.c.bf16 %v499, %v498
        %v519 = vpack.c.bf16 %v501, %v500
        %v520 = vpack.c.bf16 %v503, %v502
        %v521 = vpack.c.bf16 %v505, %v504
        %v522 = vpack.c.bf16 %v507, %v506
        %v523 = vpack.c.bf16 %v509, %v508
        %s524 = scalar_lea.vmem %s1, 96
        %v525 = vld [vmem:[%s524] sm:$0xf]
        %v526 = vld [vmem:[%s524 + $0x4] sm:$0xf]
        %v527 = vld [vmem:[%s524 + $0x8] sm:$0xf]
        %v528 = vld [vmem:[%s524 + $0xc] sm:$0xf]
        %v529 = vld [vmem:[%s524 + $0x10] sm:$0xf]
        %v530 = vld [vmem:[%s524 + $0x14] sm:$0xf]
        %v531 = vld [vmem:[%s524 + $0x18] sm:$0xf]
        %v532 = vld [vmem:[%s524 + $0x1c] sm:$0xf]
        %v533 = vld [vmem:[%s524 + $0x20] sm:$0xf]
        %v534 = vld [vmem:[%s524 + $0x24] sm:$0xf]
        %v535 = vld [vmem:[%s524 + $0x28] sm:$0xf]
        %v536 = vld [vmem:[%s524 + $0x2c] sm:$0xf]
        %v549 = vunpack.c.l.b16 %v525
        %v550 = vunpack.c.l.b16 %v526
        %v551 = vunpack.c.l.b16 %v527
        %v552 = vunpack.c.l.b16 %v528
        %v553 = vunpack.c.l.b16 %v529
        %v554 = vunpack.c.l.b16 %v530
        %v555 = vunpack.c.l.b16 %v531
        %v556 = vunpack.c.l.b16 %v532
        %v557 = vunpack.c.l.b16 %v533
        %v558 = vunpack.c.l.b16 %v534
        %v559 = vunpack.c.l.b16 %v535
        %v560 = vunpack.c.l.b16 %v536
        %v561 = vpack.c.b16 %v550, %v549
        %v562 = vpack.c.b16 %v552, %v551
        %v563 = vpack.c.b16 %v554, %v553
        %v564 = vpack.c.b16 %v556, %v555
        %v565 = vpack.c.b16 %v558, %v557
        %v566 = vpack.c.b16 %v560, %v559
        %vm573 = vcmask 785408
        %v575 = vsel %vm573, %v510, 0
        %v578 = vsel %vm573, %v511, 0
        %v581 = vsel %vm573, %v512, 0
        %v584 = vsel %vm573, %v513, 0
        %v587 = vsel %vm573, %v514, 0
        %v590 = vsel %vm573, %v515, 0
        %v593 = vsel %vm573, %v516, 0
        %v596 = vsel %vm573, %v517, 0
        %v599 = vsel %vm573, %v518, 0
        %v602 = vsel %vm573, %v519, 0
        %v605 = vsel %vm573, %v520, 0
        %v608 = vsel %vm573, %v521, 0
        %v611 = vsel %vm573, %v522, 0
        %v614 = vsel %vm573, %v523, 0
        %616 = vmatprep.subr.bf16.mxu0 0
        %617 = vmatpush1.bf16.msra.mxu0 %v561
        %618 = vmatprep.subr.bf16.mxu0 0
        %619 = vmatpush1.bf16.msra.mxu0 %v562
        %620 = vmatprep.subr.bf16.mxu0 0
        %621 = vmatpush1.bf16.msra.mxu0 %v563
        %622 = vmatprep.subr.bf16.mxu0 0
        %623 = vmatpush1.bf16.msra.mxu0 %v564
        %624 = vmatprep.subr.bf16.mxu0 0
        %625 = vmatpush1.bf16.msra.mxu0 %v565
        %626 = vmatprep.subr.bf16.mxu0 0
        %627 = vmatpush1.bf16.msra.mxu0 %v566
        %628 = vmatprep.subr.bf16.mxu0 0
        %629 = vmatpush1.bf16.msra.mxu0 0
        %630 = vmatprep.subr.bf16.mxu0 0
        %631 = vmatpush1.bf16.msra.mxu0 0
        %632 = vmatprep.subr.bf16.mxu0 0
        %633 = vmatpush1.bf16.msra.mxu0 0
        %634 = vmatprep.subr.bf16.mxu0 0
        %635 = vmatpush1.bf16.msra.mxu0 0
        %636 = vmatprep.subr.bf16.mxu0 0
        %637 = vmatpush1.bf16.msra.mxu0 0
        %638 = vmatprep.subr.bf16.mxu0 0
        %639 = vmatpush1.bf16.msra.mxu0 0
        %640 = vmatprep.subr.bf16.mxu0 0
        %641 = vmatpush1.bf16.msra.mxu0 0
        %642 = vmatprep.subr.bf16.mxu0 0
        %643 = vmatpush1.bf16.msra.mxu0 0
        %644 = vmatprep.subr.bf16.mxu0 0
        %645 = vmatpush1.bf16.msra.mxu0 0
        %646 = vmatprep.subr.bf16.mxu0 0
        %647 = vmatpush1.bf16.msra.mxu0 0
        %648 = vmatprep.mubr.bf16.mxu0 0
        %649 = vmatmul.mubr.bf16.gmra.mrb[0].mxu0 %v575
        %v650 = vpop.f32.mrb[0].mxu0
        %v651 = vadd.f32 0.0, %v650
        %v652 = vpop.f32.mrb[0].mxu0
        %v653 = vpop.f32.mrb[0].mxu0
        %v654 = vadd.f32 0.0, %v653
        %v655 = vpop.f32.mrb[0].mxu0
        %656 = vmatprep.mubr.bf16.mxu0 0
        %657 = vmatmul.mubr.bf16.gmra.mrb[0].mxu0 %v578
        %v658 = vpop.f32.mrb[0].mxu0
        %v659 = vadd.f32 0.0, %v658
        %v660 = vpop.f32.mrb[0].mxu0
        %v661 = vpop.f32.mrb[0].mxu0
        %v662 = vadd.f32 0.0, %v661
        %v663 = vpop.f32.mrb[0].mxu0
        %664 = vmatprep.mubr.bf16.mxu0 0
        %665 = vmatmul.mubr.bf16.gmra.mrb[0].mxu0 %v581
        %v666 = vpop.f32.mrb[0].mxu0
        %v667 = vadd.f32 0.0, %v666
        %v668 = vpop.f32.mrb[0].mxu0
        %v669 = vpop.f32.mrb[0].mxu0
        %v670 = vadd.f32 0.0, %v669
        %v671 = vpop.f32.mrb[0].mxu0
        %672 = vmatprep.mubr.bf16.mxu0 0
        %673 = vmatmul.mubr.bf16.gmra.mrb[0].mxu0 %v584
        %v674 = vpop.f32.mrb[0].mxu0
        %v675 = vadd.f32 0.0, %v674
        %v676 = vpop.f32.mrb[0].mxu0
        %v677 = vpop.f32.mrb[0].mxu0
        %v678 = vadd.f32 0.0, %v677
        %v679 = vpop.f32.mrb[0].mxu0
        %680 = vmatprep.mubr.bf16.mxu0 0
        %681 = vmatmul.mubr.bf16.gmra.mrb[0].mxu0 %v587
        %v682 = vpop.f32.mrb[0].mxu0
        %v683 = vadd.f32 0.0, %v682
        %v684 = vpop.f32.mrb[0].mxu0
        %v685 = vpop.f32.mrb[0].mxu0
        %v686 = vadd.f32 0.0, %v685
        %v687 = vpop.f32.mrb[0].mxu0
        %688 = vmatprep.mubr.bf16.mxu0 0
        %689 = vmatmul.mubr.bf16.gmra.mrb[0].mxu0 %v590
        %v690 = vpop.f32.mrb[0].mxu0
        %v691 = vadd.f32 0.0, %v690
        %v692 = vpop.f32.mrb[0].mxu0
        %v693 = vpop.f32.mrb[0].mxu0
        %v694 = vadd.f32 0.0, %v693
        %v695 = vpop.f32.mrb[0].mxu0
        %696 = vmatprep.mubr.bf16.mxu0 0
        %697 = vmatmul.mubr.bf16.gmra.mrb[0].mxu0 %v593
        %v698 = vpop.f32.mrb[0].mxu0
        %v699 = vadd.f32 0.0, %v698
        %v700 = vpop.f32.mrb[0].mxu0
        %v701 = vpop.f32.mrb[0].mxu0
        %v702 = vadd.f32 0.0, %v701
        %v703 = vpop.f32.mrb[0].mxu0
        %704 = vmatprep.mubr.bf16.mxu0 0
        %705 = vmatmul.mubr.bf16.gmra.mrb[0].mxu0 %v596
        %v706 = vpop.f32.mrb[0].mxu0
        %v707 = vadd.f32 0.0, %v706
        %v708 = vpop.f32.mrb[0].mxu0
        %v709 = vpop.f32.mrb[0].mxu0
        %v710 = vadd.f32 0.0, %v709
        %v711 = vpop.f32.mrb[0].mxu0
        %712 = vmatprep.mubr.bf16.mxu0 0
        %713 = vmatmul.mubr.bf16.gmra.mrb[0].mxu0 %v599
        %v714 = vpop.f32.mrb[0].mxu0
        %v715 = vadd.f32 0.0, %v714
        %v716 = vpop.f32.mrb[0].mxu0
        %v717 = vpop.f32.mrb[0].mxu0
        %v718 = vadd.f32 0.0, %v717
        %v719 = vpop.f32.mrb[0].mxu0
        %720 = vmatprep.mubr.bf16.mxu0 0
        %721 = vmatmul.mubr.bf16.gmra.mrb[0].mxu0 %v602
        %v722 = vpop.f32.mrb[0].mxu0
        %v723 = vadd.f32 0.0, %v722
        %v724 = vpop.f32.mrb[0].mxu0
        %v725 = vpop.f32.mrb[0].mxu0
        %v726 = vadd.f32 0.0, %v725
        %v727 = vpop.f32.mrb[0].mxu0
        %728 = vmatprep.mubr.bf16.mxu0 0
        %729 = vmatmul.mubr.bf16.gmra.mrb[0].mxu0 %v605
        %v730 = vpop.f32.mrb[0].mxu0
        %v731 = vadd.f32 0.0, %v730
        %v732 = vpop.f32.mrb[0].mxu0
        %v733 = vpop.f32.mrb[0].mxu0
        %v734 = vadd.f32 0.0, %v733
        %v735 = vpop.f32.mrb[0].mxu0
        %736 = vmatprep.mubr.bf16.mxu0 0
        %737 = vmatmul.mubr.bf16.gmra.mrb[0].mxu0 %v608
        %v738 = vpop.f32.mrb[0].mxu0
        %v739 = vadd.f32 0.0, %v738
        %v740 = vpop.f32.mrb[0].mxu0
        %v741 = vpop.f32.mrb[0].mxu0
        %v742 = vadd.f32 0.0, %v741
        %v743 = vpop.f32.mrb[0].mxu0
        %744 = vmatprep.mubr.bf16.mxu0 0
        %745 = vmatmul.mubr.bf16.gmra.mrb[0].mxu0 %v611
        %v746 = vpop.f32.mrb[0].mxu0
        %v747 = vadd.f32 0.0, %v746
        %v748 = vpop.f32.mrb[0].mxu0
        %v749 = vpop.f32.mrb[0].mxu0
        %v750 = vadd.f32 0.0, %v749
        %v751 = vpop.f32.mrb[0].mxu0
        %752 = vmatprep.mubr.bf16.mxu0 0
        %753 = vmatmul.mubr.bf16.gmra.mrb[0].mxu0 %v614
        %v754 = vpop.f32.mrb[0].mxu0
        %v755 = vadd.f32 0.0, %v754
        %v756 = vpop.f32.mrb[0].mxu0
        %v757 = vpop.f32.mrb[0].mxu0
        %v758 = vadd.f32 0.0, %v757
        %v759 = vpop.f32.mrb[0].mxu0
        %760 = vdwg.mxu0
        %v773 = vunpack.c.l.b16 %v456
        %v774 = vunpack.c.l.b16 %v457
        %v775 = vunpack.c.l.b16 %v458
        %v776 = vunpack.c.l.b16 %v459
        %v777 = vunpack.c.l.b16 %v460
        %v778 = vunpack.c.l.b16 %v461
        %v779 = vunpack.c.l.b16 %v462
        %v780 = vunpack.c.l.b16 %v463
        %v781 = vunpack.c.l.b16 %v464
        %v782 = vunpack.c.l.b16 %v465
        %v783 = vunpack.c.l.b16 %v466
        %v784 = vunpack.c.l.b16 %v467
        %v785 = vpack.c.b16 %v774, %v773
        %v786 = vpack.c.b16 %v776, %v775
        %v787 = vpack.c.b16 %v778, %v777
        %v788 = vpack.c.b16 %v780, %v779
        %v789 = vpack.c.b16 %v782, %v781
        %v790 = vpack.c.b16 %v784, %v783
        %v798 = vsel %vm573, %v442, 0
        %v801 = vsel %vm573, %v443, 0
        %v804 = vsel %vm573, %v444, 0
        %v807 = vsel %vm573, %v445, 0
        %v810 = vsel %vm573, %v446, 0
        %v813 = vsel %vm573, %v447, 0
        %v816 = vsel %vm573, %v448, 0
        %v819 = vsel %vm573, %v449, 0
        %v822 = vsel %vm573, %v450, 0
        %v825 = vsel %vm573, %v451, 0
        %v828 = vsel %vm573, %v452, 0
        %v831 = vsel %vm573, %v453, 0
        %v834 = vsel %vm573, %v454, 0
        %v837 = vsel %vm573, %v455, 0
        %839 = vmatprep.subr.bf16.mxu0 0
        %840 = vmatpush1.bf16.msra.mxu0 %v785
        %841 = vmatprep.subr.bf16.mxu0 0
        %842 = vmatpush1.bf16.msra.mxu0 %v786
        %843 = vmatprep.subr.bf16.mxu0 0
        %844 = vmatpush1.bf16.msra.mxu0 %v787
        %845 = vmatprep.subr.bf16.mxu0 0
        %846 = vmatpush1.bf16.msra.mxu0 %v788
        %847 = vmatprep.subr.bf16.mxu0 0
        %848 = vmatpush1.bf16.msra.mxu0 %v789
        %849 = vmatprep.subr.bf16.mxu0 0
        %850 = vmatpush1.bf16.msra.mxu0 %v790
        %851 = vmatprep.subr.bf16.mxu0 0
        %852 = vmatpush1.bf16.msra.mxu0 0
        %853 = vmatprep.subr.bf16.mxu0 0
        %854 = vmatpush1.bf16.msra.mxu0 0
        %855 = vmatprep.subr.bf16.mxu0 0
        %856 = vmatpush1.bf16.msra.mxu0 0
        %857 = vmatprep.subr.bf16.mxu0 0
        %858 = vmatpush1.bf16.msra.mxu0 0
        %859 = vmatprep.subr.bf16.mxu0 0
        %860 = vmatpush1.bf16.msra.mxu0 0
        %861 = vmatprep.subr.bf16.mxu0 0
        %862 = vmatpush1.bf16.msra.mxu0 0
        %863 = vmatprep.subr.bf16.mxu0 0
        %864 = vmatpush1.bf16.msra.mxu0 0
        %865 = vmatprep.subr.bf16.mxu0 0
        %866 = vmatpush1.bf16.msra.mxu0 0
        %867 = vmatprep.subr.bf16.mxu0 0
        %868 = vmatpush1.bf16.msra.mxu0 0
        %869 = vmatprep.subr.bf16.mxu0 0
        %870 = vmatpush1.bf16.msra.mxu0 0
        %871 = vmatprep.mubr.bf16.mxu0 0
        %872 = vmatmul.mubr.bf16.gmra.mrb[0].mxu0 %v798
        %v873 = vpop.f32.mrb[0].mxu0
        %v874 = vadd.f32 %v651, %v873
        %v875 = vpop.f32.mrb[0].mxu0
        %v876 = vpop.f32.mrb[0].mxu0
        %v877 = vadd.f32 %v654, %v876
        %v878 = vpop.f32.mrb[0].mxu0
        %879 = vmatprep.mubr.bf16.mxu0 0
        %880 = vmatmul.mubr.bf16.gmra.mrb[0].mxu0 %v801
        %v881 = vpop.f32.mrb[0].mxu0
        %v882 = vadd.f32 %v659, %v881
        %v883 = vpop.f32.mrb[0].mxu0
        %v884 = vpop.f32.mrb[0].mxu0
        %v885 = vadd.f32 %v662, %v884
        %v886 = vpop.f32.mrb[0].mxu0
        %887 = vmatprep.mubr.bf16.mxu0 0
        %888 = vmatmul.mubr.bf16.gmra.mrb[0].mxu0 %v804
        %v889 = vpop.f32.mrb[0].mxu0
        %v890 = vadd.f32 %v667, %v889
        %v891 = vpop.f32.mrb[0].mxu0
        %v892 = vpop.f32.mrb[0].mxu0
        %v893 = vadd.f32 %v670, %v892
        %v894 = vpop.f32.mrb[0].mxu0
        %895 = vmatprep.mubr.bf16.mxu0 0
        %896 = vmatmul.mubr.bf16.gmra.mrb[0].mxu0 %v807
        %v897 = vpop.f32.mrb[0].mxu0
        %v898 = vadd.f32 %v675, %v897
        %v899 = vpop.f32.mrb[0].mxu0
        %v900 = vpop.f32.mrb[0].mxu0
        %v901 = vadd.f32 %v678, %v900
        %v902 = vpop.f32.mrb[0].mxu0
        %903 = vmatprep.mubr.bf16.mxu0 0
        %904 = vmatmul.mubr.bf16.gmra.mrb[0].mxu0 %v810
        %v905 = vpop.f32.mrb[0].mxu0
        %v906 = vadd.f32 %v683, %v905
        %v907 = vpop.f32.mrb[0].mxu0
        %v908 = vpop.f32.mrb[0].mxu0
        %v909 = vadd.f32 %v686, %v908
        %v910 = vpop.f32.mrb[0].mxu0
        %911 = vmatprep.mubr.bf16.mxu0 0
        %912 = vmatmul.mubr.bf16.gmra.mrb[0].mxu0 %v813
        %v913 = vpop.f32.mrb[0].mxu0
        %v914 = vadd.f32 %v691, %v913
        %v915 = vpop.f32.mrb[0].mxu0
        %v916 = vpop.f32.mrb[0].mxu0
        %v917 = vadd.f32 %v694, %v916
        %v918 = vpop.f32.mrb[0].mxu0
        %919 = vmatprep.mubr.bf16.mxu0 0
        %920 = vmatmul.mubr.bf16.gmra.mrb[0].mxu0 %v816
        %v921 = vpop.f32.mrb[0].mxu0
        %v922 = vadd.f32 %v699, %v921
        %v923 = vpop.f32.mrb[0].mxu0
        %v924 = vpop.f32.mrb[0].mxu0
        %v925 = vadd.f32 %v702, %v924
        %v926 = vpop.f32.mrb[0].mxu0
        %927 = vmatprep.mubr.bf16.mxu0 0
        %928 = vmatmul.mubr.bf16.gmra.mrb[0].mxu0 %v819
        %v929 = vpop.f32.mrb[0].mxu0
        %v930 = vadd.f32 %v707, %v929
        %v931 = vpop.f32.mrb[0].mxu0
        %v932 = vpop.f32.mrb[0].mxu0
        %v933 = vadd.f32 %v710, %v932
        %v934 = vpop.f32.mrb[0].mxu0
        %935 = vmatprep.mubr.bf16.mxu0 0
        %936 = vmatmul.mubr.bf16.gmra.mrb[0].mxu0 %v822
        %v937 = vpop.f32.mrb[0].mxu0
        %v938 = vadd.f32 %v715, %v937
        %v939 = vpop.f32.mrb[0].mxu0
        %v940 = vpop.f32.mrb[0].mxu0
        %v941 = vadd.f32 %v718, %v940
        %v942 = vpop.f32.mrb[0].mxu0
        %943 = vmatprep.mubr.bf16.mxu0 0
        %944 = vmatmul.mubr.bf16.gmra.mrb[0].mxu0 %v825
        %v945 = vpop.f32.mrb[0].mxu0
        %v946 = vadd.f32 %v723, %v945
        %v947 = vpop.f32.mrb[0].mxu0
        %v948 = vpop.f32.mrb[0].mxu0
        %v949 = vadd.f32 %v726, %v948
        %v950 = vpop.f32.mrb[0].mxu0
        %951 = vmatprep.mubr.bf16.mxu0 0
        %952 = vmatmul.mubr.bf16.gmra.mrb[0].mxu0 %v828
        %v953 = vpop.f32.mrb[0].mxu0
        %v954 = vadd.f32 %v731, %v953
        %v955 = vpop.f32.mrb[0].mxu0
        %v956 = vpop.f32.mrb[0].mxu0
        %v957 = vadd.f32 %v734, %v956
        %v958 = vpop.f32.mrb[0].mxu0
        %959 = vmatprep.mubr.bf16.mxu0 0
        %960 = vmatmul.mubr.bf16.gmra.mrb[0].mxu0 %v831
        %v961 = vpop.f32.mrb[0].mxu0
        %v962 = vadd.f32 %v739, %v961
        %v963 = vpop.f32.mrb[0].mxu0
        %v964 = vpop.f32.mrb[0].mxu0
        %v965 = vadd.f32 %v742, %v964
        %v966 = vpop.f32.mrb[0].mxu0
        %967 = vmatprep.mubr.bf16.mxu0 0
        %968 = vmatmul.mubr.bf16.gmra.mrb[0].mxu0 %v834
        %v969 = vpop.f32.mrb[0].mxu0
        %v970 = vadd.f32 %v747, %v969
        %v971 = vpop.f32.mrb[0].mxu0
        %v972 = vpop.f32.mrb[0].mxu0
        %v973 = vadd.f32 %v750, %v972
        %v974 = vpop.f32.mrb[0].mxu0
        %975 = vmatprep.mubr.bf16.mxu0 0
        %976 = vmatmul.mubr.bf16.gmra.mrb[0].mxu0 %v837
        %v977 = vpop.f32.mrb[0].mxu0
        %v978 = vadd.f32 %v755, %v977
        %v979 = vpop.f32.mrb[0].mxu0
        %v980 = vpop.f32.mrb[0].mxu0
        %v981 = vadd.f32 %v758, %v980
        %v982 = vpop.f32.mrb[0].mxu0
        %983 = vdwg.mxu0
        %s984 = scalar_lea.vmem %s1, 144
        %v985 = vld [vmem:[%s984] sm:$0xf]
        %v986 = vld [vmem:[%s984 + $0x4] sm:$0xf]
        %v987 = vld [vmem:[%s984 + $0x8] sm:$0xf]
        %v988 = vld [vmem:[%s984 + $0xc] sm:$0xf]
        %v989 = vld [vmem:[%s984 + $0x10] sm:$0xf]
        %v990 = vld [vmem:[%s984 + $0x14] sm:$0xf]
        %v991 = vld [vmem:[%s984 + $0x18] sm:$0xf]
        %v992 = vld [vmem:[%s984 + $0x1c] sm:$0xf]
        %v993 = vld [vmem:[%s984 + $0x20] sm:$0xf]
        %v994 = vld [vmem:[%s984 + $0x24] sm:$0xf]
        %v995 = vld [vmem:[%s984 + $0x28] sm:$0xf]
        %v996 = vld [vmem:[%s984 + $0x2c] sm:$0xf]
        %v1009 = vunpack.c.l.b16 %v985
        %v1010 = vunpack.c.l.b16 %v986
        %v1011 = vunpack.c.l.b16 %v987
        %v1012 = vunpack.c.l.b16 %v988
        %v1013 = vunpack.c.l.b16 %v989
        %v1014 = vunpack.c.l.b16 %v990
        %v1015 = vunpack.c.l.b16 %v991
        %v1016 = vunpack.c.l.b16 %v992
        %v1017 = vunpack.c.l.b16 %v993
        %v1018 = vunpack.c.l.b16 %v994
        %v1019 = vunpack.c.l.b16 %v995
        %v1020 = vunpack.c.l.b16 %v996
        %v1021 = vpack.c.b16 %v1010, %v1009
        %v1022 = vpack.c.b16 %v1012, %v1011
        %v1023 = vpack.c.b16 %v1014, %v1013
        %v1024 = vpack.c.b16 %v1016, %v1015
        %v1025 = vpack.c.b16 %v1018, %v1017
        %v1026 = vpack.c.b16 %v1020, %v1019
        %1033 = vmatprep.subr.bf16.mxu0 0
        %1034 = vmatpush1.bf16.msra.mxu0 %v1021
        %1035 = vmatprep.subr.bf16.mxu0 0
        %1036 = vmatpush1.bf16.msra.mxu0 %v1022
        %1037 = vmatprep.subr.bf16.mxu0 0
        %1038 = vmatpush1.bf16.msra.mxu0 %v1023
        %1039 = vmatprep.subr.bf16.mxu0 0
        %1040 = vmatpush1.bf16.msra.mxu0 %v1024
        %1041 = vmatprep.subr.bf16.mxu0 0
        %1042 = vmatpush1.bf16.msra.mxu0 %v1025
        %1043 = vmatprep.subr.bf16.mxu0 0
        %1044 = vmatpush1.bf16.msra.mxu0 %v1026
        %1045 = vmatprep.subr.bf16.mxu0 0
        %1046 = vmatpush1.bf16.msra.mxu0 0
        %1047 = vmatprep.subr.bf16.mxu0 0
        %1048 = vmatpush1.bf16.msra.mxu0 0
        %1049 = vmatprep.subr.bf16.mxu0 0
        %1050 = vmatpush1.bf16.msra.mxu0 0
        %1051 = vmatprep.subr.bf16.mxu0 0
        %1052 = vmatpush1.bf16.msra.mxu0 0
        %1053 = vmatprep.subr.bf16.mxu0 0
        %1054 = vmatpush1.bf16.msra.mxu0 0
        %1055 = vmatprep.subr.bf16.mxu0 0
        %1056 = vmatpush1.bf16.msra.mxu0 0
        %1057 = vmatprep.subr.bf16.mxu0 0
        %1058 = vmatpush1.bf16.msra.mxu0 0
        %1059 = vmatprep.subr.bf16.mxu0 0
        %1060 = vmatpush1.bf16.msra.mxu0 0
        %1061 = vmatprep.subr.bf16.mxu0 0
        %1062 = vmatpush1.bf16.msra.mxu0 0
        %1063 = vmatprep.subr.bf16.mxu0 0
        %1064 = vmatpush1.bf16.msra.mxu0 0
        %1065 = vmatprep.mubr.bf16.mxu0 0
        %1066 = vmatmul.mubr.bf16.gmra.mrb[0].mxu0 %v575
        %v1067 = vpop.f32.mrb[0].mxu0
        %v1068 = vadd.f32 0.0, %v1067
        %v1069 = vpop.f32.mrb[0].mxu0
        %v1070 = vpop.f32.mrb[0].mxu0
        %v1071 = vadd.f32 0.0, %v1070
        %v1072 = vpop.f32.mrb[0].mxu0
        %1073 = vmatprep.mubr.bf16.mxu0 0
        %1074 = vmatmul.mubr.bf16.gmra.mrb[0].mxu0 %v578
        %v1075 = vpop.f32.mrb[0].mxu0
        %v1076 = vadd.f32 0.0, %v1075
        %v1077 = vpop.f32.mrb[0].mxu0
        %v1078 = vpop.f32.mrb[0].mxu0
        %v1079 = vadd.f32 0.0, %v1078
        %v1080 = vpop.f32.mrb[0].mxu0
        %1081 = vmatprep.mubr.bf16.mxu0 0
        %1082 = vmatmul.mubr.bf16.gmra.mrb[0].mxu0 %v581
        %v1083 = vpop.f32.mrb[0].mxu0
        %v1084 = vadd.f32 0.0, %v1083
        %v1085 = vpop.f32.mrb[0].mxu0
        %v1086 = vpop.f32.mrb[0].mxu0
        %v1087 = vadd.f32 0.0, %v1086
        %v1088 = vpop.f32.mrb[0].mxu0
        %1089 = vmatprep.mubr.bf16.mxu0 0
        %1090 = vmatmul.mubr.bf16.gmra.mrb[0].mxu0 %v584
        %v1091 = vpop.f32.mrb[0].mxu0
        %v1092 = vadd.f32 0.0, %v1091
        %v1093 = vpop.f32.mrb[0].mxu0
        %v1094 = vpop.f32.mrb[0].mxu0
        %v1095 = vadd.f32 0.0, %v1094
        %v1096 = vpop.f32.mrb[0].mxu0
        %1097 = vmatprep.mubr.bf16.mxu0 0
        %1098 = vmatmul.mubr.bf16.gmra.mrb[0].mxu0 %v587
        %v1099 = vpop.f32.mrb[0].mxu0
        %v1100 = vadd.f32 0.0, %v1099
        %v1101 = vpop.f32.mrb[0].mxu0
        %v1102 = vpop.f32.mrb[0].mxu0
        %v1103 = vadd.f32 0.0, %v1102
        %v1104 = vpop.f32.mrb[0].mxu0
        %1105 = vmatprep.mubr.bf16.mxu0 0
        %1106 = vmatmul.mubr.bf16.gmra.mrb[0].mxu0 %v590
        %v1107 = vpop.f32.mrb[0].mxu0
        %v1108 = vadd.f32 0.0, %v1107
        %v1109 = vpop.f32.mrb[0].mxu0
        %v1110 = vpop.f32.mrb[0].mxu0
        %v1111 = vadd.f32 0.0, %v1110
        %v1112 = vpop.f32.mrb[0].mxu0
        %1113 = vmatprep.mubr.bf16.mxu0 0
        %1114 = vmatmul.mubr.bf16.gmra.mrb[0].mxu0 %v593
        %v1115 = vpop.f32.mrb[0].mxu0
        %v1116 = vadd.f32 0.0, %v1115
        %v1117 = vpop.f32.mrb[0].mxu0
        %v1118 = vpop.f32.mrb[0].mxu0
        %v1119 = vadd.f32 0.0, %v1118
        %v1120 = vpop.f32.mrb[0].mxu0
        %1121 = vmatprep.mubr.bf16.mxu0 0
        %1122 = vmatmul.mubr.bf16.gmra.mrb[0].mxu0 %v596
        %v1123 = vpop.f32.mrb[0].mxu0
        %v1124 = vadd.f32 0.0, %v1123
        %v1125 = vpop.f32.mrb[0].mxu0
        %v1126 = vpop.f32.mrb[0].mxu0
        %v1127 = vadd.f32 0.0, %v1126
        %v1128 = vpop.f32.mrb[0].mxu0
        %1129 = vmatprep.mubr.bf16.mxu0 0
        %1130 = vmatmul.mubr.bf16.gmra.mrb[0].mxu0 %v599
        %v1131 = vpop.f32.mrb[0].mxu0
        %v1132 = vadd.f32 0.0, %v1131
        %v1133 = vpop.f32.mrb[0].mxu0
        %v1134 = vpop.f32.mrb[0].mxu0
        %v1135 = vadd.f32 0.0, %v1134
        %v1136 = vpop.f32.mrb[0].mxu0
        %1137 = vmatprep.mubr.bf16.mxu0 0
        %1138 = vmatmul.mubr.bf16.gmra.mrb[0].mxu0 %v602
        %v1139 = vpop.f32.mrb[0].mxu0
        %v1140 = vadd.f32 0.0, %v1139
        %v1141 = vpop.f32.mrb[0].mxu0
        %v1142 = vpop.f32.mrb[0].mxu0
        %v1143 = vadd.f32 0.0, %v1142
        %v1144 = vpop.f32.mrb[0].mxu0
        %1145 = vmatprep.mubr.bf16.mxu0 0
        %1146 = vmatmul.mubr.bf16.gmra.mrb[0].mxu0 %v605
        %v1147 = vpop.f32.mrb[0].mxu0
        %v1148 = vadd.f32 0.0, %v1147
        %v1149 = vpop.f32.mrb[0].mxu0
        %v1150 = vpop.f32.mrb[0].mxu0
        %v1151 = vadd.f32 0.0, %v1150
        %v1152 = vpop.f32.mrb[0].mxu0
        %1153 = vmatprep.mubr.bf16.mxu0 0
        %1154 = vmatmul.mubr.bf16.gmra.mrb[0].mxu0 %v608
        %v1155 = vpop.f32.mrb[0].mxu0
        %v1156 = vadd.f32 0.0, %v1155
        %v1157 = vpop.f32.mrb[0].mxu0
        %v1158 = vpop.f32.mrb[0].mxu0
        %v1159 = vadd.f32 0.0, %v1158
        %v1160 = vpop.f32.mrb[0].mxu0
        %1161 = vmatprep.mubr.bf16.mxu0 0
        %1162 = vmatmul.mubr.bf16.gmra.mrb[0].mxu0 %v611
        %v1163 = vpop.f32.mrb[0].mxu0
        %v1164 = vadd.f32 0.0, %v1163
        %v1165 = vpop.f32.mrb[0].mxu0
        %v1166 = vpop.f32.mrb[0].mxu0
        %v1167 = vadd.f32 0.0, %v1166
        %v1168 = vpop.f32.mrb[0].mxu0
        %1169 = vmatprep.mubr.bf16.mxu0 0
        %1170 = vmatmul.mubr.bf16.gmra.mrb[0].mxu0 %v614
        %v1171 = vpop.f32.mrb[0].mxu0
        %v1172 = vadd.f32 0.0, %v1171
        %v1173 = vpop.f32.mrb[0].mxu0
        %v1174 = vpop.f32.mrb[0].mxu0
        %v1175 = vadd.f32 0.0, %v1174
        %v1176 = vpop.f32.mrb[0].mxu0
        %1177 = vdwg.mxu0
        %v1190 = vunpack.c.l.b16 %v469
        %v1191 = vunpack.c.l.b16 %v470
        %v1192 = vunpack.c.l.b16 %v471
        %v1193 = vunpack.c.l.b16 %v472
        %v1194 = vunpack.c.l.b16 %v473
        %v1195 = vunpack.c.l.b16 %v474
        %v1196 = vunpack.c.l.b16 %v475
        %v1197 = vunpack.c.l.b16 %v476
        %v1198 = vunpack.c.l.b16 %v477
        %v1199 = vunpack.c.l.b16 %v478
        %v1200 = vunpack.c.l.b16 %v479
        %v1201 = vunpack.c.l.b16 %v480
        %v1202 = vpack.c.b16 %v1191, %v1190
        %v1203 = vpack.c.b16 %v1193, %v1192
        %v1204 = vpack.c.b16 %v1195, %v1194
        %v1205 = vpack.c.b16 %v1197, %v1196
        %v1206 = vpack.c.b16 %v1199, %v1198
        %v1207 = vpack.c.b16 %v1201, %v1200
        %1214 = vmatprep.subr.bf16.mxu0 0
        %1215 = vmatpush1.bf16.msra.mxu0 %v1202
        %1216 = vmatprep.subr.bf16.mxu0 0
        %1217 = vmatpush1.bf16.msra.mxu0 %v1203
        %1218 = vmatprep.subr.bf16.mxu0 0
        %1219 = vmatpush1.bf16.msra.mxu0 %v1204
        %1220 = vmatprep.subr.bf16.mxu0 0
        %1221 = vmatpush1.bf16.msra.mxu0 %v1205
        %1222 = vmatprep.subr.bf16.mxu0 0
        %1223 = vmatpush1.bf16.msra.mxu0 %v1206
        %1224 = vmatprep.subr.bf16.mxu0 0
        %1225 = vmatpush1.bf16.msra.mxu0 %v1207
        %1226 = vmatprep.subr.bf16.mxu0 0
        %1227 = vmatpush1.bf16.msra.mxu0 0
        %1228 = vmatprep.subr.bf16.mxu0 0
        %1229 = vmatpush1.bf16.msra.mxu0 0
        %1230 = vmatprep.subr.bf16.mxu0 0
        %1231 = vmatpush1.bf16.msra.mxu0 0
        %1232 = vmatprep.subr.bf16.mxu0 0
        %1233 = vmatpush1.bf16.msra.mxu0 0
        %1234 = vmatprep.subr.bf16.mxu0 0
        %1235 = vmatpush1.bf16.msra.mxu0 0
        %1236 = vmatprep.subr.bf16.mxu0 0
        %1237 = vmatpush1.bf16.msra.mxu0 0
        %1238 = vmatprep.subr.bf16.mxu0 0
        %1239 = vmatpush1.bf16.msra.mxu0 0
        %1240 = vmatprep.subr.bf16.mxu0 0
        %1241 = vmatpush1.bf16.msra.mxu0 0
        %1242 = vmatprep.subr.bf16.mxu0 0
        %1243 = vmatpush1.bf16.msra.mxu0 0
        %1244 = vmatprep.subr.bf16.mxu0 0
        %1245 = vmatpush1.bf16.msra.mxu0 0
        %1246 = vmatprep.mubr.bf16.mxu0 0
        %1247 = vmatmul.mubr.bf16.gmra.mrb[0].mxu0 %v798
        %v1248 = vpop.f32.mrb[0].mxu0
        %v1249 = vadd.f32 %v1068, %v1248
        %v1250 = vpop.f32.mrb[0].mxu0
        %v1251 = vpop.f32.mrb[0].mxu0
        %v1252 = vadd.f32 %v1071, %v1251
        %v1253 = vpop.f32.mrb[0].mxu0
        %1254 = vmatprep.mubr.bf16.mxu0 0
        %1255 = vmatmul.mubr.bf16.gmra.mrb[0].mxu0 %v801
        %v1256 = vpop.f32.mrb[0].mxu0
        %v1257 = vadd.f32 %v1076, %v1256
        %v1258 = vpop.f32.mrb[0].mxu0
        %v1259 = vpop.f32.mrb[0].mxu0
        %v1260 = vadd.f32 %v1079, %v1259
        %v1261 = vpop.f32.mrb[0].mxu0
        %1262 = vmatprep.mubr.bf16.mxu0 0
        %1263 = vmatmul.mubr.bf16.gmra.mrb[0].mxu0 %v804
        %v1264 = vpop.f32.mrb[0].mxu0
        %v1265 = vadd.f32 %v1084, %v1264
        %v1266 = vpop.f32.mrb[0].mxu0
        %v1267 = vpop.f32.mrb[0].mxu0
        %v1268 = vadd.f32 %v1087, %v1267
        %v1269 = vpop.f32.mrb[0].mxu0
        %1270 = vmatprep.mubr.bf16.mxu0 0
        %1271 = vmatmul.mubr.bf16.gmra.mrb[0].mxu0 %v807
        %v1272 = vpop.f32.mrb[0].mxu0
        %v1273 = vadd.f32 %v1092, %v1272
        %v1274 = vpop.f32.mrb[0].mxu0
        %v1275 = vpop.f32.mrb[0].mxu0
        %v1276 = vadd.f32 %v1095, %v1275
        %v1277 = vpop.f32.mrb[0].mxu0
        %1278 = vmatprep.mubr.bf16.mxu0 0
        %1279 = vmatmul.mubr.bf16.gmra.mrb[0].mxu0 %v810
        %v1280 = vpop.f32.mrb[0].mxu0
        %v1281 = vadd.f32 %v1100, %v1280
        %v1282 = vpop.f32.mrb[0].mxu0
        %v1283 = vpop.f32.mrb[0].mxu0
        %v1284 = vadd.f32 %v1103, %v1283
        %v1285 = vpop.f32.mrb[0].mxu0
        %1286 = vmatprep.mubr.bf16.mxu0 0
        %1287 = vmatmul.mubr.bf16.gmra.mrb[0].mxu0 %v813
        %v1288 = vpop.f32.mrb[0].mxu0
        %v1289 = vadd.f32 %v1108, %v1288
        %v1290 = vpop.f32.mrb[0].mxu0
        %v1291 = vpop.f32.mrb[0].mxu0
        %v1292 = vadd.f32 %v1111, %v1291
        %v1293 = vpop.f32.mrb[0].mxu0
        %1294 = vmatprep.mubr.bf16.mxu0 0
        %1295 = vmatmul.mubr.bf16.gmra.mrb[0].mxu0 %v816
        %v1296 = vpop.f32.mrb[0].mxu0
        %v1297 = vadd.f32 %v1116, %v1296
        %v1298 = vpop.f32.mrb[0].mxu0
        %v1299 = vpop.f32.mrb[0].mxu0
        %v1300 = vadd.f32 %v1119, %v1299
        %v1301 = vpop.f32.mrb[0].mxu0
        %1302 = vmatprep.mubr.bf16.mxu0 0
        %1303 = vmatmul.mubr.bf16.gmra.mrb[0].mxu0 %v819
        %v1304 = vpop.f32.mrb[0].mxu0
        %v1305 = vadd.f32 %v1124, %v1304
        %v1306 = vpop.f32.mrb[0].mxu0
        %v1307 = vpop.f32.mrb[0].mxu0
        %v1308 = vadd.f32 %v1127, %v1307
        %v1309 = vpop.f32.mrb[0].mxu0
        %1310 = vmatprep.mubr.bf16.mxu0 0
        %1311 = vmatmul.mubr.bf16.gmra.mrb[0].mxu0 %v822
        %v1312 = vpop.f32.mrb[0].mxu0
        %v1313 = vadd.f32 %v1132, %v1312
        %v1314 = vpop.f32.mrb[0].mxu0
        %v1315 = vpop.f32.mrb[0].mxu0
        %v1316 = vadd.f32 %v1135, %v1315
        %v1317 = vpop.f32.mrb[0].mxu0
        %1318 = vmatprep.mubr.bf16.mxu0 0
        %1319 = vmatmul.mubr.bf16.gmra.mrb[0].mxu0 %v825
        %v1320 = vpop.f32.mrb[0].mxu0
        %v1321 = vadd.f32 %v1140, %v1320
        %v1322 = vpop.f32.mrb[0].mxu0
        %v1323 = vpop.f32.mrb[0].mxu0
        %v1324 = vadd.f32 %v1143, %v1323
        %v1325 = vpop.f32.mrb[0].mxu0
        %1326 = vmatprep.mubr.bf16.mxu0 0
        %1327 = vmatmul.mubr.bf16.gmra.mrb[0].mxu0 %v828
        %v1328 = vpop.f32.mrb[0].mxu0
        %v1329 = vadd.f32 %v1148, %v1328
        %v1330 = vpop.f32.mrb[0].mxu0
        %v1331 = vpop.f32.mrb[0].mxu0
        %v1332 = vadd.f32 %v1151, %v1331
        %v1333 = vpop.f32.mrb[0].mxu0
        %1334 = vmatprep.mubr.bf16.mxu0 0
        %1335 = vmatmul.mubr.bf16.gmra.mrb[0].mxu0 %v831
        %v1336 = vpop.f32.mrb[0].mxu0
        %v1337 = vadd.f32 %v1156, %v1336
        %v1338 = vpop.f32.mrb[0].mxu0
        %v1339 = vpop.f32.mrb[0].mxu0
        %v1340 = vadd.f32 %v1159, %v1339
        %v1341 = vpop.f32.mrb[0].mxu0
        %1342 = vmatprep.mubr.bf16.mxu0 0
        %1343 = vmatmul.mubr.bf16.gmra.mrb[0].mxu0 %v834
        %v1344 = vpop.f32.mrb[0].mxu0
        %v1345 = vadd.f32 %v1164, %v1344
        %v1346 = vpop.f32.mrb[0].mxu0
        %v1347 = vpop.f32.mrb[0].mxu0
        %v1348 = vadd.f32 %v1167, %v1347
        %v1349 = vpop.f32.mrb[0].mxu0
        %1350 = vmatprep.mubr.bf16.mxu0 0
        %1351 = vmatmul.mubr.bf16.gmra.mrb[0].mxu0 %v837
        %v1352 = vpop.f32.mrb[0].mxu0
        %v1353 = vadd.f32 %v1172, %v1352
        %v1354 = vpop.f32.mrb[0].mxu0
        %v1355 = vpop.f32.mrb[0].mxu0
        %v1356 = vadd.f32 %v1175, %v1355
        %v1357 = vpop.f32.mrb[0].mxu0
        %1358 = vdwg.mxu0
        %s1359 = scalar_lea.vmem %s381, 16 [#allocation2]
        %v1360 = vld [vmem:[%s1359] sm:$0xff]
        %v1361 = vld [vmem:[%s1359 + $0x8] sm:$0xff]
        %v1362 = vld [vmem:[%s1359 + $0x10] sm:$0xff]
        %v1363 = vld [vmem:[%s1359 + $0x18] sm:$0xff]
        %v1364 = vld [vmem:[%s1359 + $0x20] sm:$0xff]
        %v1365 = vld [vmem:[%s1359 + $0x28] sm:$0xff]
        %v1366 = vld [vmem:[%s1359 + $0x30] sm:$0xff]
        %v1367 = vld [vmem:[%s1359 + $0x38] sm:$0xff]
        %v1368 = vld [vmem:[%s1359 + $0x40] sm:$0xff]
        %v1369 = vld [vmem:[%s1359 + $0x48] sm:$0xff]
        %v1370 = vld [vmem:[%s1359 + $0x50] sm:$0xff]
        %v1371 = vld [vmem:[%s1359 + $0x58] sm:$0xff]
        %v1372 = vld [vmem:[%s1359 + $0x60] sm:$0xff]
        %v1373 = vld [vmem:[%s1359 + $0x68] sm:$0xff]
        %v1374 = vld [vmem:[%s1359 + $0x70] sm:$0xff]
        %v1375 = vld [vmem:[%s1359 + $0x78] sm:$0xff]
        %v1376 = vld [vmem:[%s1359 + $0x80] sm:$0xff]
        %v1377 = vld [vmem:[%s1359 + $0x88] sm:$0xff]
        %v1378 = vld [vmem:[%s1359 + $0x90] sm:$0xff]
        %v1379 = vld [vmem:[%s1359 + $0x98] sm:$0xff]
        %v1380 = vld [vmem:[%s1359 + $0xa0] sm:$0xff]
        %v1381 = vld [vmem:[%s1359 + $0xa8] sm:$0xff]
        %v1382 = vld [vmem:[%s1359 + $0xb0] sm:$0xff]
        %v1383 = vld [vmem:[%s1359 + $0xb8] sm:$0xff]
        %v1384 = vld [vmem:[%s1359 + $0xc0] sm:$0xff]
        %v1385 = vld [vmem:[%s1359 + $0xc8] sm:$0xff]
        %v1386 = vld [vmem:[%s1359 + $0xd0] sm:$0xff]
        %v1387 = vld [vmem:[%s1359 + $0xd8] sm:$0xff]
        %v1388 = vpack.c.bf16 %v1361, %v1360
        %v1389 = vpack.c.bf16 %v1363, %v1362
        %v1390 = vpack.c.bf16 %v1365, %v1364
        %v1391 = vpack.c.bf16 %v1367, %v1366
        %v1392 = vpack.c.bf16 %v1369, %v1368
        %v1393 = vpack.c.bf16 %v1371, %v1370
        %v1394 = vpack.c.bf16 %v1373, %v1372
        %v1395 = vpack.c.bf16 %v1375, %v1374
        %v1396 = vpack.c.bf16 %v1377, %v1376
        %v1397 = vpack.c.bf16 %v1379, %v1378
        %v1398 = vpack.c.bf16 %v1381, %v1380
        %v1399 = vpack.c.bf16 %v1383, %v1382
        %v1400 = vpack.c.bf16 %v1385, %v1384
        %v1401 = vpack.c.bf16 %v1387, %v1386
        %s1402 = scalar_lea.vmem %s1, 192
        %v1403 = vld [vmem:[%s1402] sm:$0xf]
        %v1404 = vld [vmem:[%s1402 + $0x4] sm:$0xf]
        %v1405 = vld [vmem:[%s1402 + $0x8] sm:$0xf]
        %v1406 = vld [vmem:[%s1402 + $0xc] sm:$0xf]
        %v1407 = vld [vmem:[%s1402 + $0x10] sm:$0xf]
        %v1408 = vld [vmem:[%s1402 + $0x14] sm:$0xf]
        %v1409 = vld [vmem:[%s1402 + $0x18] sm:$0xf]
        %v1410 = vld [vmem:[%s1402 + $0x1c] sm:$0xf]
        %v1411 = vld [vmem:[%s1402 + $0x20] sm:$0xf]
        %v1412 = vld [vmem:[%s1402 + $0x24] sm:$0xf]
        %v1413 = vld [vmem:[%s1402 + $0x28] sm:$0xf]
        %v1414 = vld [vmem:[%s1402 + $0x2c] sm:$0xf]
        %v1427 = vunpack.c.l.b16 %v1403
        %v1428 = vunpack.c.l.b16 %v1404
        %v1429 = vunpack.c.l.b16 %v1405
        %v1430 = vunpack.c.l.b16 %v1406
        %v1431 = vunpack.c.l.b16 %v1407
        %v1432 = vunpack.c.l.b16 %v1408
        %v1433 = vunpack.c.l.b16 %v1409
        %v1434 = vunpack.c.l.b16 %v1410
        %v1435 = vunpack.c.l.b16 %v1411
        %v1436 = vunpack.c.l.b16 %v1412
        %v1437 = vunpack.c.l.b16 %v1413
        %v1438 = vunpack.c.l.b16 %v1414
        %v1439 = vpack.c.b16 %v1428, %v1427
        %v1440 = vpack.c.b16 %v1430, %v1429
        %v1441 = vpack.c.b16 %v1432, %v1431
        %v1442 = vpack.c.b16 %v1434, %v1433
        %v1443 = vpack.c.b16 %v1436, %v1435
        %v1444 = vpack.c.b16 %v1438, %v1437
        %v1452 = vsel %vm573, %v1388, 0
        %v1455 = vsel %vm573, %v1389, 0
        %v1458 = vsel %vm573, %v1390, 0
        %v1461 = vsel %vm573, %v1391, 0
        %v1464 = vsel %vm573, %v1392, 0
        %v1467 = vsel %vm573, %v1393, 0
        %v1470 = vsel %vm573, %v1394, 0
        %v1473 = vsel %vm573, %v1395, 0
        %v1476 = vsel %vm573, %v1396, 0
        %v1479 = vsel %vm573, %v1397, 0
        %v1482 = vsel %vm573, %v1398, 0
        %v1485 = vsel %vm573, %v1399, 0
        %v1488 = vsel %vm573, %v1400, 0
        %v1491 = vsel %vm573, %v1401, 0
        %1493 = vmatprep.subr.bf16.mxu0 0
        %1494 = vmatpush1.bf16.msra.mxu0 %v1439
        %1495 = vmatprep.subr.bf16.mxu0 0
        %1496 = vmatpush1.bf16.msra.mxu0 %v1440
        %1497 = vmatprep.subr.bf16.mxu0 0
        %1498 = vmatpush1.bf16.msra.mxu0 %v1441
        %1499 = vmatprep.subr.bf16.mxu0 0
        %1500 = vmatpush1.bf16.msra.mxu0 %v1442
        %1501 = vmatprep.subr.bf16.mxu0 0
        %1502 = vmatpush1.bf16.msra.mxu0 %v1443
        %1503 = vmatprep.subr.bf16.mxu0 0
        %1504 = vmatpush1.bf16.msra.mxu0 %v1444
        %1505 = vmatprep.subr.bf16.mxu0 0
        %1506 = vmatpush1.bf16.msra.mxu0 0
        %1507 = vmatprep.subr.bf16.mxu0 0
        %1508 = vmatpush1.bf16.msra.mxu0 0
        %1509 = vmatprep.subr.bf16.mxu0 0
        %1510 = vmatpush1.bf16.msra.mxu0 0
        %1511 = vmatprep.subr.bf16.mxu0 0
        %1512 = vmatpush1.bf16.msra.mxu0 0
        %1513 = vmatprep.subr.bf16.mxu0 0
        %1514 = vmatpush1.bf16.msra.mxu0 0
        %1515 = vmatprep.subr.bf16.mxu0 0
        %1516 = vmatpush1.bf16.msra.mxu0 0
        %1517 = vmatprep.subr.bf16.mxu0 0
        %1518 = vmatpush1.bf16.msra.mxu0 0
        %1519 = vmatprep.subr.bf16.mxu0 0
        %1520 = vmatpush1.bf16.msra.mxu0 0
        %1521 = vmatprep.subr.bf16.mxu0 0
        %1522 = vmatpush1.bf16.msra.mxu0 0
        %1523 = vmatprep.subr.bf16.mxu0 0
        %1524 = vmatpush1.bf16.msra.mxu0 0
        %1525 = vmatprep.mubr.bf16.mxu0 0
        %1526 = vmatmul.mubr.bf16.gmra.mrb[0].mxu0 %v1452
        %v1527 = vpop.f32.mrb[0].mxu0
        %v1528 = vadd.f32 0.0, %v1527
        %v1529 = vpop.f32.mrb[0].mxu0
        %v1530 = vpop.f32.mrb[0].mxu0
        %v1531 = vadd.f32 0.0, %v1530
        %v1532 = vpop.f32.mrb[0].mxu0
        %1533 = vmatprep.mubr.bf16.mxu0 0
        %1534 = vmatmul.mubr.bf16.gmra.mrb[0].mxu0 %v1455
        %v1535 = vpop.f32.mrb[0].mxu0
        %v1536 = vadd.f32 0.0, %v1535
        %v1537 = vpop.f32.mrb[0].mxu0
        %v1538 = vpop.f32.mrb[0].mxu0
        %v1539 = vadd.f32 0.0, %v1538
        %v1540 = vpop.f32.mrb[0].mxu0
        %1541 = vmatprep.mubr.bf16.mxu0 0
        %1542 = vmatmul.mubr.bf16.gmra.mrb[0].mxu0 %v1458
        %v1543 = vpop.f32.mrb[0].mxu0
        %v1544 = vadd.f32 0.0, %v1543
        %v1545 = vpop.f32.mrb[0].mxu0
        %v1546 = vpop.f32.mrb[0].mxu0
        %v1547 = vadd.f32 0.0, %v1546
        %v1548 = vpop.f32.mrb[0].mxu0
        %1549 = vmatprep.mubr.bf16.mxu0 0
        %1550 = vmatmul.mubr.bf16.gmra.mrb[0].mxu0 %v1461
        %v1551 = vpop.f32.mrb[0].mxu0
        %v1552 = vadd.f32 0.0, %v1551
        %v1553 = vpop.f32.mrb[0].mxu0
        %v1554 = vpop.f32.mrb[0].mxu0
        %v1555 = vadd.f32 0.0, %v1554
        %v1556 = vpop.f32.mrb[0].mxu0
        %1557 = vmatprep.mubr.bf16.mxu0 0
        %1558 = vmatmul.mubr.bf16.gmra.mrb[0].mxu0 %v1464
        %v1559 = vpop.f32.mrb[0].mxu0
        %v1560 = vadd.f32 0.0, %v1559
        %v1561 = vpop.f32.mrb[0].mxu0
        %v1562 = vpop.f32.mrb[0].mxu0
        %v1563 = vadd.f32 0.0, %v1562
        %v1564 = vpop.f32.mrb[0].mxu0
        %1565 = vmatprep.mubr.bf16.mxu0 0
        %1566 = vmatmul.mubr.bf16.gmra.mrb[0].mxu0 %v1467
        %v1567 = vpop.f32.mrb[0].mxu0
        %v1568 = vadd.f32 0.0, %v1567
        %v1569 = vpop.f32.mrb[0].mxu0
        %v1570 = vpop.f32.mrb[0].mxu0
        %v1571 = vadd.f32 0.0, %v1570
        %v1572 = vpop.f32.mrb[0].mxu0
        %1573 = vmatprep.mubr.bf16.mxu0 0
        %1574 = vmatmul.mubr.bf16.gmra.mrb[0].mxu0 %v1470
        %v1575 = vpop.f32.mrb[0].mxu0
        %v1576 = vadd.f32 0.0, %v1575
        %v1577 = vpop.f32.mrb[0].mxu0
        %v1578 = vpop.f32.mrb[0].mxu0
        %v1579 = vadd.f32 0.0, %v1578
        %v1580 = vpop.f32.mrb[0].mxu0
        %1581 = vmatprep.mubr.bf16.mxu0 0
        %1582 = vmatmul.mubr.bf16.gmra.mrb[0].mxu0 %v1473
        %v1583 = vpop.f32.mrb[0].mxu0
        %v1584 = vadd.f32 0.0, %v1583
        %v1585 = vpop.f32.mrb[0].mxu0
        %v1586 = vpop.f32.mrb[0].mxu0
        %v1587 = vadd.f32 0.0, %v1586
        %v1588 = vpop.f32.mrb[0].mxu0
        %1589 = vmatprep.mubr.bf16.mxu0 0
        %1590 = vmatmul.mubr.bf16.gmra.mrb[0].mxu0 %v1476
        %v1591 = vpop.f32.mrb[0].mxu0
        %v1592 = vadd.f32 0.0, %v1591
        %v1593 = vpop.f32.mrb[0].mxu0
        %v1594 = vpop.f32.mrb[0].mxu0
        %v1595 = vadd.f32 0.0, %v1594
        %v1596 = vpop.f32.mrb[0].mxu0
        %1597 = vmatprep.mubr.bf16.mxu0 0
        %1598 = vmatmul.mubr.bf16.gmra.mrb[0].mxu0 %v1479
        %v1599 = vpop.f32.mrb[0].mxu0
        %v1600 = vadd.f32 0.0, %v1599
        %v1601 = vpop.f32.mrb[0].mxu0
        %v1602 = vpop.f32.mrb[0].mxu0
        %v1603 = vadd.f32 0.0, %v1602
        %v1604 = vpop.f32.mrb[0].mxu0
        %1605 = vmatprep.mubr.bf16.mxu0 0
        %1606 = vmatmul.mubr.bf16.gmra.mrb[0].mxu0 %v1482
        %v1607 = vpop.f32.mrb[0].mxu0
        %v1608 = vadd.f32 0.0, %v1607
        %v1609 = vpop.f32.mrb[0].mxu0
        %v1610 = vpop.f32.mrb[0].mxu0
        %v1611 = vadd.f32 0.0, %v1610
        %v1612 = vpop.f32.mrb[0].mxu0
        %1613 = vmatprep.mubr.bf16.mxu0 0
        %1614 = vmatmul.mubr.bf16.gmra.mrb[0].mxu0 %v1485
        %v1615 = vpop.f32.mrb[0].mxu0
        %v1616 = vadd.f32 0.0, %v1615
        %v1617 = vpop.f32.mrb[0].mxu0
        %v1618 = vpop.f32.mrb[0].mxu0
        %v1619 = vadd.f32 0.0, %v1618
        %v1620 = vpop.f32.mrb[0].mxu0
        %1621 = vmatprep.mubr.bf16.mxu0 0
        %1622 = vmatmul.mubr.bf16.gmra.mrb[0].mxu0 %v1488
        %v1623 = vpop.f32.mrb[0].mxu0
        %v1624 = vadd.f32 0.0, %v1623
        %v1625 = vpop.f32.mrb[0].mxu0
        %v1626 = vpop.f32.mrb[0].mxu0
        %v1627 = vadd.f32 0.0, %v1626
        %v1628 = vpop.f32.mrb[0].mxu0
        %1629 = vmatprep.mubr.bf16.mxu0 0
        %1630 = vmatmul.mubr.bf16.gmra.mrb[0].mxu0 %v1491
        %v1631 = vpop.f32.mrb[0].mxu0
        %v1632 = vadd.f32 0.0, %v1631
        %v1633 = vpop.f32.mrb[0].mxu0
        %v1634 = vpop.f32.mrb[0].mxu0
        %v1635 = vadd.f32 0.0, %v1634
        %v1636 = vpop.f32.mrb[0].mxu0
        %1637 = vdwg.mxu0
        %v1638 = vadd.f32 %v874, %v1528
        %v1639 = vadd.f32 %v877, %v1531
        %v1640 = vadd.f32 %v882, %v1536
        %v1641 = vadd.f32 %v885, %v1539
        %v1642 = vadd.f32 %v890, %v1544
        %v1643 = vadd.f32 %v893, %v1547
        %v1644 = vadd.f32 %v898, %v1552
        %v1645 = vadd.f32 %v901, %v1555
        %v1646 = vadd.f32 %v906, %v1560
        %v1647 = vadd.f32 %v909, %v1563
        %v1648 = vadd.f32 %v914, %v1568
        %v1649 = vadd.f32 %v917, %v1571
        %v1650 = vadd.f32 %v922, %v1576
        %v1651 = vadd.f32 %v925, %v1579
        %v1652 = vadd.f32 %v930, %v1584
        %v1653 = vadd.f32 %v933, %v1587
        %v1654 = vadd.f32 %v938, %v1592
        %v1655 = vadd.f32 %v941, %v1595
        %v1656 = vadd.f32 %v946, %v1600
        %v1657 = vadd.f32 %v949, %v1603
        %v1658 = vadd.f32 %v954, %v1608
        %v1659 = vadd.f32 %v957, %v1611
        %v1660 = vadd.f32 %v962, %v1616
        %v1661 = vadd.f32 %v965, %v1619
        %v1662 = vadd.f32 %v970, %v1624
        %v1663 = vadd.f32 %v973, %v1627
        %v1664 = vadd.f32 %v978, %v1632
        %v1665 = vadd.f32 %v981, %v1635
        %s1666 = scalar_lea.vmem %s1, 240
        %v1667 = vld [vmem:[%s1666] sm:$0xf]
        %v1668 = vld [vmem:[%s1666 + $0x4] sm:$0xf]
        %v1669 = vld [vmem:[%s1666 + $0x8] sm:$0xf]
        %v1670 = vld [vmem:[%s1666 + $0xc] sm:$0xf]
        %v1671 = vld [vmem:[%s1666 + $0x10] sm:$0xf]
        %v1672 = vld [vmem:[%s1666 + $0x14] sm:$0xf]
        %v1673 = vld [vmem:[%s1666 + $0x18] sm:$0xf]
        %v1674 = vld [vmem:[%s1666 + $0x1c] sm:$0xf]
        %v1675 = vld [vmem:[%s1666 + $0x20] sm:$0xf]
        %v1676 = vld [vmem:[%s1666 + $0x24] sm:$0xf]
        %v1677 = vld [vmem:[%s1666 + $0x28] sm:$0xf]
        %v1678 = vld [vmem:[%s1666 + $0x2c] sm:$0xf]
        %v1691 = vunpack.c.l.b16 %v1667
        %v1692 = vunpack.c.l.b16 %v1668
        %v1693 = vunpack.c.l.b16 %v1669
        %v1694 = vunpack.c.l.b16 %v1670
        %v1695 = vunpack.c.l.b16 %v1671
        %v1696 = vunpack.c.l.b16 %v1672
        %v1697 = vunpack.c.l.b16 %v1673
        %v1698 = vunpack.c.l.b16 %v1674
        %v1699 = vunpack.c.l.b16 %v1675
        %v1700 = vunpack.c.l.b16 %v1676
        %v1701 = vunpack.c.l.b16 %v1677
        %v1702 = vunpack.c.l.b16 %v1678
        %v1703 = vpack.c.b16 %v1692, %v1691
        %v1704 = vpack.c.b16 %v1694, %v1693
        %v1705 = vpack.c.b16 %v1696, %v1695
        %v1706 = vpack.c.b16 %v1698, %v1697
        %v1707 = vpack.c.b16 %v1700, %v1699
        %v1708 = vpack.c.b16 %v1702, %v1701
        %1715 = vmatprep.subr.bf16.mxu0 0
        %1716 = vmatpush1.bf16.msra.mxu0 %v1703
        %1717 = vmatprep.subr.bf16.mxu0 0
        %1718 = vmatpush1.bf16.msra.mxu0 %v1704
        %1719 = vmatprep.subr.bf16.mxu0 0
        %1720 = vmatpush1.bf16.msra.mxu0 %v1705
        %1721 = vmatprep.subr.bf16.mxu0 0
        %1722 = vmatpush1.bf16.msra.mxu0 %v1706
        %1723 = vmatprep.subr.bf16.mxu0 0
        %1724 = vmatpush1.bf16.msra.mxu0 %v1707
        %1725 = vmatprep.subr.bf16.mxu0 0
        %1726 = vmatpush1.bf16.msra.mxu0 %v1708
        %1727 = vmatprep.subr.bf16.mxu0 0
        %1728 = vmatpush1.bf16.msra.mxu0 0
        %1729 = vmatprep.subr.bf16.mxu0 0
        %1730 = vmatpush1.bf16.msra.mxu0 0
        %1731 = vmatprep.subr.bf16.mxu0 0
        %1732 = vmatpush1.bf16.msra.mxu0 0
        %1733 = vmatprep.subr.bf16.mxu0 0
        %1734 = vmatpush1.bf16.msra.mxu0 0
        %1735 = vmatprep.subr.bf16.mxu0 0
        %1736 = vmatpush1.bf16.msra.mxu0 0
        %1737 = vmatprep.subr.bf16.mxu0 0
        %1738 = vmatpush1.bf16.msra.mxu0 0
        %1739 = vmatprep.subr.bf16.mxu0 0
        %1740 = vmatpush1.bf16.msra.mxu0 0
        %1741 = vmatprep.subr.bf16.mxu0 0
        %1742 = vmatpush1.bf16.msra.mxu0 0
        %1743 = vmatprep.subr.bf16.mxu0 0
        %1744 = vmatpush1.bf16.msra.mxu0 0
        %1745 = vmatprep.subr.bf16.mxu0 0
        %1746 = vmatpush1.bf16.msra.mxu0 0
        %1747 = vmatprep.mubr.bf16.mxu0 0
        %1748 = vmatmul.mubr.bf16.gmra.mrb[0].mxu0 %v1452
        %v1749 = vpop.f32.mrb[0].mxu0
        %v1750 = vadd.f32 0.0, %v1749
        %v1751 = vpop.f32.mrb[0].mxu0
        %v1752 = vpop.f32.mrb[0].mxu0
        %v1753 = vadd.f32 0.0, %v1752
        %v1754 = vpop.f32.mrb[0].mxu0
        %1755 = vmatprep.mubr.bf16.mxu0 0
        %1756 = vmatmul.mubr.bf16.gmra.mrb[0].mxu0 %v1455
        %v1757 = vpop.f32.mrb[0].mxu0
        %v1758 = vadd.f32 0.0, %v1757
        %v1759 = vpop.f32.mrb[0].mxu0
        %v1760 = vpop.f32.mrb[0].mxu0
        %v1761 = vadd.f32 0.0, %v1760
        %v1762 = vpop.f32.mrb[0].mxu0
        %1763 = vmatprep.mubr.bf16.mxu0 0
        %1764 = vmatmul.mubr.bf16.gmra.mrb[0].mxu0 %v1458
        %v1765 = vpop.f32.mrb[0].mxu0
        %v1766 = vadd.f32 0.0, %v1765
        %v1767 = vpop.f32.mrb[0].mxu0
        %v1768 = vpop.f32.mrb[0].mxu0
        %v1769 = vadd.f32 0.0, %v1768
        %v1770 = vpop.f32.mrb[0].mxu0
        %1771 = vmatprep.mubr.bf16.mxu0 0
        %1772 = vmatmul.mubr.bf16.gmra.mrb[0].mxu0 %v1461
        %v1773 = vpop.f32.mrb[0].mxu0
        %v1774 = vadd.f32 0.0, %v1773
        %v1775 = vpop.f32.mrb[0].mxu0
        %v1776 = vpop.f32.mrb[0].mxu0
        %v1777 = vadd.f32 0.0, %v1776
        %v1778 = vpop.f32.mrb[0].mxu0
        %1779 = vmatprep.mubr.bf16.mxu0 0
        %1780 = vmatmul.mubr.bf16.gmra.mrb[0].mxu0 %v1464
        %v1781 = vpop.f32.mrb[0].mxu0
        %v1782 = vadd.f32 0.0, %v1781
        %v1783 = vpop.f32.mrb[0].mxu0
        %v1784 = vpop.f32.mrb[0].mxu0
        %v1785 = vadd.f32 0.0, %v1784
        %v1786 = vpop.f32.mrb[0].mxu0
        %1787 = vmatprep.mubr.bf16.mxu0 0
        %1788 = vmatmul.mubr.bf16.gmra.mrb[0].mxu0 %v1467
        %v1789 = vpop.f32.mrb[0].mxu0
        %v1790 = vadd.f32 0.0, %v1789
        %v1791 = vpop.f32.mrb[0].mxu0
        %v1792 = vpop.f32.mrb[0].mxu0
        %v1793 = vadd.f32 0.0, %v1792
        %v1794 = vpop.f32.mrb[0].mxu0
        %1795 = vmatprep.mubr.bf16.mxu0 0
        %1796 = vmatmul.mubr.bf16.gmra.mrb[0].mxu0 %v1470
        %v1797 = vpop.f32.mrb[0].mxu0
        %v1798 = vadd.f32 0.0, %v1797
        %v1799 = vpop.f32.mrb[0].mxu0
        %v1800 = vpop.f32.mrb[0].mxu0
        %v1801 = vadd.f32 0.0, %v1800
        %v1802 = vpop.f32.mrb[0].mxu0
        %1803 = vmatprep.mubr.bf16.mxu0 0
        %1804 = vmatmul.mubr.bf16.gmra.mrb[0].mxu0 %v1473
        %v1805 = vpop.f32.mrb[0].mxu0
        %v1806 = vadd.f32 0.0, %v1805
        %v1807 = vpop.f32.mrb[0].mxu0
        %v1808 = vpop.f32.mrb[0].mxu0
        %v1809 = vadd.f32 0.0, %v1808
        %v1810 = vpop.f32.mrb[0].mxu0
        %1811 = vmatprep.mubr.bf16.mxu0 0
        %1812 = vmatmul.mubr.bf16.gmra.mrb[0].mxu0 %v1476
        %v1813 = vpop.f32.mrb[0].mxu0
        %v1814 = vadd.f32 0.0, %v1813
        %v1815 = vpop.f32.mrb[0].mxu0
        %v1816 = vpop.f32.mrb[0].mxu0
        %v1817 = vadd.f32 0.0, %v1816
        %v1818 = vpop.f32.mrb[0].mxu0
        %1819 = vmatprep.mubr.bf16.mxu0 0
        %1820 = vmatmul.mubr.bf16.gmra.mrb[0].mxu0 %v1479
        %v1821 = vpop.f32.mrb[0].mxu0
        %v1822 = vadd.f32 0.0, %v1821
        %v1823 = vpop.f32.mrb[0].mxu0
        %v1824 = vpop.f32.mrb[0].mxu0
        %v1825 = vadd.f32 0.0, %v1824
        %v1826 = vpop.f32.mrb[0].mxu0
        %1827 = vmatprep.mubr.bf16.mxu0 0
        %1828 = vmatmul.mubr.bf16.gmra.mrb[0].mxu0 %v1482
        %v1829 = vpop.f32.mrb[0].mxu0
        %v1830 = vadd.f32 0.0, %v1829
        %v1831 = vpop.f32.mrb[0].mxu0
        %v1832 = vpop.f32.mrb[0].mxu0
        %v1833 = vadd.f32 0.0, %v1832
        %v1834 = vpop.f32.mrb[0].mxu0
        %1835 = vmatprep.mubr.bf16.mxu0 0
        %1836 = vmatmul.mubr.bf16.gmra.mrb[0].mxu0 %v1485
        %v1837 = vpop.f32.mrb[0].mxu0
        %v1838 = vadd.f32 0.0, %v1837
        %v1839 = vpop.f32.mrb[0].mxu0
        %v1840 = vpop.f32.mrb[0].mxu0
        %v1841 = vadd.f32 0.0, %v1840
        %v1842 = vpop.f32.mrb[0].mxu0
        %1843 = vmatprep.mubr.bf16.mxu0 0
        %1844 = vmatmul.mubr.bf16.gmra.mrb[0].mxu0 %v1488
        %v1845 = vpop.f32.mrb[0].mxu0
        %v1846 = vadd.f32 0.0, %v1845
        %v1847 = vpop.f32.mrb[0].mxu0
        %v1848 = vpop.f32.mrb[0].mxu0
        %v1849 = vadd.f32 0.0, %v1848
        %v1850 = vpop.f32.mrb[0].mxu0
        %1851 = vmatprep.mubr.bf16.mxu0 0
        %1852 = vmatmul.mubr.bf16.gmra.mrb[0].mxu0 %v1491
        %v1853 = vpop.f32.mrb[0].mxu0
        %v1854 = vadd.f32 0.0, %v1853
        %v1855 = vpop.f32.mrb[0].mxu0
        %v1856 = vpop.f32.mrb[0].mxu0
        %v1857 = vadd.f32 0.0, %v1856
        %v1858 = vpop.f32.mrb[0].mxu0
        %1859 = vdwg.mxu0
        %v1860 = vadd.f32 %v1249, %v1750
        %v1861 = vadd.f32 %v1252, %v1753
        %v1862 = vadd.f32 %v1257, %v1758
        %v1863 = vadd.f32 %v1260, %v1761
        %v1864 = vadd.f32 %v1265, %v1766
        %v1865 = vadd.f32 %v1268, %v1769
        %v1866 = vadd.f32 %v1273, %v1774
        %v1867 = vadd.f32 %v1276, %v1777
        %v1868 = vadd.f32 %v1281, %v1782
        %v1869 = vadd.f32 %v1284, %v1785
        %v1870 = vadd.f32 %v1289, %v1790
        %v1871 = vadd.f32 %v1292, %v1793
        %v1872 = vadd.f32 %v1297, %v1798
        %v1873 = vadd.f32 %v1300, %v1801
        %v1874 = vadd.f32 %v1305, %v1806
        %v1875 = vadd.f32 %v1308, %v1809
        %v1876 = vadd.f32 %v1313, %v1814
        %v1877 = vadd.f32 %v1316, %v1817
        %v1878 = vadd.f32 %v1321, %v1822
        %v1879 = vadd.f32 %v1324, %v1825
        %v1880 = vadd.f32 %v1329, %v1830
        %v1881 = vadd.f32 %v1332, %v1833
        %v1882 = vadd.f32 %v1337, %v1838
        %v1883 = vadd.f32 %v1340, %v1841
        %v1884 = vadd.f32 %v1345, %v1846
        %v1885 = vadd.f32 %v1348, %v1849
        %v1886 = vadd.f32 %v1353, %v1854
        %v1887 = vadd.f32 %v1356, %v1857
        %s1888 = scalar_lea.vmem %s381, 24 [#allocation2]
        %v1889 = vld [vmem:[%s1888] sm:$0xff]
        %v1890 = vld [vmem:[%s1888 + $0x8] sm:$0xff]
        %v1891 = vld [vmem:[%s1888 + $0x10] sm:$0xff]
        %v1892 = vld [vmem:[%s1888 + $0x18] sm:$0xff]
        %v1893 = vld [vmem:[%s1888 + $0x20] sm:$0xff]
        %v1894 = vld [vmem:[%s1888 + $0x28] sm:$0xff]
        %v1895 = vld [vmem:[%s1888 + $0x30] sm:$0xff]
        %v1896 = vld [vmem:[%s1888 + $0x38] sm:$0xff]
        %v1897 = vld [vmem:[%s1888 + $0x40] sm:$0xff]
        %v1898 = vld [vmem:[%s1888 + $0x48] sm:$0xff]
        %v1899 = vld [vmem:[%s1888 + $0x50] sm:$0xff]
        %v1900 = vld [vmem:[%s1888 + $0x58] sm:$0xff]
        %v1901 = vld [vmem:[%s1888 + $0x60] sm:$0xff]
        %v1902 = vld [vmem:[%s1888 + $0x68] sm:$0xff]
        %v1903 = vld [vmem:[%s1888 + $0x70] sm:$0xff]
        %v1904 = vld [vmem:[%s1888 + $0x78] sm:$0xff]
        %v1905 = vld [vmem:[%s1888 + $0x80] sm:$0xff]
        %v1906 = vld [vmem:[%s1888 + $0x88] sm:$0xff]
        %v1907 = vld [vmem:[%s1888 + $0x90] sm:$0xff]
        %v1908 = vld [vmem:[%s1888 + $0x98] sm:$0xff]
        %v1909 = vld [vmem:[%s1888 + $0xa0] sm:$0xff]
        %v1910 = vld [vmem:[%s1888 + $0xa8] sm:$0xff]
        %v1911 = vld [vmem:[%s1888 + $0xb0] sm:$0xff]
        %v1912 = vld [vmem:[%s1888 + $0xb8] sm:$0xff]
        %v1913 = vld [vmem:[%s1888 + $0xc0] sm:$0xff]
        %v1914 = vld [vmem:[%s1888 + $0xc8] sm:$0xff]
        %v1915 = vld [vmem:[%s1888 + $0xd0] sm:$0xff]
        %v1916 = vld [vmem:[%s1888 + $0xd8] sm:$0xff]
        %v1917 = vpack.c.bf16 %v1890, %v1889
        %v1918 = vpack.c.bf16 %v1892, %v1891
        %v1919 = vpack.c.bf16 %v1894, %v1893
        %v1920 = vpack.c.bf16 %v1896, %v1895
        %v1921 = vpack.c.bf16 %v1898, %v1897
        %v1922 = vpack.c.bf16 %v1900, %v1899
        %v1923 = vpack.c.bf16 %v1902, %v1901
        %v1924 = vpack.c.bf16 %v1904, %v1903
        %v1925 = vpack.c.bf16 %v1906, %v1905
        %v1926 = vpack.c.bf16 %v1908, %v1907
        %v1927 = vpack.c.bf16 %v1910, %v1909
        %v1928 = vpack.c.bf16 %v1912, %v1911
        %v1929 = vpack.c.bf16 %v1914, %v1913
        %v1930 = vpack.c.bf16 %v1916, %v1915
        %s1931 = scalar_lea.vmem %s1, 288
        %v1932 = vld [vmem:[%s1931] sm:$0xf]
        %v1933 = vld [vmem:[%s1931 + $0x4] sm:$0xf]
        %v1934 = vld [vmem:[%s1931 + $0x8] sm:$0xf]
        %v1935 = vld [vmem:[%s1931 + $0xc] sm:$0xf]
        %v1936 = vld [vmem:[%s1931 + $0x10] sm:$0xf]
        %v1937 = vld [vmem:[%s1931 + $0x14] sm:$0xf]
        %v1938 = vld [vmem:[%s1931 + $0x18] sm:$0xf]
        %v1939 = vld [vmem:[%s1931 + $0x1c] sm:$0xf]
        %v1940 = vld [vmem:[%s1931 + $0x20] sm:$0xf]
        %v1941 = vld [vmem:[%s1931 + $0x24] sm:$0xf]
        %v1942 = vld [vmem:[%s1931 + $0x28] sm:$0xf]
        %v1943 = vld [vmem:[%s1931 + $0x2c] sm:$0xf]
        %v1956 = vunpack.c.l.b16 %v1932
        %v1957 = vunpack.c.l.b16 %v1933
        %v1958 = vunpack.c.l.b16 %v1934
        %v1959 = vunpack.c.l.b16 %v1935
        %v1960 = vunpack.c.l.b16 %v1936
        %v1961 = vunpack.c.l.b16 %v1937
        %v1962 = vunpack.c.l.b16 %v1938
        %v1963 = vunpack.c.l.b16 %v1939
        %v1964 = vunpack.c.l.b16 %v1940
        %v1965 = vunpack.c.l.b16 %v1941
        %v1966 = vunpack.c.l.b16 %v1942
        %v1967 = vunpack.c.l.b16 %v1943
        %v1968 = vpack.c.b16 %v1957, %v1956
        %v1969 = vpack.c.b16 %v1959, %v1958
        %v1970 = vpack.c.b16 %v1961, %v1960
        %v1971 = vpack.c.b16 %v1963, %v1962
        %v1972 = vpack.c.b16 %v1965, %v1964
        %v1973 = vpack.c.b16 %v1967, %v1966
        %v1981 = vsel %vm573, %v1917, 0
        %v1984 = vsel %vm573, %v1918, 0
        %v1987 = vsel %vm573, %v1919, 0
        %v1990 = vsel %vm573, %v1920, 0
        %v1993 = vsel %vm573, %v1921, 0
        %v1996 = vsel %vm573, %v1922, 0
        %v1999 = vsel %vm573, %v1923, 0
        %v2002 = vsel %vm573, %v1924, 0
        %v2005 = vsel %vm573, %v1925, 0
        %v2008 = vsel %vm573, %v1926, 0
        %v2011 = vsel %vm573, %v1927, 0
        %v2014 = vsel %vm573, %v1928, 0
        %v2017 = vsel %vm573, %v1929, 0
        %v2020 = vsel %vm573, %v1930, 0
        %2022 = vmatprep.subr.bf16.mxu0 0
        %2023 = vmatpush1.bf16.msra.mxu0 %v1968
        %2024 = vmatprep.subr.bf16.mxu0 0
        %2025 = vmatpush1.bf16.msra.mxu0 %v1969
        %2026 = vmatprep.subr.bf16.mxu0 0
        %2027 = vmatpush1.bf16.msra.mxu0 %v1970
        %2028 = vmatprep.subr.bf16.mxu0 0
        %2029 = vmatpush1.bf16.msra.mxu0 %v1971
        %2030 = vmatprep.subr.bf16.mxu0 0
        %2031 = vmatpush1.bf16.msra.mxu0 %v1972
        %2032 = vmatprep.subr.bf16.mxu0 0
        %2033 = vmatpush1.bf16.msra.mxu0 %v1973
        %2034 = vmatprep.subr.bf16.mxu0 0
        %2035 = vmatpush1.bf16.msra.mxu0 0
        %2036 = vmatprep.subr.bf16.mxu0 0
        %2037 = vmatpush1.bf16.msra.mxu0 0
        %2038 = vmatprep.subr.bf16.mxu0 0
        %2039 = vmatpush1.bf16.msra.mxu0 0
        %2040 = vmatprep.subr.bf16.mxu0 0
        %2041 = vmatpush1.bf16.msra.mxu0 0
        %2042 = vmatprep.subr.bf16.mxu0 0
        %2043 = vmatpush1.bf16.msra.mxu0 0
        %2044 = vmatprep.subr.bf16.mxu0 0
        %2045 = vmatpush1.bf16.msra.mxu0 0
        %2046 = vmatprep.subr.bf16.mxu0 0
        %2047 = vmatpush1.bf16.msra.mxu0 0
        %2048 = vmatprep.subr.bf16.mxu0 0
        %2049 = vmatpush1.bf16.msra.mxu0 0
        %2050 = vmatprep.subr.bf16.mxu0 0
        %2051 = vmatpush1.bf16.msra.mxu0 0
        %2052 = vmatprep.subr.bf16.mxu0 0
        %2053 = vmatpush1.bf16.msra.mxu0 0
        %2054 = vmatprep.mubr.bf16.mxu0 0
        %2055 = vmatmul.mubr.bf16.gmra.mrb[0].mxu0 %v1981
        %v2056 = vpop.f32.mrb[0].mxu0
        %v2057 = vadd.f32 0.0, %v2056
        %v2058 = vpop.f32.mrb[0].mxu0
        %v2059 = vpop.f32.mrb[0].mxu0
        %v2060 = vadd.f32 0.0, %v2059
        %v2061 = vpop.f32.mrb[0].mxu0
        %2062 = vmatprep.mubr.bf16.mxu0 0
        %2063 = vmatmul.mubr.bf16.gmra.mrb[0].mxu0 %v1984
        %v2064 = vpop.f32.mrb[0].mxu0
        %v2065 = vadd.f32 0.0, %v2064
        %v2066 = vpop.f32.mrb[0].mxu0
        %v2067 = vpop.f32.mrb[0].mxu0
        %v2068 = vadd.f32 0.0, %v2067
        %v2069 = vpop.f32.mrb[0].mxu0
        %2070 = vmatprep.mubr.bf16.mxu0 0
        %2071 = vmatmul.mubr.bf16.gmra.mrb[0].mxu0 %v1987
        %v2072 = vpop.f32.mrb[0].mxu0
        %v2073 = vadd.f32 0.0, %v2072
        %v2074 = vpop.f32.mrb[0].mxu0
        %v2075 = vpop.f32.mrb[0].mxu0
        %v2076 = vadd.f32 0.0, %v2075
        %v2077 = vpop.f32.mrb[0].mxu0
        %2078 = vmatprep.mubr.bf16.mxu0 0
        %2079 = vmatmul.mubr.bf16.gmra.mrb[0].mxu0 %v1990
        %v2080 = vpop.f32.mrb[0].mxu0
        %v2081 = vadd.f32 0.0, %v2080
        %v2082 = vpop.f32.mrb[0].mxu0
        %v2083 = vpop.f32.mrb[0].mxu0
        %v2084 = vadd.f32 0.0, %v2083
        %v2085 = vpop.f32.mrb[0].mxu0
        %2086 = vmatprep.mubr.bf16.mxu0 0
        %2087 = vmatmul.mubr.bf16.gmra.mrb[0].mxu0 %v1993
        %v2088 = vpop.f32.mrb[0].mxu0
        %v2089 = vadd.f32 0.0, %v2088
        %v2090 = vpop.f32.mrb[0].mxu0
        %v2091 = vpop.f32.mrb[0].mxu0
        %v2092 = vadd.f32 0.0, %v2091
        %v2093 = vpop.f32.mrb[0].mxu0
        %2094 = vmatprep.mubr.bf16.mxu0 0
        %2095 = vmatmul.mubr.bf16.gmra.mrb[0].mxu0 %v1996
        %v2096 = vpop.f32.mrb[0].mxu0
        %v2097 = vadd.f32 0.0, %v2096
        %v2098 = vpop.f32.mrb[0].mxu0
        %v2099 = vpop.f32.mrb[0].mxu0
        %v2100 = vadd.f32 0.0, %v2099
        %v2101 = vpop.f32.mrb[0].mxu0
        %2102 = vmatprep.mubr.bf16.mxu0 0
        %2103 = vmatmul.mubr.bf16.gmra.mrb[0].mxu0 %v1999
        %v2104 = vpop.f32.mrb[0].mxu0
        %v2105 = vadd.f32 0.0, %v2104
        %v2106 = vpop.f32.mrb[0].mxu0
        %v2107 = vpop.f32.mrb[0].mxu0
        %v2108 = vadd.f32 0.0, %v2107
        %v2109 = vpop.f32.mrb[0].mxu0
        %2110 = vmatprep.mubr.bf16.mxu0 0
        %2111 = vmatmul.mubr.bf16.gmra.mrb[0].mxu0 %v2002
        %v2112 = vpop.f32.mrb[0].mxu0
        %v2113 = vadd.f32 0.0, %v2112
        %v2114 = vpop.f32.mrb[0].mxu0
        %v2115 = vpop.f32.mrb[0].mxu0
        %v2116 = vadd.f32 0.0, %v2115
        %v2117 = vpop.f32.mrb[0].mxu0
        %2118 = vmatprep.mubr.bf16.mxu0 0
        %2119 = vmatmul.mubr.bf16.gmra.mrb[0].mxu0 %v2005
        %v2120 = vpop.f32.mrb[0].mxu0
        %v2121 = vadd.f32 0.0, %v2120
        %v2122 = vpop.f32.mrb[0].mxu0
        %v2123 = vpop.f32.mrb[0].mxu0
        %v2124 = vadd.f32 0.0, %v2123
        %v2125 = vpop.f32.mrb[0].mxu0
        %2126 = vmatprep.mubr.bf16.mxu0 0
        %2127 = vmatmul.mubr.bf16.gmra.mrb[0].mxu0 %v2008
        %v2128 = vpop.f32.mrb[0].mxu0
        %v2129 = vadd.f32 0.0, %v2128
        %v2130 = vpop.f32.mrb[0].mxu0
        %v2131 = vpop.f32.mrb[0].mxu0
        %v2132 = vadd.f32 0.0, %v2131
        %v2133 = vpop.f32.mrb[0].mxu0
        %2134 = vmatprep.mubr.bf16.mxu0 0
        %2135 = vmatmul.mubr.bf16.gmra.mrb[0].mxu0 %v2011
        %v2136 = vpop.f32.mrb[0].mxu0
        %v2137 = vadd.f32 0.0, %v2136
        %v2138 = vpop.f32.mrb[0].mxu0
        %v2139 = vpop.f32.mrb[0].mxu0
        %v2140 = vadd.f32 0.0, %v2139
        %v2141 = vpop.f32.mrb[0].mxu0
        %2142 = vmatprep.mubr.bf16.mxu0 0
        %2143 = vmatmul.mubr.bf16.gmra.mrb[0].mxu0 %v2014
        %v2144 = vpop.f32.mrb[0].mxu0
        %v2145 = vadd.f32 0.0, %v2144
        %v2146 = vpop.f32.mrb[0].mxu0
        %v2147 = vpop.f32.mrb[0].mxu0
        %v2148 = vadd.f32 0.0, %v2147
        %v2149 = vpop.f32.mrb[0].mxu0
        %2150 = vmatprep.mubr.bf16.mxu0 0
        %2151 = vmatmul.mubr.bf16.gmra.mrb[0].mxu0 %v2017
        %v2152 = vpop.f32.mrb[0].mxu0
        %v2153 = vadd.f32 0.0, %v2152
        %v2154 = vpop.f32.mrb[0].mxu0
        %v2155 = vpop.f32.mrb[0].mxu0
        %v2156 = vadd.f32 0.0, %v2155
        %v2157 = vpop.f32.mrb[0].mxu0
        %2158 = vmatprep.mubr.bf16.mxu0 0
        %2159 = vmatmul.mubr.bf16.gmra.mrb[0].mxu0 %v2020
        %v2160 = vpop.f32.mrb[0].mxu0
        %v2161 = vadd.f32 0.0, %v2160
        %v2162 = vpop.f32.mrb[0].mxu0
        %v2163 = vpop.f32.mrb[0].mxu0
        %v2164 = vadd.f32 0.0, %v2163
        %v2165 = vpop.f32.mrb[0].mxu0
        %2166 = vdwg.mxu0
        %v2167 = vadd.f32 %v1638, %v2057
        %v2168 = vadd.f32 %v1639, %v2060
        %v2169 = vadd.f32 %v1640, %v2065
        %v2170 = vadd.f32 %v1641, %v2068
        %v2171 = vadd.f32 %v1642, %v2073
        %v2172 = vadd.f32 %v1643, %v2076
        %v2173 = vadd.f32 %v1644, %v2081
        %v2174 = vadd.f32 %v1645, %v2084
        %v2175 = vadd.f32 %v1646, %v2089
        %v2176 = vadd.f32 %v1647, %v2092
        %v2177 = vadd.f32 %v1648, %v2097
        %v2178 = vadd.f32 %v1649, %v2100
        %v2179 = vadd.f32 %v1650, %v2105
        %v2180 = vadd.f32 %v1651, %v2108
        %v2181 = vadd.f32 %v1652, %v2113
        %v2182 = vadd.f32 %v1653, %v2116
        %v2183 = vadd.f32 %v1654, %v2121
        %v2184 = vadd.f32 %v1655, %v2124
        %v2185 = vadd.f32 %v1656, %v2129
        %v2186 = vadd.f32 %v1657, %v2132
        %v2187 = vadd.f32 %v1658, %v2137
        %v2188 = vadd.f32 %v1659, %v2140
        %v2189 = vadd.f32 %v1660, %v2145
        %v2190 = vadd.f32 %v1661, %v2148
        %v2191 = vadd.f32 %v1662, %v2153
        %v2192 = vadd.f32 %v1663, %v2156
        %v2193 = vadd.f32 %v1664, %v2161
        %v2194 = vadd.f32 %v1665, %v2164
        %s2195 = scalar_lea.vmem %s1, 336
        %v2196 = vld [vmem:[%s2195] sm:$0xf]
        %v2197 = vld [vmem:[%s2195 + $0x4] sm:$0xf]
        %v2198 = vld [vmem:[%s2195 + $0x8] sm:$0xf]
        %v2199 = vld [vmem:[%s2195 + $0xc] sm:$0xf]
        %v2200 = vld [vmem:[%s2195 + $0x10] sm:$0xf]
        %v2201 = vld [vmem:[%s2195 + $0x14] sm:$0xf]
        %v2202 = vld [vmem:[%s2195 + $0x18] sm:$0xf]
        %v2203 = vld [vmem:[%s2195 + $0x1c] sm:$0xf]
        %v2204 = vld [vmem:[%s2195 + $0x20] sm:$0xf]
        %v2205 = vld [vmem:[%s2195 + $0x24] sm:$0xf]
        %v2206 = vld [vmem:[%s2195 + $0x28] sm:$0xf]
        %v2207 = vld [vmem:[%s2195 + $0x2c] sm:$0xf]
        %v2220 = vunpack.c.l.b16 %v2196
        %v2221 = vunpack.c.l.b16 %v2197
        %v2222 = vunpack.c.l.b16 %v2198
        %v2223 = vunpack.c.l.b16 %v2199
        %v2224 = vunpack.c.l.b16 %v2200
        %v2225 = vunpack.c.l.b16 %v2201
        %v2226 = vunpack.c.l.b16 %v2202
        %v2227 = vunpack.c.l.b16 %v2203
        %v2228 = vunpack.c.l.b16 %v2204
        %v2229 = vunpack.c.l.b16 %v2205
        %v2230 = vunpack.c.l.b16 %v2206
        %v2231 = vunpack.c.l.b16 %v2207
        %v2232 = vpack.c.b16 %v2221, %v2220
        %v2233 = vpack.c.b16 %v2223, %v2222
        %v2234 = vpack.c.b16 %v2225, %v2224
        %v2235 = vpack.c.b16 %v2227, %v2226
        %v2236 = vpack.c.b16 %v2229, %v2228
        %v2237 = vpack.c.b16 %v2231, %v2230
        %2244 = vmatprep.subr.bf16.mxu0 0
        %2245 = vmatpush1.bf16.msra.mxu0 %v2232
        %2246 = vmatprep.subr.bf16.mxu0 0
        %2247 = vmatpush1.bf16.msra.mxu0 %v2233
        %2248 = vmatprep.subr.bf16.mxu0 0
        %2249 = vmatpush1.bf16.msra.mxu0 %v2234
        %2250 = vmatprep.subr.bf16.mxu0 0
        %2251 = vmatpush1.bf16.msra.mxu0 %v2235
        %2252 = vmatprep.subr.bf16.mxu0 0
        %2253 = vmatpush1.bf16.msra.mxu0 %v2236
        %2254 = vmatprep.subr.bf16.mxu0 0
        %2255 = vmatpush1.bf16.msra.mxu0 %v2237
        %2256 = vmatprep.subr.bf16.mxu0 0
        %2257 = vmatpush1.bf16.msra.mxu0 0
        %2258 = vmatprep.subr.bf16.mxu0 0
        %2259 = vmatpush1.bf16.msra.mxu0 0
        %2260 = vmatprep.subr.bf16.mxu0 0
        %2261 = vmatpush1.bf16.msra.mxu0 0
        %2262 = vmatprep.subr.bf16.mxu0 0
        %2263 = vmatpush1.bf16.msra.mxu0 0
        %2264 = vmatprep.subr.bf16.mxu0 0
        %2265 = vmatpush1.bf16.msra.mxu0 0
        %2266 = vmatprep.subr.bf16.mxu0 0
        %2267 = vmatpush1.bf16.msra.mxu0 0
        %2268 = vmatprep.subr.bf16.mxu0 0
        %2269 = vmatpush1.bf16.msra.mxu0 0
        %2270 = vmatprep.subr.bf16.mxu0 0
        %2271 = vmatpush1.bf16.msra.mxu0 0
        %2272 = vmatprep.subr.bf16.mxu0 0
        %2273 = vmatpush1.bf16.msra.mxu0 0
        %2274 = vmatprep.subr.bf16.mxu0 0
        %2275 = vmatpush1.bf16.msra.mxu0 0
        %2276 = vmatprep.mubr.bf16.mxu0 0
        %2277 = vmatmul.mubr.bf16.gmra.mrb[0].mxu0 %v1981
        %v2278 = vpop.f32.mrb[0].mxu0
        %v2279 = vadd.f32 0.0, %v2278
        %v2280 = vpop.f32.mrb[0].mxu0
        %v2281 = vpop.f32.mrb[0].mxu0
        %v2282 = vadd.f32 0.0, %v2281
        %v2283 = vpop.f32.mrb[0].mxu0
        %2284 = vmatprep.mubr.bf16.mxu0 0
        %2285 = vmatmul.mubr.bf16.gmra.mrb[0].mxu0 %v1984
        %v2286 = vpop.f32.mrb[0].mxu0
        %v2287 = vadd.f32 0.0, %v2286
        %v2288 = vpop.f32.mrb[0].mxu0
        %v2289 = vpop.f32.mrb[0].mxu0
        %v2290 = vadd.f32 0.0, %v2289
        %v2291 = vpop.f32.mrb[0].mxu0
        %2292 = vmatprep.mubr.bf16.mxu0 0
        %2293 = vmatmul.mubr.bf16.gmra.mrb[0].mxu0 %v1987
        %v2294 = vpop.f32.mrb[0].mxu0
        %v2295 = vadd.f32 0.0, %v2294
        %v2296 = vpop.f32.mrb[0].mxu0
        %v2297 = vpop.f32.mrb[0].mxu0
        %v2298 = vadd.f32 0.0, %v2297
        %v2299 = vpop.f32.mrb[0].mxu0
        %2300 = vmatprep.mubr.bf16.mxu0 0
        %2301 = vmatmul.mubr.bf16.gmra.mrb[0].mxu0 %v1990
        %v2302 = vpop.f32.mrb[0].mxu0
        %v2303 = vadd.f32 0.0, %v2302
        %v2304 = vpop.f32.mrb[0].mxu0
        %v2305 = vpop.f32.mrb[0].mxu0
        %v2306 = vadd.f32 0.0, %v2305
        %v2307 = vpop.f32.mrb[0].mxu0
        %2308 = vmatprep.mubr.bf16.mxu0 0
        %2309 = vmatmul.mubr.bf16.gmra.mrb[0].mxu0 %v1993
        %v2310 = vpop.f32.mrb[0].mxu0
        %v2311 = vadd.f32 0.0, %v2310
        %v2312 = vpop.f32.mrb[0].mxu0
        %v2313 = vpop.f32.mrb[0].mxu0
        %v2314 = vadd.f32 0.0, %v2313
        %v2315 = vpop.f32.mrb[0].mxu0
        %2316 = vmatprep.mubr.bf16.mxu0 0
        %2317 = vmatmul.mubr.bf16.gmra.mrb[0].mxu0 %v1996
        %v2318 = vpop.f32.mrb[0].mxu0
        %v2319 = vadd.f32 0.0, %v2318
        %v2320 = vpop.f32.mrb[0].mxu0
        %v2321 = vpop.f32.mrb[0].mxu0
        %v2322 = vadd.f32 0.0, %v2321
        %v2323 = vpop.f32.mrb[0].mxu0
        %2324 = vmatprep.mubr.bf16.mxu0 0
        %2325 = vmatmul.mubr.bf16.gmra.mrb[0].mxu0 %v1999
        %v2326 = vpop.f32.mrb[0].mxu0
        %v2327 = vadd.f32 0.0, %v2326
        %v2328 = vpop.f32.mrb[0].mxu0
        %v2329 = vpop.f32.mrb[0].mxu0
        %v2330 = vadd.f32 0.0, %v2329
        %v2331 = vpop.f32.mrb[0].mxu0
        %2332 = vmatprep.mubr.bf16.mxu0 0
        %2333 = vmatmul.mubr.bf16.gmra.mrb[0].mxu0 %v2002
        %v2334 = vpop.f32.mrb[0].mxu0
        %v2335 = vadd.f32 0.0, %v2334
        %v2336 = vpop.f32.mrb[0].mxu0
        %v2337 = vpop.f32.mrb[0].mxu0
        %v2338 = vadd.f32 0.0, %v2337
        %v2339 = vpop.f32.mrb[0].mxu0
        %2340 = vmatprep.mubr.bf16.mxu0 0
        %2341 = vmatmul.mubr.bf16.gmra.mrb[0].mxu0 %v2005
        %v2342 = vpop.f32.mrb[0].mxu0
        %v2343 = vadd.f32 0.0, %v2342
        %v2344 = vpop.f32.mrb[0].mxu0
        %v2345 = vpop.f32.mrb[0].mxu0
        %v2346 = vadd.f32 0.0, %v2345
        %v2347 = vpop.f32.mrb[0].mxu0
        %2348 = vmatprep.mubr.bf16.mxu0 0
        %2349 = vmatmul.mubr.bf16.gmra.mrb[0].mxu0 %v2008
        %v2350 = vpop.f32.mrb[0].mxu0
        %v2351 = vadd.f32 0.0, %v2350
        %v2352 = vpop.f32.mrb[0].mxu0
        %v2353 = vpop.f32.mrb[0].mxu0
        %v2354 = vadd.f32 0.0, %v2353
        %v2355 = vpop.f32.mrb[0].mxu0
        %2356 = vmatprep.mubr.bf16.mxu0 0
        %2357 = vmatmul.mubr.bf16.gmra.mrb[0].mxu0 %v2011
        %v2358 = vpop.f32.mrb[0].mxu0
        %v2359 = vadd.f32 0.0, %v2358
        %v2360 = vpop.f32.mrb[0].mxu0
        %v2361 = vpop.f32.mrb[0].mxu0
        %v2362 = vadd.f32 0.0, %v2361
        %v2363 = vpop.f32.mrb[0].mxu0
        %2364 = vmatprep.mubr.bf16.mxu0 0
        %2365 = vmatmul.mubr.bf16.gmra.mrb[0].mxu0 %v2014
        %v2366 = vpop.f32.mrb[0].mxu0
        %v2367 = vadd.f32 0.0, %v2366
        %v2368 = vpop.f32.mrb[0].mxu0
        %v2369 = vpop.f32.mrb[0].mxu0
        %v2370 = vadd.f32 0.0, %v2369
        %v2371 = vpop.f32.mrb[0].mxu0
        %2372 = vmatprep.mubr.bf16.mxu0 0
        %2373 = vmatmul.mubr.bf16.gmra.mrb[0].mxu0 %v2017
        %v2374 = vpop.f32.mrb[0].mxu0
        %v2375 = vadd.f32 0.0, %v2374
        %v2376 = vpop.f32.mrb[0].mxu0
        %v2377 = vpop.f32.mrb[0].mxu0
        %v2378 = vadd.f32 0.0, %v2377
        %v2379 = vpop.f32.mrb[0].mxu0
        %2380 = vmatprep.mubr.bf16.mxu0 0
        %2381 = vmatmul.mubr.bf16.gmra.mrb[0].mxu0 %v2020
        %v2382 = vpop.f32.mrb[0].mxu0
        %v2383 = vadd.f32 0.0, %v2382
        %v2384 = vpop.f32.mrb[0].mxu0
        %v2385 = vpop.f32.mrb[0].mxu0
        %v2386 = vadd.f32 0.0, %v2385
        %v2387 = vpop.f32.mrb[0].mxu0
        %2388 = vdwg.mxu0
        %v2389 = vadd.f32 %v1860, %v2279
        %v2390 = vadd.f32 %v1861, %v2282
        %v2391 = vadd.f32 %v1862, %v2287
        %v2392 = vadd.f32 %v1863, %v2290
        %v2393 = vadd.f32 %v1864, %v2295
        %v2394 = vadd.f32 %v1865, %v2298
        %v2395 = vadd.f32 %v1866, %v2303
        %v2396 = vadd.f32 %v1867, %v2306
        %v2397 = vadd.f32 %v1868, %v2311
        %v2398 = vadd.f32 %v1869, %v2314
        %v2399 = vadd.f32 %v1870, %v2319
        %v2400 = vadd.f32 %v1871, %v2322
        %v2401 = vadd.f32 %v1872, %v2327
        %v2402 = vadd.f32 %v1873, %v2330
        %v2403 = vadd.f32 %v1874, %v2335
        %v2404 = vadd.f32 %v1875, %v2338
        %v2405 = vadd.f32 %v1876, %v2343
        %v2406 = vadd.f32 %v1877, %v2346
        %v2407 = vadd.f32 %v1878, %v2351
        %v2408 = vadd.f32 %v1879, %v2354
        %v2409 = vadd.f32 %v1880, %v2359
        %v2410 = vadd.f32 %v1881, %v2362
        %v2411 = vadd.f32 %v1882, %v2367
        %v2412 = vadd.f32 %v1883, %v2370
        %v2413 = vadd.f32 %v1884, %v2375
        %v2414 = vadd.f32 %v1885, %v2378
        %v2415 = vadd.f32 %v1886, %v2383
        %v2416 = vadd.f32 %v1887, %v2386
        %s2417 = scalar_lea.vmem %s381, 32 [#allocation2]
        %v2418 = vld [vmem:[%s2417] sm:$0xff]
        %v2419 = vld [vmem:[%s2417 + $0x8] sm:$0xff]
        %v2420 = vld [vmem:[%s2417 + $0x10] sm:$0xff]
        %v2421 = vld [vmem:[%s2417 + $0x18] sm:$0xff]
        %v2422 = vld [vmem:[%s2417 + $0x20] sm:$0xff]
        %v2423 = vld [vmem:[%s2417 + $0x28] sm:$0xff]
        %v2424 = vld [vmem:[%s2417 + $0x30] sm:$0xff]
        %v2425 = vld [vmem:[%s2417 + $0x38] sm:$0xff]
        %v2426 = vld [vmem:[%s2417 + $0x40] sm:$0xff]
        %v2427 = vld [vmem:[%s2417 + $0x48] sm:$0xff]
        %v2428 = vld [vmem:[%s2417 + $0x50] sm:$0xff]
        %v2429 = vld [vmem:[%s2417 + $0x58] sm:$0xff]
        %v2430 = vld [vmem:[%s2417 + $0x60] sm:$0xff]
        %v2431 = vld [vmem:[%s2417 + $0x68] sm:$0xff]
        %v2432 = vld [vmem:[%s2417 + $0x70] sm:$0xff]
        %v2433 = vld [vmem:[%s2417 + $0x78] sm:$0xff]
        %v2434 = vld [vmem:[%s2417 + $0x80] sm:$0xff]
        %v2435 = vld [vmem:[%s2417 + $0x88] sm:$0xff]
        %v2436 = vld [vmem:[%s2417 + $0x90] sm:$0xff]
        %v2437 = vld [vmem:[%s2417 + $0x98] sm:$0xff]
        %v2438 = vld [vmem:[%s2417 + $0xa0] sm:$0xff]
        %v2439 = vld [vmem:[%s2417 + $0xa8] sm:$0xff]
        %v2440 = vld [vmem:[%s2417 + $0xb0] sm:$0xff]
        %v2441 = vld [vmem:[%s2417 + $0xb8] sm:$0xff]
        %v2442 = vld [vmem:[%s2417 + $0xc0] sm:$0xff]
        %v2443 = vld [vmem:[%s2417 + $0xc8] sm:$0xff]
        %v2444 = vld [vmem:[%s2417 + $0xd0] sm:$0xff]
        %v2445 = vld [vmem:[%s2417 + $0xd8] sm:$0xff]
        %v2446 = vpack.c.bf16 %v2419, %v2418
        %v2447 = vpack.c.bf16 %v2421, %v2420
        %v2448 = vpack.c.bf16 %v2423, %v2422
        %v2449 = vpack.c.bf16 %v2425, %v2424
        %v2450 = vpack.c.bf16 %v2427, %v2426
        %v2451 = vpack.c.bf16 %v2429, %v2428
        %v2452 = vpack.c.bf16 %v2431, %v2430
        %v2453 = vpack.c.bf16 %v2433, %v2432
        %v2454 = vpack.c.bf16 %v2435, %v2434
        %v2455 = vpack.c.bf16 %v2437, %v2436
        %v2456 = vpack.c.bf16 %v2439, %v2438
        %v2457 = vpack.c.bf16 %v2441, %v2440
        %v2458 = vpack.c.bf16 %v2443, %v2442
        %v2459 = vpack.c.bf16 %v2445, %v2444
        %s2460 = scalar_lea.vmem %s1, 384
        %v2461 = vld [vmem:[%s2460] sm:$0xf]
        %v2462 = vld [vmem:[%s2460 + $0x4] sm:$0xf]
        %v2463 = vld [vmem:[%s2460 + $0x8] sm:$0xf]
        %v2464 = vld [vmem:[%s2460 + $0xc] sm:$0xf]
        %v2465 = vld [vmem:[%s2460 + $0x10] sm:$0xf]
        %v2466 = vld [vmem:[%s2460 + $0x14] sm:$0xf]
        %v2467 = vld [vmem:[%s2460 + $0x18] sm:$0xf]
        %v2468 = vld [vmem:[%s2460 + $0x1c] sm:$0xf]
        %v2469 = vld [vmem:[%s2460 + $0x20] sm:$0xf]
        %v2470 = vld [vmem:[%s2460 + $0x24] sm:$0xf]
        %v2471 = vld [vmem:[%s2460 + $0x28] sm:$0xf]
        %v2472 = vld [vmem:[%s2460 + $0x2c] sm:$0xf]
        %v2485 = vunpack.c.l.b16 %v2461
        %v2486 = vunpack.c.l.b16 %v2462
        %v2487 = vunpack.c.l.b16 %v2463
        %v2488 = vunpack.c.l.b16 %v2464
        %v2489 = vunpack.c.l.b16 %v2465
        %v2490 = vunpack.c.l.b16 %v2466
        %v2491 = vunpack.c.l.b16 %v2467
        %v2492 = vunpack.c.l.b16 %v2468
        %v2493 = vunpack.c.l.b16 %v2469
        %v2494 = vunpack.c.l.b16 %v2470
        %v2495 = vunpack.c.l.b16 %v2471
        %v2496 = vunpack.c.l.b16 %v2472
        %v2497 = vpack.c.b16 %v2486, %v2485
        %v2498 = vpack.c.b16 %v2488, %v2487
        %v2499 = vpack.c.b16 %v2490, %v2489
        %v2500 = vpack.c.b16 %v2492, %v2491
        %v2501 = vpack.c.b16 %v2494, %v2493
        %v2502 = vpack.c.b16 %v2496, %v2495
        %v2510 = vsel %vm573, %v2446, 0
        %v2513 = vsel %vm573, %v2447, 0
        %v2516 = vsel %vm573, %v2448, 0
        %v2519 = vsel %vm573, %v2449, 0
        %v2522 = vsel %vm573, %v2450, 0
        %v2525 = vsel %vm573, %v2451, 0
        %v2528 = vsel %vm573, %v2452, 0
        %v2531 = vsel %vm573, %v2453, 0
        %v2534 = vsel %vm573, %v2454, 0
        %v2537 = vsel %vm573, %v2455, 0
        %v2540 = vsel %vm573, %v2456, 0
        %v2543 = vsel %vm573, %v2457, 0
        %v2546 = vsel %vm573, %v2458, 0
        %v2549 = vsel %vm573, %v2459, 0
        %2551 = vmatprep.subr.bf16.mxu0 0
        %2552 = vmatpush1.bf16.msra.mxu0 %v2497
        %2553 = vmatprep.subr.bf16.mxu0 0
        %2554 = vmatpush1.bf16.msra.mxu0 %v2498
        %2555 = vmatprep.subr.bf16.mxu0 0
        %2556 = vmatpush1.bf16.msra.mxu0 %v2499
        %2557 = vmatprep.subr.bf16.mxu0 0
        %2558 = vmatpush1.bf16.msra.mxu0 %v2500
        %2559 = vmatprep.subr.bf16.mxu0 0
        %2560 = vmatpush1.bf16.msra.mxu0 %v2501
        %2561 = vmatprep.subr.bf16.mxu0 0
        %2562 = vmatpush1.bf16.msra.mxu0 %v2502
        %2563 = vmatprep.subr.bf16.mxu0 0
        %2564 = vmatpush1.bf16.msra.mxu0 0
        %2565 = vmatprep.subr.bf16.mxu0 0
        %2566 = vmatpush1.bf16.msra.mxu0 0
        %2567 = vmatprep.subr.bf16.mxu0 0
        %2568 = vmatpush1.bf16.msra.mxu0 0
        %2569 = vmatprep.subr.bf16.mxu0 0
        %2570 = vmatpush1.bf16.msra.mxu0 0
        %2571 = vmatprep.subr.bf16.mxu0 0
        %2572 = vmatpush1.bf16.msra.mxu0 0
        %2573 = vmatprep.subr.bf16.mxu0 0
        %2574 = vmatpush1.bf16.msra.mxu0 0
        %2575 = vmatprep.subr.bf16.mxu0 0
        %2576 = vmatpush1.bf16.msra.mxu0 0
        %2577 = vmatprep.subr.bf16.mxu0 0
        %2578 = vmatpush1.bf16.msra.mxu0 0
        %2579 = vmatprep.subr.bf16.mxu0 0
        %2580 = vmatpush1.bf16.msra.mxu0 0
        %2581 = vmatprep.subr.bf16.mxu0 0
        %2582 = vmatpush1.bf16.msra.mxu0 0
        %2583 = vmatprep.mubr.bf16.mxu0 0
        %2584 = vmatmul.mubr.bf16.gmra.mrb[0].mxu0 %v2510
        %v2585 = vpop.f32.mrb[0].mxu0
        %v2586 = vadd.f32 0.0, %v2585
        %v2587 = vpop.f32.mrb[0].mxu0
        %v2588 = vpop.f32.mrb[0].mxu0
        %v2589 = vadd.f32 0.0, %v2588
        %v2590 = vpop.f32.mrb[0].mxu0
        %2591 = vmatprep.mubr.bf16.mxu0 0
        %2592 = vmatmul.mubr.bf16.gmra.mrb[0].mxu0 %v2513
        %v2593 = vpop.f32.mrb[0].mxu0
        %v2594 = vadd.f32 0.0, %v2593
        %v2595 = vpop.f32.mrb[0].mxu0
        %v2596 = vpop.f32.mrb[0].mxu0
        %v2597 = vadd.f32 0.0, %v2596
        %v2598 = vpop.f32.mrb[0].mxu0
        %2599 = vmatprep.mubr.bf16.mxu0 0
        %2600 = vmatmul.mubr.bf16.gmra.mrb[0].mxu0 %v2516
        %v2601 = vpop.f32.mrb[0].mxu0
        %v2602 = vadd.f32 0.0, %v2601
        %v2603 = vpop.f32.mrb[0].mxu0
        %v2604 = vpop.f32.mrb[0].mxu0
        %v2605 = vadd.f32 0.0, %v2604
        %v2606 = vpop.f32.mrb[0].mxu0
        %2607 = vmatprep.mubr.bf16.mxu0 0
        %2608 = vmatmul.mubr.bf16.gmra.mrb[0].mxu0 %v2519
        %v2609 = vpop.f32.mrb[0].mxu0
        %v2610 = vadd.f32 0.0, %v2609
        %v2611 = vpop.f32.mrb[0].mxu0
        %v2612 = vpop.f32.mrb[0].mxu0
        %v2613 = vadd.f32 0.0, %v2612
        %v2614 = vpop.f32.mrb[0].mxu0
        %2615 = vmatprep.mubr.bf16.mxu0 0
        %2616 = vmatmul.mubr.bf16.gmra.mrb[0].mxu0 %v2522
        %v2617 = vpop.f32.mrb[0].mxu0
        %v2618 = vadd.f32 0.0, %v2617
        %v2619 = vpop.f32.mrb[0].mxu0
        %v2620 = vpop.f32.mrb[0].mxu0
        %v2621 = vadd.f32 0.0, %v2620
        %v2622 = vpop.f32.mrb[0].mxu0
        %2623 = vmatprep.mubr.bf16.mxu0 0
        %2624 = vmatmul.mubr.bf16.gmra.mrb[0].mxu0 %v2525
        %v2625 = vpop.f32.mrb[0].mxu0
        %v2626 = vadd.f32 0.0, %v2625
        %v2627 = vpop.f32.mrb[0].mxu0
        %v2628 = vpop.f32.mrb[0].mxu0
        %v2629 = vadd.f32 0.0, %v2628
        %v2630 = vpop.f32.mrb[0].mxu0
        %2631 = vmatprep.mubr.bf16.mxu0 0
        %2632 = vmatmul.mubr.bf16.gmra.mrb[0].mxu0 %v2528
        %v2633 = vpop.f32.mrb[0].mxu0
        %v2634 = vadd.f32 0.0, %v2633
        %v2635 = vpop.f32.mrb[0].mxu0
        %v2636 = vpop.f32.mrb[0].mxu0
        %v2637 = vadd.f32 0.0, %v2636
        %v2638 = vpop.f32.mrb[0].mxu0
        %2639 = vmatprep.mubr.bf16.mxu0 0
        %2640 = vmatmul.mubr.bf16.gmra.mrb[0].mxu0 %v2531
        %v2641 = vpop.f32.mrb[0].mxu0
        %v2642 = vadd.f32 0.0, %v2641
        %v2643 = vpop.f32.mrb[0].mxu0
        %v2644 = vpop.f32.mrb[0].mxu0
        %v2645 = vadd.f32 0.0, %v2644
        %v2646 = vpop.f32.mrb[0].mxu0
        %2647 = vmatprep.mubr.bf16.mxu0 0
        %2648 = vmatmul.mubr.bf16.gmra.mrb[0].mxu0 %v2534
        %v2649 = vpop.f32.mrb[0].mxu0
        %v2650 = vadd.f32 0.0, %v2649
        %v2651 = vpop.f32.mrb[0].mxu0
        %v2652 = vpop.f32.mrb[0].mxu0
        %v2653 = vadd.f32 0.0, %v2652
        %v2654 = vpop.f32.mrb[0].mxu0
        %2655 = vmatprep.mubr.bf16.mxu0 0
        %2656 = vmatmul.mubr.bf16.gmra.mrb[0].mxu0 %v2537
        %v2657 = vpop.f32.mrb[0].mxu0
        %v2658 = vadd.f32 0.0, %v2657
        %v2659 = vpop.f32.mrb[0].mxu0
        %v2660 = vpop.f32.mrb[0].mxu0
        %v2661 = vadd.f32 0.0, %v2660
        %v2662 = vpop.f32.mrb[0].mxu0
        %2663 = vmatprep.mubr.bf16.mxu0 0
        %2664 = vmatmul.mubr.bf16.gmra.mrb[0].mxu0 %v2540
        %v2665 = vpop.f32.mrb[0].mxu0
        %v2666 = vadd.f32 0.0, %v2665
        %v2667 = vpop.f32.mrb[0].mxu0
        %v2668 = vpop.f32.mrb[0].mxu0
        %v2669 = vadd.f32 0.0, %v2668
        %v2670 = vpop.f32.mrb[0].mxu0
        %2671 = vmatprep.mubr.bf16.mxu0 0
        %2672 = vmatmul.mubr.bf16.gmra.mrb[0].mxu0 %v2543
        %v2673 = vpop.f32.mrb[0].mxu0
        %v2674 = vadd.f32 0.0, %v2673
        %v2675 = vpop.f32.mrb[0].mxu0
        %v2676 = vpop.f32.mrb[0].mxu0
        %v2677 = vadd.f32 0.0, %v2676
        %v2678 = vpop.f32.mrb[0].mxu0
        %2679 = vmatprep.mubr.bf16.mxu0 0
        %2680 = vmatmul.mubr.bf16.gmra.mrb[0].mxu0 %v2546
        %v2681 = vpop.f32.mrb[0].mxu0
        %v2682 = vadd.f32 0.0, %v2681
        %v2683 = vpop.f32.mrb[0].mxu0
        %v2684 = vpop.f32.mrb[0].mxu0
        %v2685 = vadd.f32 0.0, %v2684
        %v2686 = vpop.f32.mrb[0].mxu0
        %2687 = vmatprep.mubr.bf16.mxu0 0
        %2688 = vmatmul.mubr.bf16.gmra.mrb[0].mxu0 %v2549
        %v2689 = vpop.f32.mrb[0].mxu0
        %v2690 = vadd.f32 0.0, %v2689
        %v2691 = vpop.f32.mrb[0].mxu0
        %v2692 = vpop.f32.mrb[0].mxu0
        %v2693 = vadd.f32 0.0, %v2692
        %v2694 = vpop.f32.mrb[0].mxu0
        %2695 = vdwg.mxu0
        %v2696 = vadd.f32 %v2167, %v2586
        %v2697 = vadd.f32 %v2168, %v2589
        %v2698 = vadd.f32 %v2169, %v2594
        %v2699 = vadd.f32 %v2170, %v2597
        %v2700 = vadd.f32 %v2171, %v2602
        %v2701 = vadd.f32 %v2172, %v2605
        %v2702 = vadd.f32 %v2173, %v2610
        %v2703 = vadd.f32 %v2174, %v2613
        %v2704 = vadd.f32 %v2175, %v2618
        %v2705 = vadd.f32 %v2176, %v2621
        %v2706 = vadd.f32 %v2177, %v2626
        %v2707 = vadd.f32 %v2178, %v2629
        %v2708 = vadd.f32 %v2179, %v2634
        %v2709 = vadd.f32 %v2180, %v2637
        %v2710 = vadd.f32 %v2181, %v2642
        %v2711 = vadd.f32 %v2182, %v2645
        %v2712 = vadd.f32 %v2183, %v2650
        %v2713 = vadd.f32 %v2184, %v2653
        %v2714 = vadd.f32 %v2185, %v2658
        %v2715 = vadd.f32 %v2186, %v2661
        %v2716 = vadd.f32 %v2187, %v2666
        %v2717 = vadd.f32 %v2188, %v2669
        %v2718 = vadd.f32 %v2189, %v2674
        %v2719 = vadd.f32 %v2190, %v2677
        %v2720 = vadd.f32 %v2191, %v2682
        %v2721 = vadd.f32 %v2192, %v2685
        %v2722 = vadd.f32 %v2193, %v2690
        %v2723 = vadd.f32 %v2194, %v2693
        %s2724 = scalar_lea.vmem %s1, 432
        %v2725 = vld [vmem:[%s2724] sm:$0xf]
        %v2726 = vld [vmem:[%s2724 + $0x4] sm:$0xf]
        %v2727 = vld [vmem:[%s2724 + $0x8] sm:$0xf]
        %v2728 = vld [vmem:[%s2724 + $0xc] sm:$0xf]
        %v2729 = vld [vmem:[%s2724 + $0x10] sm:$0xf]
        %v2730 = vld [vmem:[%s2724 + $0x14] sm:$0xf]
        %v2731 = vld [vmem:[%s2724 + $0x18] sm:$0xf]
        %v2732 = vld [vmem:[%s2724 + $0x1c] sm:$0xf]
        %v2733 = vld [vmem:[%s2724 + $0x20] sm:$0xf]
        %v2734 = vld [vmem:[%s2724 + $0x24] sm:$0xf]
        %v2735 = vld [vmem:[%s2724 + $0x28] sm:$0xf]
        %v2736 = vld [vmem:[%s2724 + $0x2c] sm:$0xf]
        %v2749 = vunpack.c.l.b16 %v2725
        %v2750 = vunpack.c.l.b16 %v2726
        %v2751 = vunpack.c.l.b16 %v2727
        %v2752 = vunpack.c.l.b16 %v2728
        %v2753 = vunpack.c.l.b16 %v2729
        %v2754 = vunpack.c.l.b16 %v2730
        %v2755 = vunpack.c.l.b16 %v2731
        %v2756 = vunpack.c.l.b16 %v2732
        %v2757 = vunpack.c.l.b16 %v2733
        %v2758 = vunpack.c.l.b16 %v2734
        %v2759 = vunpack.c.l.b16 %v2735
        %v2760 = vunpack.c.l.b16 %v2736
        %v2761 = vpack.c.b16 %v2750, %v2749
        %v2762 = vpack.c.b16 %v2752, %v2751
        %v2763 = vpack.c.b16 %v2754, %v2753
        %v2764 = vpack.c.b16 %v2756, %v2755
        %v2765 = vpack.c.b16 %v2758, %v2757
        %v2766 = vpack.c.b16 %v2760, %v2759
        %2773 = vmatprep.subr.bf16.mxu0 0
        %2774 = vmatpush1.bf16.msra.mxu0 %v2761
        %2775 = vmatprep.subr.bf16.mxu0 0
        %2776 = vmatpush1.bf16.msra.mxu0 %v2762
        %2777 = vmatprep.subr.bf16.mxu0 0
        %2778 = vmatpush1.bf16.msra.mxu0 %v2763
        %2779 = vmatprep.subr.bf16.mxu0 0
        %2780 = vmatpush1.bf16.msra.mxu0 %v2764
        %2781 = vmatprep.subr.bf16.mxu0 0
        %2782 = vmatpush1.bf16.msra.mxu0 %v2765
        %2783 = vmatprep.subr.bf16.mxu0 0
        %2784 = vmatpush1.bf16.msra.mxu0 %v2766
        %2785 = vmatprep.subr.bf16.mxu0 0
        %2786 = vmatpush1.bf16.msra.mxu0 0
        %2787 = vmatprep.subr.bf16.mxu0 0
        %2788 = vmatpush1.bf16.msra.mxu0 0
        %2789 = vmatprep.subr.bf16.mxu0 0
        %2790 = vmatpush1.bf16.msra.mxu0 0
        %2791 = vmatprep.subr.bf16.mxu0 0
        %2792 = vmatpush1.bf16.msra.mxu0 0
        %2793 = vmatprep.subr.bf16.mxu0 0
        %2794 = vmatpush1.bf16.msra.mxu0 0
        %2795 = vmatprep.subr.bf16.mxu0 0
        %2796 = vmatpush1.bf16.msra.mxu0 0
        %2797 = vmatprep.subr.bf16.mxu0 0
        %2798 = vmatpush1.bf16.msra.mxu0 0
        %2799 = vmatprep.subr.bf16.mxu0 0
        %2800 = vmatpush1.bf16.msra.mxu0 0
        %2801 = vmatprep.subr.bf16.mxu0 0
        %2802 = vmatpush1.bf16.msra.mxu0 0
        %2803 = vmatprep.subr.bf16.mxu0 0
        %2804 = vmatpush1.bf16.msra.mxu0 0
        %2805 = vmatprep.mubr.bf16.mxu0 0
        %2806 = vmatmul.mubr.bf16.gmra.mrb[0].mxu0 %v2510
        %v2807 = vpop.f32.mrb[0].mxu0
        %v2808 = vadd.f32 0.0, %v2807
        %v2809 = vpop.f32.mrb[0].mxu0
        %v2810 = vpop.f32.mrb[0].mxu0
        %v2811 = vadd.f32 0.0, %v2810
        %v2812 = vpop.f32.mrb[0].mxu0
        %2813 = vmatprep.mubr.bf16.mxu0 0
        %2814 = vmatmul.mubr.bf16.gmra.mrb[0].mxu0 %v2513
        %v2815 = vpop.f32.mrb[0].mxu0
        %v2816 = vadd.f32 0.0, %v2815
        %v2817 = vpop.f32.mrb[0].mxu0
        %v2818 = vpop.f32.mrb[0].mxu0
        %v2819 = vadd.f32 0.0, %v2818
        %v2820 = vpop.f32.mrb[0].mxu0
        %2821 = vmatprep.mubr.bf16.mxu0 0
        %2822 = vmatmul.mubr.bf16.gmra.mrb[0].mxu0 %v2516
        %v2823 = vpop.f32.mrb[0].mxu0
        %v2824 = vadd.f32 0.0, %v2823
        %v2825 = vpop.f32.mrb[0].mxu0
        %v2826 = vpop.f32.mrb[0].mxu0
        %v2827 = vadd.f32 0.0, %v2826
        %v2828 = vpop.f32.mrb[0].mxu0
        %2829 = vmatprep.mubr.bf16.mxu0 0
        %2830 = vmatmul.mubr.bf16.gmra.mrb[0].mxu0 %v2519
        %v2831 = vpop.f32.mrb[0].mxu0
        %v2832 = vadd.f32 0.0, %v2831
        %v2833 = vpop.f32.mrb[0].mxu0
        %v2834 = vpop.f32.mrb[0].mxu0
        %v2835 = vadd.f32 0.0, %v2834
        %v2836 = vpop.f32.mrb[0].mxu0
        %2837 = vmatprep.mubr.bf16.mxu0 0
        %2838 = vmatmul.mubr.bf16.gmra.mrb[0].mxu0 %v2522
        %v2839 = vpop.f32.mrb[0].mxu0
        %v2840 = vadd.f32 0.0, %v2839
        %v2841 = vpop.f32.mrb[0].mxu0
        %v2842 = vpop.f32.mrb[0].mxu0
        %v2843 = vadd.f32 0.0, %v2842
        %v2844 = vpop.f32.mrb[0].mxu0
        %2845 = vmatprep.mubr.bf16.mxu0 0
        %2846 = vmatmul.mubr.bf16.gmra.mrb[0].mxu0 %v2525
        %v2847 = vpop.f32.mrb[0].mxu0
        %v2848 = vadd.f32 0.0, %v2847
        %v2849 = vpop.f32.mrb[0].mxu0
        %v2850 = vpop.f32.mrb[0].mxu0
        %v2851 = vadd.f32 0.0, %v2850
        %v2852 = vpop.f32.mrb[0].mxu0
        %2853 = vmatprep.mubr.bf16.mxu0 0
        %2854 = vmatmul.mubr.bf16.gmra.mrb[0].mxu0 %v2528
        %v2855 = vpop.f32.mrb[0].mxu0
        %v2856 = vadd.f32 0.0, %v2855
        %v2857 = vpop.f32.mrb[0].mxu0
        %v2858 = vpop.f32.mrb[0].mxu0
        %v2859 = vadd.f32 0.0, %v2858
        %v2860 = vpop.f32.mrb[0].mxu0
        %2861 = vmatprep.mubr.bf16.mxu0 0
        %2862 = vmatmul.mubr.bf16.gmra.mrb[0].mxu0 %v2531
        %v2863 = vpop.f32.mrb[0].mxu0
        %v2864 = vadd.f32 0.0, %v2863
        %v2865 = vpop.f32.mrb[0].mxu0
        %v2866 = vpop.f32.mrb[0].mxu0
        %v2867 = vadd.f32 0.0, %v2866
        %v2868 = vpop.f32.mrb[0].mxu0
        %2869 = vmatprep.mubr.bf16.mxu0 0
        %2870 = vmatmul.mubr.bf16.gmra.mrb[0].mxu0 %v2534
        %v2871 = vpop.f32.mrb[0].mxu0
        %v2872 = vadd.f32 0.0, %v2871
        %v2873 = vpop.f32.mrb[0].mxu0
        %v2874 = vpop.f32.mrb[0].mxu0
        %v2875 = vadd.f32 0.0, %v2874
        %v2876 = vpop.f32.mrb[0].mxu0
        %2877 = vmatprep.mubr.bf16.mxu0 0
        %2878 = vmatmul.mubr.bf16.gmra.mrb[0].mxu0 %v2537
        %v2879 = vpop.f32.mrb[0].mxu0
        %v2880 = vadd.f32 0.0, %v2879
        %v2881 = vpop.f32.mrb[0].mxu0
        %v2882 = vpop.f32.mrb[0].mxu0
        %v2883 = vadd.f32 0.0, %v2882
        %v2884 = vpop.f32.mrb[0].mxu0
        %2885 = vmatprep.mubr.bf16.mxu0 0
        %2886 = vmatmul.mubr.bf16.gmra.mrb[0].mxu0 %v2540
        %v2887 = vpop.f32.mrb[0].mxu0
        %v2888 = vadd.f32 0.0, %v2887
        %v2889 = vpop.f32.mrb[0].mxu0
        %v2890 = vpop.f32.mrb[0].mxu0
        %v2891 = vadd.f32 0.0, %v2890
        %v2892 = vpop.f32.mrb[0].mxu0
        %2893 = vmatprep.mubr.bf16.mxu0 0
        %2894 = vmatmul.mubr.bf16.gmra.mrb[0].mxu0 %v2543
        %v2895 = vpop.f32.mrb[0].mxu0
        %v2896 = vadd.f32 0.0, %v2895
        %v2897 = vpop.f32.mrb[0].mxu0
        %v2898 = vpop.f32.mrb[0].mxu0
        %v2899 = vadd.f32 0.0, %v2898
        %v2900 = vpop.f32.mrb[0].mxu0
        %2901 = vmatprep.mubr.bf16.mxu0 0
        %2902 = vmatmul.mubr.bf16.gmra.mrb[0].mxu0 %v2546
        %v2903 = vpop.f32.mrb[0].mxu0
        %v2904 = vadd.f32 0.0, %v2903
        %v2905 = vpop.f32.mrb[0].mxu0
        %v2906 = vpop.f32.mrb[0].mxu0
        %v2907 = vadd.f32 0.0, %v2906
        %v2908 = vpop.f32.mrb[0].mxu0
        %2909 = vmatprep.mubr.bf16.mxu0 0
        %2910 = vmatmul.mubr.bf16.gmra.mrb[0].mxu0 %v2549
        %v2911 = vpop.f32.mrb[0].mxu0
        %v2912 = vadd.f32 0.0, %v2911
        %v2913 = vpop.f32.mrb[0].mxu0
        %v2914 = vpop.f32.mrb[0].mxu0
        %v2915 = vadd.f32 0.0, %v2914
        %v2916 = vpop.f32.mrb[0].mxu0
        %2917 = vdwg.mxu0
        %v2918 = vadd.f32 %v2389, %v2808
        %v2919 = vadd.f32 %v2390, %v2811
        %v2920 = vadd.f32 %v2391, %v2816
        %v2921 = vadd.f32 %v2392, %v2819
        %v2922 = vadd.f32 %v2393, %v2824
        %v2923 = vadd.f32 %v2394, %v2827
        %v2924 = vadd.f32 %v2395, %v2832
        %v2925 = vadd.f32 %v2396, %v2835
        %v2926 = vadd.f32 %v2397, %v2840
        %v2927 = vadd.f32 %v2398, %v2843
        %v2928 = vadd.f32 %v2399, %v2848
        %v2929 = vadd.f32 %v2400, %v2851
        %v2930 = vadd.f32 %v2401, %v2856
        %v2931 = vadd.f32 %v2402, %v2859
        %v2932 = vadd.f32 %v2403, %v2864
        %v2933 = vadd.f32 %v2404, %v2867
        %v2934 = vadd.f32 %v2405, %v2872
        %v2935 = vadd.f32 %v2406, %v2875
        %v2936 = vadd.f32 %v2407, %v2880
        %v2937 = vadd.f32 %v2408, %v2883
        %v2938 = vadd.f32 %v2409, %v2888
        %v2939 = vadd.f32 %v2410, %v2891
        %v2940 = vadd.f32 %v2411, %v2896
        %v2941 = vadd.f32 %v2412, %v2899
        %v2942 = vadd.f32 %v2413, %v2904
        %v2943 = vadd.f32 %v2414, %v2907
        %v2944 = vadd.f32 %v2415, %v2912
        %v2945 = vadd.f32 %v2416, %v2915
        %v2946 = vlaneseq
        %v2947 = vshrl.u32 %v2946, 7
        %v2948 = vsub.s32 0, %v2947
        %v2949 = vrot.slane %v409, %v2948
        %v2950 = vadd.f32 %v2696, %v2949
        %v2951 = vadd.f32 %v2697, %v2949
        %v2952 = vadd.f32 %v2698, %v2949
        %v2953 = vadd.f32 %v2699, %v2949
        %v2954 = vadd.f32 %v2700, %v2949
        %v2955 = vadd.f32 %v2701, %v2949
        %v2956 = vadd.f32 %v2702, %v2949
        %v2957 = vadd.f32 %v2703, %v2949
        %v2958 = vadd.f32 %v2704, %v2949
        %v2959 = vadd.f32 %v2705, %v2949
        %v2960 = vadd.f32 %v2706, %v2949
        %v2961 = vadd.f32 %v2707, %v2949
        %v2962 = vadd.f32 %v2708, %v2949
        %v2963 = vadd.f32 %v2709, %v2949
        %v2964 = vadd.f32 %v2710, %v2949
        %v2965 = vadd.f32 %v2711, %v2949
        %v2966 = vadd.f32 %v2712, %v2949
        %v2967 = vadd.f32 %v2713, %v2949
        %v2968 = vadd.f32 %v2714, %v2949
        %v2969 = vadd.f32 %v2715, %v2949
        %v2970 = vadd.f32 %v2716, %v2949
        %v2971 = vadd.f32 %v2717, %v2949
        %v2972 = vadd.f32 %v2718, %v2949
        %v2973 = vadd.f32 %v2719, %v2949
        %v2974 = vadd.f32 %v2720, %v2949
        %v2975 = vadd.f32 %v2721, %v2949
        %v2976 = vadd.f32 %v2722, %v2949
        %v2977 = vadd.f32 %v2723, %v2949
        %v2978 = vadd.f32 %v2918, %v2949
        %v2979 = vadd.f32 %v2919, %v2949
        %v2980 = vadd.f32 %v2920, %v2949
        %v2981 = vadd.f32 %v2921, %v2949
        %v2982 = vadd.f32 %v2922, %v2949
        %v2983 = vadd.f32 %v2923, %v2949
        %v2984 = vadd.f32 %v2924, %v2949
        %v2985 = vadd.f32 %v2925, %v2949
        %v2986 = vadd.f32 %v2926, %v2949
        %v2987 = vadd.f32 %v2927, %v2949
        %v2988 = vadd.f32 %v2928, %v2949
        %v2989 = vadd.f32 %v2929, %v2949
        %v2990 = vadd.f32 %v2930, %v2949
        %v2991 = vadd.f32 %v2931, %v2949
        %v2992 = vadd.f32 %v2932, %v2949
        %v2993 = vadd.f32 %v2933, %v2949
        %v2994 = vadd.f32 %v2934, %v2949
        %v2995 = vadd.f32 %v2935, %v2949
        %v2996 = vadd.f32 %v2936, %v2949
        %v2997 = vadd.f32 %v2937, %v2949
        %v2998 = vadd.f32 %v2938, %v2949
        %v2999 = vadd.f32 %v2939, %v2949
        %v3000 = vadd.f32 %v2940, %v2949
        %v3001 = vadd.f32 %v2941, %v2949
        %v3002 = vadd.f32 %v2942, %v2949
        %v3003 = vadd.f32 %v2943, %v2949
        %v3004 = vadd.f32 %v2944, %v2949
        %v3005 = vadd.f32 %v2945, %v2949
        %v3006 = vmax.f32 %v2950, %v2978
        %v3007 = vmax.f32 %v2951, %v2979
        %v3008 = vmax.f32 %v2952, %v2980
        %v3009 = vmax.f32 %v2953, %v2981
        %v3010 = vmax.f32 %v2954, %v2982
        %v3011 = vmax.f32 %v2955, %v2983
        %v3012 = vmax.f32 %v2956, %v2984
        %v3013 = vmax.f32 %v2957, %v2985
        %v3014 = vmax.f32 %v2958, %v2986
        %v3015 = vmax.f32 %v2959, %v2987
        %v3016 = vmax.f32 %v2960, %v2988
        %v3017 = vmax.f32 %v2961, %v2989
        %v3018 = vmax.f32 %v2962, %v2990
        %v3019 = vmax.f32 %v2963, %v2991
        %v3020 = vmax.f32 %v2964, %v2992
        %v3021 = vmax.f32 %v2965, %v2993
        %v3022 = vmax.f32 %v2966, %v2994
        %v3023 = vmax.f32 %v2967, %v2995
        %v3024 = vmax.f32 %v2968, %v2996
        %v3025 = vmax.f32 %v2969, %v2997
        %v3026 = vmax.f32 %v2970, %v2998
        %v3027 = vmax.f32 %v2971, %v2999
        %v3028 = vmax.f32 %v2972, %v3000
        %v3029 = vmax.f32 %v2973, %v3001
        %v3030 = vmax.f32 %v2974, %v3002
        %v3031 = vmax.f32 %v2975, %v3003
        %v3032 = vmax.f32 %v2976, %v3004
        %v3033 = vmax.f32 %v2977, %v3005
        %v3034 = vmax.f32 %v3006, 0.0
        %v3035 = vmax.f32 %v3007, 0.0
        %v3036 = vmax.f32 %v3008, 0.0
        %v3037 = vmax.f32 %v3009, 0.0
        %v3038 = vmax.f32 %v3010, 0.0
        %v3039 = vmax.f32 %v3011, 0.0
        %v3040 = vmax.f32 %v3012, 0.0
        %v3041 = vmax.f32 %v3013, 0.0
        %v3042 = vmax.f32 %v3014, 0.0
        %v3043 = vmax.f32 %v3015, 0.0
        %v3044 = vmax.f32 %v3016, 0.0
        %v3045 = vmax.f32 %v3017, 0.0
        %v3046 = vmax.f32 %v3018, 0.0
        %v3047 = vmax.f32 %v3019, 0.0
        %v3048 = vmax.f32 %v3020, 0.0
        %v3049 = vmax.f32 %v3021, 0.0
        %v3050 = vmax.f32 %v3022, 0.0
        %v3051 = vmax.f32 %v3023, 0.0
        %v3052 = vmax.f32 %v3024, 0.0
        %v3053 = vmax.f32 %v3025, 0.0
        %v3054 = vmax.f32 %v3026, 0.0
        %v3055 = vmax.f32 %v3027, 0.0
        %v3056 = vmax.f32 %v3028, 0.0
        %v3057 = vmax.f32 %v3029, 0.0
        %v3058 = vmax.f32 %v3030, 0.0
        %v3059 = vmax.f32 %v3031, 0.0
        %v3060 = vmax.f32 %v3032, 0.0
        %v3061 = vmax.f32 %v3033, 0.0
        %v3062 = vmax.f32 %v3034, %v3035
        %v3063 = vmax.f32 %v3036, %v3037
        %v3064 = vmax.f32 %v3038, %v3039
        %v3065 = vmax.f32 %v3040, %v3041
        %v3066 = vmax.f32 %v3042, %v3043
        %v3067 = vmax.f32 %v3044, %v3045
        %v3068 = vmax.f32 %v3046, %v3047
        %v3069 = vmax.f32 %v3048, %v3049
        %v3070 = vmax.f32 %v3050, %v3051
        %v3071 = vmax.f32 %v3052, %v3053
        %v3072 = vmax.f32 %v3054, %v3055
        %v3073 = vmax.f32 %v3056, %v3057
        %v3074 = vmax.f32 %v3058, %v3059
        %v3075 = vmax.f32 %v3060, %v3061
        %v3076 = vpack.c.bf16 %v3063, %v3062
        %v3077 = vpack.c.bf16 %v3065, %v3064
        %v3078 = vpack.c.bf16 %v3067, %v3066
        %v3079 = vpack.c.bf16 %v3069, %v3068
        %v3080 = vpack.c.bf16 %v3071, %v3070
        %v3081 = vld [vmem:[%s2] sm:$0xf]
        %v3082 = vld [vmem:[%s2 + $0x4] sm:$0xf]
        %v3083 = vld [vmem:[%s2 + $0x8] sm:$0xf]
        %v3084 = vld [vmem:[%s2 + $0xc] sm:$0xf]
        %v3085 = vld [vmem:[%s2 + $0x10] sm:$0xf]
        %v3086 = vld [vmem:[%s2 + $0x14] sm:$0xf]
        %v3087 = vld [vmem:[%s2 + $0x18] sm:$0xf]
        %v3088 = vld [vmem:[%s2 + $0x1c] sm:$0xf]
        %v3089 = vld [vmem:[%s2 + $0x20] sm:$0xf]
        %v3090 = vld [vmem:[%s2 + $0x24] sm:$0xf]
        %v3091 = vld [vmem:[%s2 + $0x28] sm:$0x3]
        %s3092 = scalar_lea.vmem %s2, 44
        %v3093 = vld [vmem:[%s3092] sm:$0xf]
        %v3094 = vld [vmem:[%s3092 + $0x4] sm:$0xf]
        %v3095 = vld [vmem:[%s3092 + $0x8] sm:$0xf]
        %v3096 = vld [vmem:[%s3092 + $0xc] sm:$0xf]
        %v3097 = vld [vmem:[%s3092 + $0x10] sm:$0xf]
        %v3098 = vld [vmem:[%s3092 + $0x14] sm:$0xf]
        %v3099 = vld [vmem:[%s3092 + $0x18] sm:$0xf]
        %v3100 = vld [vmem:[%s3092 + $0x1c] sm:$0xf]
        %v3101 = vld [vmem:[%s3092 + $0x20] sm:$0xf]
        %v3102 = vld [vmem:[%s3092 + $0x24] sm:$0xf]
        %v3103 = vld [vmem:[%s3092 + $0x28] sm:$0x3]
        %v3104 = vpack.c.bf16 %v3064, %v3063
        %v3105 = vpack.c.bf16 %v3066, %v3065
        %v3106 = vpack.c.bf16 %v3068, %v3067
        %v3107 = vpack.c.bf16 %v3070, %v3069
        %v3108 = vpack.c.bf16 %v3072, %v3071
        %s3109 = scalar_lea.vmem %s2, 88
        %v3110 = vld [vmem:[%s3109] sm:$0xf]
        %v3111 = vld [vmem:[%s3109 + $0x4] sm:$0xf]
        %v3112 = vld [vmem:[%s3109 + $0x8] sm:$0xf]
        %v3113 = vld [vmem:[%s3109 + $0xc] sm:$0xf]
        %v3114 = vld [vmem:[%s3109 + $0x10] sm:$0xf]
        %v3115 = vld [vmem:[%s3109 + $0x14] sm:$0xf]
        %v3116 = vld [vmem:[%s3109 + $0x18] sm:$0xf]
        %v3117 = vld [vmem:[%s3109 + $0x1c] sm:$0xf]
        %v3118 = vld [vmem:[%s3109 + $0x20] sm:$0xf]
        %v3119 = vld [vmem:[%s3109 + $0x24] sm:$0xf]
        %v3120 = vld [vmem:[%s3109 + $0x28] sm:$0x3]
        %v3132 = vunpack.c.l.b16 %v3110
        %v3133 = vunpack.c.l.b16 %v3111
        %v3134 = vunpack.c.l.b16 %v3112
        %v3135 = vunpack.c.l.b16 %v3113
        %v3136 = vunpack.c.l.b16 %v3114
        %v3137 = vunpack.c.l.b16 %v3115
        %v3138 = vunpack.c.l.b16 %v3116
        %v3139 = vunpack.c.l.b16 %v3117
        %v3140 = vunpack.c.l.b16 %v3118
        %v3141 = vunpack.c.l.b16 %v3119
        %v3142 = vunpack.c.l.b16 %v3120
        %v3143 = vpack.c.b16 %v3133, %v3132
        %v3144 = vpack.c.b16 %v3135, %v3134
        %v3145 = vpack.c.b16 %v3137, %v3136
        %v3146 = vpack.c.b16 %v3139, %v3138
        %v3147 = vpack.c.b16 %v3141, %v3140
        %v3148 = vpack.c.b16 %v3142, %v3142
        %vm3154 = vcmask 687104
        %v3156 = vsel %vm3154, %v3104, 0
        %v3159 = vsel %vm3154, %v3105, 0
        %v3162 = vsel %vm3154, %v3106, 0
        %v3165 = vsel %vm3154, %v3107, 0
        %v3168 = vsel %vm3154, %v3108, 0
        %vm3170 = vcmask 1041408
        %v3172 = vsel %vm3170, %v3148, 0
        %3174 = vmatprep.subr.bf16.mxu0 0
        %3175 = vmatpush1.bf16.msra.mxu0 %v3143
        %3176 = vmatprep.subr.bf16.mxu0 0
        %3177 = vmatpush1.bf16.msra.mxu0 %v3144
        %3178 = vmatprep.subr.bf16.mxu0 0
        %3179 = vmatpush1.bf16.msra.mxu0 %v3145
        %3180 = vmatprep.subr.bf16.mxu0 0
        %3181 = vmatpush1.bf16.msra.mxu0 %v3146
        %3182 = vmatprep.subr.bf16.mxu0 0
        %3183 = vmatpush1.bf16.msra.mxu0 %v3147
        %3184 = vmatprep.subr.bf16.mxu0 0
        %3185 = vmatpush1.bf16.msra.mxu0 %v3172
        %3186 = vmatprep.subr.bf16.mxu0 0
        %3187 = vmatpush1.bf16.msra.mxu0 0
        %3188 = vmatprep.subr.bf16.mxu0 0
        %3189 = vmatpush1.bf16.msra.mxu0 0
        %3190 = vmatprep.subr.bf16.mxu0 0
        %3191 = vmatpush1.bf16.msra.mxu0 0
        %3192 = vmatprep.subr.bf16.mxu0 0
        %3193 = vmatpush1.bf16.msra.mxu0 0
        %3194 = vmatprep.subr.bf16.mxu0 0
        %3195 = vmatpush1.bf16.msra.mxu0 0
        %3196 = vmatprep.subr.bf16.mxu0 0
        %3197 = vmatpush1.bf16.msra.mxu0 0
        %3198 = vmatprep.subr.bf16.mxu0 0
        %3199 = vmatpush1.bf16.msra.mxu0 0
        %3200 = vmatprep.subr.bf16.mxu0 0
        %3201 = vmatpush1.bf16.msra.mxu0 0
        %3202 = vmatprep.subr.bf16.mxu0 0
        %3203 = vmatpush1.bf16.msra.mxu0 0
        %3204 = vmatprep.subr.bf16.mxu0 0
        %3205 = vmatpush1.bf16.msra.mxu0 0
        %3206 = vmatprep.mubr.bf16.mxu0 0
        %3207 = vmatmul.mubr.bf16.gmra.mrb[0].mxu0 %v3156
        %v3208 = vpop.f32.mrb[0].mxu0
        %v3209 = vadd.f32 0.0, %v3208
        %v3210 = vpop.f32.mrb[0].mxu0
        %v3211 = vpop.f32.mrb[0].mxu0
        %v3212 = vadd.f32 0.0, %v3211
        %v3213 = vpop.f32.mrb[0].mxu0
        %3214 = vmatprep.mubr.bf16.mxu0 0
        %3215 = vmatmul.mubr.bf16.gmra.mrb[0].mxu0 %v3159
        %v3216 = vpop.f32.mrb[0].mxu0
        %v3217 = vadd.f32 0.0, %v3216
        %v3218 = vpop.f32.mrb[0].mxu0
        %v3219 = vpop.f32.mrb[0].mxu0
        %v3220 = vadd.f32 0.0, %v3219
        %v3221 = vpop.f32.mrb[0].mxu0
        %3222 = vmatprep.mubr.bf16.mxu0 0
        %3223 = vmatmul.mubr.bf16.gmra.mrb[0].mxu0 %v3162
        %v3224 = vpop.f32.mrb[0].mxu0
        %v3225 = vadd.f32 0.0, %v3224
        %v3226 = vpop.f32.mrb[0].mxu0
        %v3227 = vpop.f32.mrb[0].mxu0
        %v3228 = vadd.f32 0.0, %v3227
        %v3229 = vpop.f32.mrb[0].mxu0
        %3230 = vmatprep.mubr.bf16.mxu0 0
        %3231 = vmatmul.mubr.bf16.gmra.mrb[0].mxu0 %v3165
        %v3232 = vpop.f32.mrb[0].mxu0
        %v3233 = vadd.f32 0.0, %v3232
        %v3234 = vpop.f32.mrb[0].mxu0
        %v3235 = vpop.f32.mrb[0].mxu0
        %v3236 = vadd.f32 0.0, %v3235
        %v3237 = vpop.f32.mrb[0].mxu0
        %3238 = vmatprep.mubr.bf16.mxu0 0
        %3239 = vmatmul.mubr.bf16.gmra.mrb[0].mxu0 %v3168
        %v3240 = vpop.f32.mrb[0].mxu0
        %v3241 = vadd.f32 0.0, %v3240
        %v3242 = vpop.f32.mrb[0].mxu0
        %v3243 = vpop.f32.mrb[0].mxu0
        %v3244 = vadd.f32 0.0, %v3243
        %v3245 = vpop.f32.mrb[0].mxu0
        %3246 = vdwg.mxu0
        %v3258 = vunpack.c.l.b16 %v3081
        %v3259 = vunpack.c.l.b16 %v3082
        %v3260 = vunpack.c.l.b16 %v3083
        %v3261 = vunpack.c.l.b16 %v3084
        %v3262 = vunpack.c.l.b16 %v3085
        %v3263 = vunpack.c.l.b16 %v3086
        %v3264 = vunpack.c.l.b16 %v3087
        %v3265 = vunpack.c.l.b16 %v3088
        %v3266 = vunpack.c.l.b16 %v3089
        %v3267 = vunpack.c.l.b16 %v3090
        %v3268 = vunpack.c.l.b16 %v3091
        %v3269 = vpack.c.b16 %v3259, %v3258
        %v3270 = vpack.c.b16 %v3261, %v3260
        %v3271 = vpack.c.b16 %v3263, %v3262
        %v3272 = vpack.c.b16 %v3265, %v3264
        %v3273 = vpack.c.b16 %v3267, %v3266
        %v3274 = vpack.c.b16 %v3268, %v3268
        %v3281 = vsel %vm3154, %v3076, 0
        %v3284 = vsel %vm3154, %v3077, 0
        %v3287 = vsel %vm3154, %v3078, 0
        %v3290 = vsel %vm3154, %v3079, 0
        %v3293 = vsel %vm3154, %v3080, 0
        %v3296 = vsel %vm3170, %v3274, 0
        %3298 = vmatprep.subr.bf16.mxu0 0
        %3299 = vmatpush1.bf16.msra.mxu0 %v3269
        %3300 = vmatprep.subr.bf16.mxu0 0
        %3301 = vmatpush1.bf16.msra.mxu0 %v3270
        %3302 = vmatprep.subr.bf16.mxu0 0
        %3303 = vmatpush1.bf16.msra.mxu0 %v3271
        %3304 = vmatprep.subr.bf16.mxu0 0
        %3305 = vmatpush1.bf16.msra.mxu0 %v3272
        %3306 = vmatprep.subr.bf16.mxu0 0
        %3307 = vmatpush1.bf16.msra.mxu0 %v3273
        %3308 = vmatprep.subr.bf16.mxu0 0
        %3309 = vmatpush1.bf16.msra.mxu0 %v3296
        %3310 = vmatprep.subr.bf16.mxu0 0
        %3311 = vmatpush1.bf16.msra.mxu0 0
        %3312 = vmatprep.subr.bf16.mxu0 0
        %3313 = vmatpush1.bf16.msra.mxu0 0
        %3314 = vmatprep.subr.bf16.mxu0 0
        %3315 = vmatpush1.bf16.msra.mxu0 0
        %3316 = vmatprep.subr.bf16.mxu0 0
        %3317 = vmatpush1.bf16.msra.mxu0 0
        %3318 = vmatprep.subr.bf16.mxu0 0
        %3319 = vmatpush1.bf16.msra.mxu0 0
        %3320 = vmatprep.subr.bf16.mxu0 0
        %3321 = vmatpush1.bf16.msra.mxu0 0
        %3322 = vmatprep.subr.bf16.mxu0 0
        %3323 = vmatpush1.bf16.msra.mxu0 0
        %3324 = vmatprep.subr.bf16.mxu0 0
        %3325 = vmatpush1.bf16.msra.mxu0 0
        %3326 = vmatprep.subr.bf16.mxu0 0
        %3327 = vmatpush1.bf16.msra.mxu0 0
        %3328 = vmatprep.subr.bf16.mxu0 0
        %3329 = vmatpush1.bf16.msra.mxu0 0
        %3330 = vmatprep.mubr.bf16.mxu0 0
        %3331 = vmatmul.mubr.bf16.gmra.mrb[0].mxu0 %v3281
        %v3332 = vpop.f32.mrb[0].mxu0
        %v3333 = vadd.f32 %v3209, %v3332
        %v3334 = vpop.f32.mrb[0].mxu0
        %v3335 = vpop.f32.mrb[0].mxu0
        %v3336 = vadd.f32 %v3212, %v3335
        %v3337 = vpop.f32.mrb[0].mxu0
        %3338 = vmatprep.mubr.bf16.mxu0 0
        %3339 = vmatmul.mubr.bf16.gmra.mrb[0].mxu0 %v3284
        %v3340 = vpop.f32.mrb[0].mxu0
        %v3341 = vadd.f32 %v3217, %v3340
        %v3342 = vpop.f32.mrb[0].mxu0
        %v3343 = vpop.f32.mrb[0].mxu0
        %v3344 = vadd.f32 %v3220, %v3343
        %v3345 = vpop.f32.mrb[0].mxu0
        %3346 = vmatprep.mubr.bf16.mxu0 0
        %3347 = vmatmul.mubr.bf16.gmra.mrb[0].mxu0 %v3287
        %v3348 = vpop.f32.mrb[0].mxu0
        %v3349 = vadd.f32 %v3225, %v3348
        %v3350 = vpop.f32.mrb[0].mxu0
        %v3351 = vpop.f32.mrb[0].mxu0
        %v3352 = vadd.f32 %v3228, %v3351
        %v3353 = vpop.f32.mrb[0].mxu0
        %3354 = vmatprep.mubr.bf16.mxu0 0
        %3355 = vmatmul.mubr.bf16.gmra.mrb[0].mxu0 %v3290
        %v3356 = vpop.f32.mrb[0].mxu0
        %v3357 = vadd.f32 %v3233, %v3356
        %v3358 = vpop.f32.mrb[0].mxu0
        %v3359 = vpop.f32.mrb[0].mxu0
        %v3360 = vadd.f32 %v3236, %v3359
        %v3361 = vpop.f32.mrb[0].mxu0
        %3362 = vmatprep.mubr.bf16.mxu0 0
        %3363 = vmatmul.mubr.bf16.gmra.mrb[0].mxu0 %v3293
        %v3364 = vpop.f32.mrb[0].mxu0
        %v3365 = vadd.f32 %v3241, %v3364
        %v3366 = vpop.f32.mrb[0].mxu0
        %v3367 = vpop.f32.mrb[0].mxu0
        %v3368 = vadd.f32 %v3244, %v3367
        %v3369 = vpop.f32.mrb[0].mxu0
        %3370 = vdwg.mxu0
        %s3371 = scalar_lea.vmem %s2, 132
        %v3372 = vld [vmem:[%s3371] sm:$0xf]
        %v3373 = vld [vmem:[%s3371 + $0x4] sm:$0xf]
        %v3374 = vld [vmem:[%s3371 + $0x8] sm:$0xf]
        %v3375 = vld [vmem:[%s3371 + $0xc] sm:$0xf]
        %v3376 = vld [vmem:[%s3371 + $0x10] sm:$0xf]
        %v3377 = vld [vmem:[%s3371 + $0x14] sm:$0xf]
        %v3378 = vld [vmem:[%s3371 + $0x18] sm:$0xf]
        %v3379 = vld [vmem:[%s3371 + $0x1c] sm:$0xf]
        %v3380 = vld [vmem:[%s3371 + $0x20] sm:$0xf]
        %v3381 = vld [vmem:[%s3371 + $0x24] sm:$0xf]
        %v3382 = vld [vmem:[%s3371 + $0x28] sm:$0x3]
        %v3394 = vunpack.c.l.b16 %v3372
        %v3395 = vunpack.c.l.b16 %v3373
        %v3396 = vunpack.c.l.b16 %v3374
        %v3397 = vunpack.c.l.b16 %v3375
        %v3398 = vunpack.c.l.b16 %v3376
        %v3399 = vunpack.c.l.b16 %v3377
        %v3400 = vunpack.c.l.b16 %v3378
        %v3401 = vunpack.c.l.b16 %v3379
        %v3402 = vunpack.c.l.b16 %v3380
        %v3403 = vunpack.c.l.b16 %v3381
        %v3404 = vunpack.c.l.b16 %v3382
        %v3405 = vpack.c.b16 %v3395, %v3394
        %v3406 = vpack.c.b16 %v3397, %v3396
        %v3407 = vpack.c.b16 %v3399, %v3398
        %v3408 = vpack.c.b16 %v3401, %v3400
        %v3409 = vpack.c.b16 %v3403, %v3402
        %v3410 = vpack.c.b16 %v3404, %v3404
        %v3417 = vsel %vm3170, %v3410, 0
        %3419 = vmatprep.subr.bf16.mxu0 0
        %3420 = vmatpush1.bf16.msra.mxu0 %v3405
        %3421 = vmatprep.subr.bf16.mxu0 0
        %3422 = vmatpush1.bf16.msra.mxu0 %v3406
        %3423 = vmatprep.subr.bf16.mxu0 0
        %3424 = vmatpush1.bf16.msra.mxu0 %v3407
        %3425 = vmatprep.subr.bf16.mxu0 0
        %3426 = vmatpush1.bf16.msra.mxu0 %v3408
        %3427 = vmatprep.subr.bf16.mxu0 0
        %3428 = vmatpush1.bf16.msra.mxu0 %v3409
        %3429 = vmatprep.subr.bf16.mxu0 0
        %3430 = vmatpush1.bf16.msra.mxu0 %v3417
        %3431 = vmatprep.subr.bf16.mxu0 0
        %3432 = vmatpush1.bf16.msra.mxu0 0
        %3433 = vmatprep.subr.bf16.mxu0 0
        %3434 = vmatpush1.bf16.msra.mxu0 0
        %3435 = vmatprep.subr.bf16.mxu0 0
        %3436 = vmatpush1.bf16.msra.mxu0 0
        %3437 = vmatprep.subr.bf16.mxu0 0
        %3438 = vmatpush1.bf16.msra.mxu0 0
        %3439 = vmatprep.subr.bf16.mxu0 0
        %3440 = vmatpush1.bf16.msra.mxu0 0
        %3441 = vmatprep.subr.bf16.mxu0 0
        %3442 = vmatpush1.bf16.msra.mxu0 0
        %3443 = vmatprep.subr.bf16.mxu0 0
        %3444 = vmatpush1.bf16.msra.mxu0 0
        %3445 = vmatprep.subr.bf16.mxu0 0
        %3446 = vmatpush1.bf16.msra.mxu0 0
        %3447 = vmatprep.subr.bf16.mxu0 0
        %3448 = vmatpush1.bf16.msra.mxu0 0
        %3449 = vmatprep.subr.bf16.mxu0 0
        %3450 = vmatpush1.bf16.msra.mxu0 0
        %3451 = vmatprep.mubr.bf16.mxu0 0
        %3452 = vmatmul.mubr.bf16.gmra.mrb[0].mxu0 %v3156
        %v3453 = vpop.f32.mrb[0].mxu0
        %v3454 = vadd.f32 0.0, %v3453
        %v3455 = vpop.f32.mrb[0].mxu0
        %v3456 = vpop.f32.mrb[0].mxu0
        %v3457 = vadd.f32 0.0, %v3456
        %v3458 = vpop.f32.mrb[0].mxu0
        %3459 = vmatprep.mubr.bf16.mxu0 0
        %3460 = vmatmul.mubr.bf16.gmra.mrb[0].mxu0 %v3159
        %v3461 = vpop.f32.mrb[0].mxu0
        %v3462 = vadd.f32 0.0, %v3461
        %v3463 = vpop.f32.mrb[0].mxu0
        %v3464 = vpop.f32.mrb[0].mxu0
        %v3465 = vadd.f32 0.0, %v3464
        %v3466 = vpop.f32.mrb[0].mxu0
        %3467 = vmatprep.mubr.bf16.mxu0 0
        %3468 = vmatmul.mubr.bf16.gmra.mrb[0].mxu0 %v3162
        %v3469 = vpop.f32.mrb[0].mxu0
        %v3470 = vadd.f32 0.0, %v3469
        %v3471 = vpop.f32.mrb[0].mxu0
        %v3472 = vpop.f32.mrb[0].mxu0
        %v3473 = vadd.f32 0.0, %v3472
        %v3474 = vpop.f32.mrb[0].mxu0
        %3475 = vmatprep.mubr.bf16.mxu0 0
        %3476 = vmatmul.mubr.bf16.gmra.mrb[0].mxu0 %v3165
        %v3477 = vpop.f32.mrb[0].mxu0
        %v3478 = vadd.f32 0.0, %v3477
        %v3479 = vpop.f32.mrb[0].mxu0
        %v3480 = vpop.f32.mrb[0].mxu0
        %v3481 = vadd.f32 0.0, %v3480
        %v3482 = vpop.f32.mrb[0].mxu0
        %3483 = vmatprep.mubr.bf16.mxu0 0
        %3484 = vmatmul.mubr.bf16.gmra.mrb[0].mxu0 %v3168
        %v3485 = vpop.f32.mrb[0].mxu0
        %v3486 = vadd.f32 0.0, %v3485
        %v3487 = vpop.f32.mrb[0].mxu0
        %v3488 = vpop.f32.mrb[0].mxu0
        %v3489 = vadd.f32 0.0, %v3488
        %v3490 = vpop.f32.mrb[0].mxu0
        %3491 = vdwg.mxu0
        %v3503 = vunpack.c.l.b16 %v3093
        %v3504 = vunpack.c.l.b16 %v3094
        %v3505 = vunpack.c.l.b16 %v3095
        %v3506 = vunpack.c.l.b16 %v3096
        %v3507 = vunpack.c.l.b16 %v3097
        %v3508 = vunpack.c.l.b16 %v3098
        %v3509 = vunpack.c.l.b16 %v3099
        %v3510 = vunpack.c.l.b16 %v3100
        %v3511 = vunpack.c.l.b16 %v3101
        %v3512 = vunpack.c.l.b16 %v3102
        %v3513 = vunpack.c.l.b16 %v3103
        %v3514 = vpack.c.b16 %v3504, %v3503
        %v3515 = vpack.c.b16 %v3506, %v3505
        %v3516 = vpack.c.b16 %v3508, %v3507
        %v3517 = vpack.c.b16 %v3510, %v3509
        %v3518 = vpack.c.b16 %v3512, %v3511
        %v3519 = vpack.c.b16 %v3513, %v3513
        %v3526 = vsel %vm3170, %v3519, 0
        %3528 = vmatprep.subr.bf16.mxu0 0
        %3529 = vmatpush1.bf16.msra.mxu0 %v3514
        %3530 = vmatprep.subr.bf16.mxu0 0
        %3531 = vmatpush1.bf16.msra.mxu0 %v3515
        %3532 = vmatprep.subr.bf16.mxu0 0
        %3533 = vmatpush1.bf16.msra.mxu0 %v3516
        %3534 = vmatprep.subr.bf16.mxu0 0
        %3535 = vmatpush1.bf16.msra.mxu0 %v3517
        %3536 = vmatprep.subr.bf16.mxu0 0
        %3537 = vmatpush1.bf16.msra.mxu0 %v3518
        %3538 = vmatprep.subr.bf16.mxu0 0
        %3539 = vmatpush1.bf16.msra.mxu0 %v3526
        %3540 = vmatprep.subr.bf16.mxu0 0
        %3541 = vmatpush1.bf16.msra.mxu0 0
        %3542 = vmatprep.subr.bf16.mxu0 0
        %3543 = vmatpush1.bf16.msra.mxu0 0
        %3544 = vmatprep.subr.bf16.mxu0 0
        %3545 = vmatpush1.bf16.msra.mxu0 0
        %3546 = vmatprep.subr.bf16.mxu0 0
        %3547 = vmatpush1.bf16.msra.mxu0 0
        %3548 = vmatprep.subr.bf16.mxu0 0
        %3549 = vmatpush1.bf16.msra.mxu0 0
        %3550 = vmatprep.subr.bf16.mxu0 0
        %3551 = vmatpush1.bf16.msra.mxu0 0
        %3552 = vmatprep.subr.bf16.mxu0 0
        %3553 = vmatpush1.bf16.msra.mxu0 0
        %3554 = vmatprep.subr.bf16.mxu0 0
        %3555 = vmatpush1.bf16.msra.mxu0 0
        %3556 = vmatprep.subr.bf16.mxu0 0
        %3557 = vmatpush1.bf16.msra.mxu0 0
        %3558 = vmatprep.subr.bf16.mxu0 0
        %3559 = vmatpush1.bf16.msra.mxu0 0
        %3560 = vmatprep.mubr.bf16.mxu0 0
        %3561 = vmatmul.mubr.bf16.gmra.mrb[0].mxu0 %v3281
        %v3562 = vpop.f32.mrb[0].mxu0
        %v3563 = vadd.f32 %v3454, %v3562
        %v3564 = vpop.f32.mrb[0].mxu0
        %v3565 = vpop.f32.mrb[0].mxu0
        %v3566 = vadd.f32 %v3457, %v3565
        %v3567 = vpop.f32.mrb[0].mxu0
        %3568 = vmatprep.mubr.bf16.mxu0 0
        %3569 = vmatmul.mubr.bf16.gmra.mrb[0].mxu0 %v3284
        %v3570 = vpop.f32.mrb[0].mxu0
        %v3571 = vadd.f32 %v3462, %v3570
        %v3572 = vpop.f32.mrb[0].mxu0
        %v3573 = vpop.f32.mrb[0].mxu0
        %v3574 = vadd.f32 %v3465, %v3573
        %v3575 = vpop.f32.mrb[0].mxu0
        %3576 = vmatprep.mubr.bf16.mxu0 0
        %3577 = vmatmul.mubr.bf16.gmra.mrb[0].mxu0 %v3287
        %v3578 = vpop.f32.mrb[0].mxu0
        %v3579 = vadd.f32 %v3470, %v3578
        %v3580 = vpop.f32.mrb[0].mxu0
        %v3581 = vpop.f32.mrb[0].mxu0
        %v3582 = vadd.f32 %v3473, %v3581
        %v3583 = vpop.f32.mrb[0].mxu0
        %3584 = vmatprep.mubr.bf16.mxu0 0
        %3585 = vmatmul.mubr.bf16.gmra.mrb[0].mxu0 %v3290
        %v3586 = vpop.f32.mrb[0].mxu0
        %v3587 = vadd.f32 %v3478, %v3586
        %v3588 = vpop.f32.mrb[0].mxu0
        %v3589 = vpop.f32.mrb[0].mxu0
        %v3590 = vadd.f32 %v3481, %v3589
        %v3591 = vpop.f32.mrb[0].mxu0
        %3592 = vmatprep.mubr.bf16.mxu0 0
        %3593 = vmatmul.mubr.bf16.gmra.mrb[0].mxu0 %v3293
        %v3594 = vpop.f32.mrb[0].mxu0
        %v3595 = vadd.f32 %v3486, %v3594
        %v3596 = vpop.f32.mrb[0].mxu0
        %v3597 = vpop.f32.mrb[0].mxu0
        %v3598 = vadd.f32 %v3489, %v3597
        %v3599 = vpop.f32.mrb[0].mxu0
        %3600 = vdwg.mxu0
        %v3601 = vpack.c.bf16 %v3073, %v3072
        %s3602 = scalar_lea.vmem %s2, 176
        %v3603 = vld [vmem:[%s3602] sm:$0xf]
        %v3604 = vld [vmem:[%s3602 + $0x4] sm:$0xf]
        %v3605 = vld [vmem:[%s3602 + $0x8] sm:$0xf]
        %v3606 = vld [vmem:[%s3602 + $0xc] sm:$0xf]
        %v3607 = vld [vmem:[%s3602 + $0x10] sm:$0xf]
        %v3608 = vld [vmem:[%s3602 + $0x14] sm:$0xf]
        %v3609 = vld [vmem:[%s3602 + $0x18] sm:$0xf]
        %v3610 = vld [vmem:[%s3602 + $0x1c] sm:$0xf]
        %v3611 = vld [vmem:[%s3602 + $0x20] sm:$0xf]
        %v3612 = vld [vmem:[%s3602 + $0x24] sm:$0xf]
        %v3613 = vld [vmem:[%s3602 + $0x28] sm:$0x3]
        %v3625 = vunpack.c.l.b16 %v3603
        %v3626 = vunpack.c.l.b16 %v3604
        %v3627 = vunpack.c.l.b16 %v3605
        %v3628 = vunpack.c.l.b16 %v3606
        %v3629 = vunpack.c.l.b16 %v3607
        %v3630 = vunpack.c.l.b16 %v3608
        %v3631 = vunpack.c.l.b16 %v3609
        %v3632 = vunpack.c.l.b16 %v3610
        %v3633 = vunpack.c.l.b16 %v3611
        %v3634 = vunpack.c.l.b16 %v3612
        %v3635 = vunpack.c.l.b16 %v3613
        %v3636 = vpack.c.b16 %v3626, %v3625
        %v3637 = vpack.c.b16 %v3628, %v3627
        %v3638 = vpack.c.b16 %v3630, %v3629
        %v3639 = vpack.c.b16 %v3632, %v3631
        %v3640 = vpack.c.b16 %v3634, %v3633
        %v3641 = vpack.c.b16 %v3635, %v3635
        %v3648 = vsel %vm3154, %v3601, 0
        %v3651 = vsel %vm3170, %v3641, 0
        %3653 = vmatprep.subr.bf16.mxu0 0
        %3654 = vmatpush1.bf16.msra.mxu0 %v3636
        %3655 = vmatprep.subr.bf16.mxu0 0
        %3656 = vmatpush1.bf16.msra.mxu0 %v3637
        %3657 = vmatprep.subr.bf16.mxu0 0
        %3658 = vmatpush1.bf16.msra.mxu0 %v3638
        %3659 = vmatprep.subr.bf16.mxu0 0
        %3660 = vmatpush1.bf16.msra.mxu0 %v3639
        %3661 = vmatprep.subr.bf16.mxu0 0
        %3662 = vmatpush1.bf16.msra.mxu0 %v3640
        %3663 = vmatprep.subr.bf16.mxu0 0
        %3664 = vmatpush1.bf16.msra.mxu0 %v3651
        %3665 = vmatprep.subr.bf16.mxu0 0
        %3666 = vmatpush1.bf16.msra.mxu0 0
        %3667 = vmatprep.subr.bf16.mxu0 0
        %3668 = vmatpush1.bf16.msra.mxu0 0
        %3669 = vmatprep.subr.bf16.mxu0 0
        %3670 = vmatpush1.bf16.msra.mxu0 0
        %3671 = vmatprep.subr.bf16.mxu0 0
        %3672 = vmatpush1.bf16.msra.mxu0 0
        %3673 = vmatprep.subr.bf16.mxu0 0
        %3674 = vmatpush1.bf16.msra.mxu0 0
        %3675 = vmatprep.subr.bf16.mxu0 0
        %3676 = vmatpush1.bf16.msra.mxu0 0
        %3677 = vmatprep.subr.bf16.mxu0 0
        %3678 = vmatpush1.bf16.msra.mxu0 0
        %3679 = vmatprep.subr.bf16.mxu0 0
        %3680 = vmatpush1.bf16.msra.mxu0 0
        %3681 = vmatprep.subr.bf16.mxu0 0
        %3682 = vmatpush1.bf16.msra.mxu0 0
        %3683 = vmatprep.subr.bf16.mxu0 0
        %3684 = vmatpush1.bf16.msra.mxu0 0
        %3685 = vmatprep.mubr.bf16.mxu0 0
        %3686 = vmatmul.mubr.bf16.gmra.mrb[0].mxu0 %v3284
        %v3687 = vpop.f32.mrb[0].mxu0
        %v3688 = vadd.f32 0.0, %v3687
        %v3689 = vpop.f32.mrb[0].mxu0
        %v3690 = vpop.f32.mrb[0].mxu0
        %v3691 = vadd.f32 0.0, %v3690
        %v3692 = vpop.f32.mrb[0].mxu0
        %3693 = vmatprep.mubr.bf16.mxu0 0
        %3694 = vmatmul.mubr.bf16.gmra.mrb[0].mxu0 %v3287
        %v3695 = vpop.f32.mrb[0].mxu0
        %v3696 = vadd.f32 0.0, %v3695
        %v3697 = vpop.f32.mrb[0].mxu0
        %v3698 = vpop.f32.mrb[0].mxu0
        %v3699 = vadd.f32 0.0, %v3698
        %v3700 = vpop.f32.mrb[0].mxu0
        %3701 = vmatprep.mubr.bf16.mxu0 0
        %3702 = vmatmul.mubr.bf16.gmra.mrb[0].mxu0 %v3290
        %v3703 = vpop.f32.mrb[0].mxu0
        %v3704 = vadd.f32 0.0, %v3703
        %v3705 = vpop.f32.mrb[0].mxu0
        %v3706 = vpop.f32.mrb[0].mxu0
        %v3707 = vadd.f32 0.0, %v3706
        %v3708 = vpop.f32.mrb[0].mxu0
        %3709 = vmatprep.mubr.bf16.mxu0 0
        %3710 = vmatmul.mubr.bf16.gmra.mrb[0].mxu0 %v3293
        %v3711 = vpop.f32.mrb[0].mxu0
        %v3712 = vadd.f32 0.0, %v3711
        %v3713 = vpop.f32.mrb[0].mxu0
        %v3714 = vpop.f32.mrb[0].mxu0
        %v3715 = vadd.f32 0.0, %v3714
        %v3716 = vpop.f32.mrb[0].mxu0
        %3717 = vmatprep.mubr.bf16.mxu0 0
        %3718 = vmatmul.mubr.bf16.gmra.mrb[0].mxu0 %v3648
        %v3719 = vpop.f32.mrb[0].mxu0
        %v3720 = vadd.f32 0.0, %v3719
        %v3721 = vpop.f32.mrb[0].mxu0
        %v3722 = vpop.f32.mrb[0].mxu0
        %v3723 = vadd.f32 0.0, %v3722
        %v3724 = vpop.f32.mrb[0].mxu0
        %3725 = vdwg.mxu0
        %v3726 = vadd.f32 %v3333, %v3688
        %v3727 = vadd.f32 %v3336, %v3691
        %v3728 = vadd.f32 %v3341, %v3696
        %v3729 = vadd.f32 %v3344, %v3699
        %v3730 = vadd.f32 %v3349, %v3704
        %v3731 = vadd.f32 %v3352, %v3707
        %v3732 = vadd.f32 %v3357, %v3712
        %v3733 = vadd.f32 %v3360, %v3715
        %v3734 = vadd.f32 %v3365, %v3720
        %v3735 = vadd.f32 %v3368, %v3723
        %s3736 = scalar_lea.vmem %s2, 220
        %v3737 = vld [vmem:[%s3736] sm:$0xf]
        %v3738 = vld [vmem:[%s3736 + $0x4] sm:$0xf]
        %v3739 = vld [vmem:[%s3736 + $0x8] sm:$0xf]
        %v3740 = vld [vmem:[%s3736 + $0xc] sm:$0xf]
        %v3741 = vld [vmem:[%s3736 + $0x10] sm:$0xf]
        %v3742 = vld [vmem:[%s3736 + $0x14] sm:$0xf]
        %v3743 = vld [vmem:[%s3736 + $0x18] sm:$0xf]
        %v3744 = vld [vmem:[%s3736 + $0x1c] sm:$0xf]
        %v3745 = vld [vmem:[%s3736 + $0x20] sm:$0xf]
        %v3746 = vld [vmem:[%s3736 + $0x24] sm:$0xf]
        %v3747 = vld [vmem:[%s3736 + $0x28] sm:$0x3]
        %v3759 = vunpack.c.l.b16 %v3737
        %v3760 = vunpack.c.l.b16 %v3738
        %v3761 = vunpack.c.l.b16 %v3739
        %v3762 = vunpack.c.l.b16 %v3740
        %v3763 = vunpack.c.l.b16 %v3741
        %v3764 = vunpack.c.l.b16 %v3742
        %v3765 = vunpack.c.l.b16 %v3743
        %v3766 = vunpack.c.l.b16 %v3744
        %v3767 = vunpack.c.l.b16 %v3745
        %v3768 = vunpack.c.l.b16 %v3746
        %v3769 = vunpack.c.l.b16 %v3747
        %v3770 = vpack.c.b16 %v3760, %v3759
        %v3771 = vpack.c.b16 %v3762, %v3761
        %v3772 = vpack.c.b16 %v3764, %v3763
        %v3773 = vpack.c.b16 %v3766, %v3765
        %v3774 = vpack.c.b16 %v3768, %v3767
        %v3775 = vpack.c.b16 %v3769, %v3769
        %v3782 = vsel %vm3170, %v3775, 0
        %3784 = vmatprep.subr.bf16.mxu0 0
        %3785 = vmatpush1.bf16.msra.mxu0 %v3770
        %3786 = vmatprep.subr.bf16.mxu0 0
        %3787 = vmatpush1.bf16.msra.mxu0 %v3771
        %3788 = vmatprep.subr.bf16.mxu0 0
        %3789 = vmatpush1.bf16.msra.mxu0 %v3772
        %3790 = vmatprep.subr.bf16.mxu0 0
        %3791 = vmatpush1.bf16.msra.mxu0 %v3773
        %3792 = vmatprep.subr.bf16.mxu0 0
        %3793 = vmatpush1.bf16.msra.mxu0 %v3774
        %3794 = vmatprep.subr.bf16.mxu0 0
        %3795 = vmatpush1.bf16.msra.mxu0 %v3782
        %3796 = vmatprep.subr.bf16.mxu0 0
        %3797 = vmatpush1.bf16.msra.mxu0 0
        %3798 = vmatprep.subr.bf16.mxu0 0
        %3799 = vmatpush1.bf16.msra.mxu0 0
        %3800 = vmatprep.subr.bf16.mxu0 0
        %3801 = vmatpush1.bf16.msra.mxu0 0
        %3802 = vmatprep.subr.bf16.mxu0 0
        %3803 = vmatpush1.bf16.msra.mxu0 0
        %3804 = vmatprep.subr.bf16.mxu0 0
        %3805 = vmatpush1.bf16.msra.mxu0 0
        %3806 = vmatprep.subr.bf16.mxu0 0
        %3807 = vmatpush1.bf16.msra.mxu0 0
        %3808 = vmatprep.subr.bf16.mxu0 0
        %3809 = vmatpush1.bf16.msra.mxu0 0
        %3810 = vmatprep.subr.bf16.mxu0 0
        %3811 = vmatpush1.bf16.msra.mxu0 0
        %3812 = vmatprep.subr.bf16.mxu0 0
        %3813 = vmatpush1.bf16.msra.mxu0 0
        %3814 = vmatprep.subr.bf16.mxu0 0
        %3815 = vmatpush1.bf16.msra.mxu0 0
        %3816 = vmatprep.mubr.bf16.mxu0 0
        %3817 = vmatmul.mubr.bf16.gmra.mrb[0].mxu0 %v3284
        %v3818 = vpop.f32.mrb[0].mxu0
        %v3819 = vadd.f32 0.0, %v3818
        %v3820 = vpop.f32.mrb[0].mxu0
        %v3821 = vpop.f32.mrb[0].mxu0
        %v3822 = vadd.f32 0.0, %v3821
        %v3823 = vpop.f32.mrb[0].mxu0
        %3824 = vmatprep.mubr.bf16.mxu0 0
        %3825 = vmatmul.mubr.bf16.gmra.mrb[0].mxu0 %v3287
        %v3826 = vpop.f32.mrb[0].mxu0
        %v3827 = vadd.f32 0.0, %v3826
        %v3828 = vpop.f32.mrb[0].mxu0
        %v3829 = vpop.f32.mrb[0].mxu0
        %v3830 = vadd.f32 0.0, %v3829
        %v3831 = vpop.f32.mrb[0].mxu0
        %3832 = vmatprep.mubr.bf16.mxu0 0
        %3833 = vmatmul.mubr.bf16.gmra.mrb[0].mxu0 %v3290
        %v3834 = vpop.f32.mrb[0].mxu0
        %v3835 = vadd.f32 0.0, %v3834
        %v3836 = vpop.f32.mrb[0].mxu0
        %v3837 = vpop.f32.mrb[0].mxu0
        %v3838 = vadd.f32 0.0, %v3837
        %v3839 = vpop.f32.mrb[0].mxu0
        %3840 = vmatprep.mubr.bf16.mxu0 0
        %3841 = vmatmul.mubr.bf16.gmra.mrb[0].mxu0 %v3293
        %v3842 = vpop.f32.mrb[0].mxu0
        %v3843 = vadd.f32 0.0, %v3842
        %v3844 = vpop.f32.mrb[0].mxu0
        %v3845 = vpop.f32.mrb[0].mxu0
        %v3846 = vadd.f32 0.0, %v3845
        %v3847 = vpop.f32.mrb[0].mxu0
        %3848 = vmatprep.mubr.bf16.mxu0 0
        %3849 = vmatmul.mubr.bf16.gmra.mrb[0].mxu0 %v3648
        %v3850 = vpop.f32.mrb[0].mxu0
        %v3851 = vadd.f32 0.0, %v3850
        %v3852 = vpop.f32.mrb[0].mxu0
        %v3853 = vpop.f32.mrb[0].mxu0
        %v3854 = vadd.f32 0.0, %v3853
        %v3855 = vpop.f32.mrb[0].mxu0
        %3856 = vdwg.mxu0
        %v3857 = vadd.f32 %v3563, %v3819
        %v3858 = vadd.f32 %v3566, %v3822
        %v3859 = vadd.f32 %v3571, %v3827
        %v3860 = vadd.f32 %v3574, %v3830
        %v3861 = vadd.f32 %v3579, %v3835
        %v3862 = vadd.f32 %v3582, %v3838
        %v3863 = vadd.f32 %v3587, %v3843
        %v3864 = vadd.f32 %v3590, %v3846
        %v3865 = vadd.f32 %v3595, %v3851
        %v3866 = vadd.f32 %v3598, %v3854
        %v3867 = vpack.c.bf16 %v3074, %v3073
        %s3868 = scalar_lea.vmem %s2, 264
        %v3869 = vld [vmem:[%s3868] sm:$0xf]
        %v3870 = vld [vmem:[%s3868 + $0x4] sm:$0xf]
        %v3871 = vld [vmem:[%s3868 + $0x8] sm:$0xf]
        %v3872 = vld [vmem:[%s3868 + $0xc] sm:$0xf]
        %v3873 = vld [vmem:[%s3868 + $0x10] sm:$0xf]
        %v3874 = vld [vmem:[%s3868 + $0x14] sm:$0xf]
        %v3875 = vld [vmem:[%s3868 + $0x18] sm:$0xf]
        %v3876 = vld [vmem:[%s3868 + $0x1c] sm:$0xf]
        %v3877 = vld [vmem:[%s3868 + $0x20] sm:$0xf]
        %v3878 = vld [vmem:[%s3868 + $0x24] sm:$0xf]
        %v3879 = vld [vmem:[%s3868 + $0x28] sm:$0x3]
        %v3891 = vunpack.c.l.b16 %v3869
        %v3892 = vunpack.c.l.b16 %v3870
        %v3893 = vunpack.c.l.b16 %v3871
        %v3894 = vunpack.c.l.b16 %v3872
        %v3895 = vunpack.c.l.b16 %v3873
        %v3896 = vunpack.c.l.b16 %v3874
        %v3897 = vunpack.c.l.b16 %v3875
        %v3898 = vunpack.c.l.b16 %v3876
        %v3899 = vunpack.c.l.b16 %v3877
        %v3900 = vunpack.c.l.b16 %v3878
        %v3901 = vunpack.c.l.b16 %v3879
        %v3902 = vpack.c.b16 %v3892, %v3891
        %v3903 = vpack.c.b16 %v3894, %v3893
        %v3904 = vpack.c.b16 %v3896, %v3895
        %v3905 = vpack.c.b16 %v3898, %v3897
        %v3906 = vpack.c.b16 %v3900, %v3899
        %v3907 = vpack.c.b16 %v3901, %v3901
        %v3914 = vsel %vm3154, %v3867, 0
        %v3917 = vsel %vm3170, %v3907, 0
        %3919 = vmatprep.subr.bf16.mxu0 0
        %3920 = vmatpush1.bf16.msra.mxu0 %v3902
        %3921 = vmatprep.subr.bf16.mxu0 0
        %3922 = vmatpush1.bf16.msra.mxu0 %v3903
        %3923 = vmatprep.subr.bf16.mxu0 0
        %3924 = vmatpush1.bf16.msra.mxu0 %v3904
        %3925 = vmatprep.subr.bf16.mxu0 0
        %3926 = vmatpush1.bf16.msra.mxu0 %v3905
        %3927 = vmatprep.subr.bf16.mxu0 0
        %3928 = vmatpush1.bf16.msra.mxu0 %v3906
        %3929 = vmatprep.subr.bf16.mxu0 0
        %3930 = vmatpush1.bf16.msra.mxu0 %v3917
        %3931 = vmatprep.subr.bf16.mxu0 0
        %3932 = vmatpush1.bf16.msra.mxu0 0
        %3933 = vmatprep.subr.bf16.mxu0 0
        %3934 = vmatpush1.bf16.msra.mxu0 0
        %3935 = vmatprep.subr.bf16.mxu0 0
        %3936 = vmatpush1.bf16.msra.mxu0 0
        %3937 = vmatprep.subr.bf16.mxu0 0
        %3938 = vmatpush1.bf16.msra.mxu0 0
        %3939 = vmatprep.subr.bf16.mxu0 0
        %3940 = vmatpush1.bf16.msra.mxu0 0
        %3941 = vmatprep.subr.bf16.mxu0 0
        %3942 = vmatpush1.bf16.msra.mxu0 0
        %3943 = vmatprep.subr.bf16.mxu0 0
        %3944 = vmatpush1.bf16.msra.mxu0 0
        %3945 = vmatprep.subr.bf16.mxu0 0
        %3946 = vmatpush1.bf16.msra.mxu0 0
        %3947 = vmatprep.subr.bf16.mxu0 0
        %3948 = vmatpush1.bf16.msra.mxu0 0
        %3949 = vmatprep.subr.bf16.mxu0 0
        %3950 = vmatpush1.bf16.msra.mxu0 0
        %3951 = vmatprep.mubr.bf16.mxu0 0
        %3952 = vmatmul.mubr.bf16.gmra.mrb[0].mxu0 %v3159
        %v3953 = vpop.f32.mrb[0].mxu0
        %v3954 = vadd.f32 0.0, %v3953
        %v3955 = vpop.f32.mrb[0].mxu0
        %v3956 = vpop.f32.mrb[0].mxu0
        %v3957 = vadd.f32 0.0, %v3956
        %v3958 = vpop.f32.mrb[0].mxu0
        %3959 = vmatprep.mubr.bf16.mxu0 0
        %3960 = vmatmul.mubr.bf16.gmra.mrb[0].mxu0 %v3162
        %v3961 = vpop.f32.mrb[0].mxu0
        %v3962 = vadd.f32 0.0, %v3961
        %v3963 = vpop.f32.mrb[0].mxu0
        %v3964 = vpop.f32.mrb[0].mxu0
        %v3965 = vadd.f32 0.0, %v3964
        %v3966 = vpop.f32.mrb[0].mxu0
        %3967 = vmatprep.mubr.bf16.mxu0 0
        %3968 = vmatmul.mubr.bf16.gmra.mrb[0].mxu0 %v3165
        %v3969 = vpop.f32.mrb[0].mxu0
        %v3970 = vadd.f32 0.0, %v3969
        %v3971 = vpop.f32.mrb[0].mxu0
        %v3972 = vpop.f32.mrb[0].mxu0
        %v3973 = vadd.f32 0.0, %v3972
        %v3974 = vpop.f32.mrb[0].mxu0
        %3975 = vmatprep.mubr.bf16.mxu0 0
        %3976 = vmatmul.mubr.bf16.gmra.mrb[0].mxu0 %v3168
        %v3977 = vpop.f32.mrb[0].mxu0
        %v3978 = vadd.f32 0.0, %v3977
        %v3979 = vpop.f32.mrb[0].mxu0
        %v3980 = vpop.f32.mrb[0].mxu0
        %v3981 = vadd.f32 0.0, %v3980
        %v3982 = vpop.f32.mrb[0].mxu0
        %3983 = vmatprep.mubr.bf16.mxu0 0
        %3984 = vmatmul.mubr.bf16.gmra.mrb[0].mxu0 %v3914
        %v3985 = vpop.f32.mrb[0].mxu0
        %v3986 = vadd.f32 0.0, %v3985
        %v3987 = vpop.f32.mrb[0].mxu0
        %v3988 = vpop.f32.mrb[0].mxu0
        %v3989 = vadd.f32 0.0, %v3988
        %v3990 = vpop.f32.mrb[0].mxu0
        %3991 = vdwg.mxu0
        %v3992 = vadd.f32 %v3726, %v3954
        %v3993 = vadd.f32 %v3727, %v3957
        %v3994 = vadd.f32 %v3728, %v3962
        %v3995 = vadd.f32 %v3729, %v3965
        %v3996 = vadd.f32 %v3730, %v3970
        %v3997 = vadd.f32 %v3731, %v3973
        %v3998 = vadd.f32 %v3732, %v3978
        %v3999 = vadd.f32 %v3733, %v3981
        %v4000 = vadd.f32 %v3734, %v3986
        %v4001 = vadd.f32 %v3735, %v3989
        %s4002 = scalar_lea.vmem %s2, 308
        %v4003 = vld [vmem:[%s4002] sm:$0xf]
        %v4004 = vld [vmem:[%s4002 + $0x4] sm:$0xf]
        %v4005 = vld [vmem:[%s4002 + $0x8] sm:$0xf]
        %v4006 = vld [vmem:[%s4002 + $0xc] sm:$0xf]
        %v4007 = vld [vmem:[%s4002 + $0x10] sm:$0xf]
        %v4008 = vld [vmem:[%s4002 + $0x14] sm:$0xf]
        %v4009 = vld [vmem:[%s4002 + $0x18] sm:$0xf]
        %v4010 = vld [vmem:[%s4002 + $0x1c] sm:$0xf]
        %v4011 = vld [vmem:[%s4002 + $0x20] sm:$0xf]
        %v4012 = vld [vmem:[%s4002 + $0x24] sm:$0xf]
        %v4013 = vld [vmem:[%s4002 + $0x28] sm:$0x3]
        %v4025 = vunpack.c.l.b16 %v4003
        %v4026 = vunpack.c.l.b16 %v4004
        %v4027 = vunpack.c.l.b16 %v4005
        %v4028 = vunpack.c.l.b16 %v4006
        %v4029 = vunpack.c.l.b16 %v4007
        %v4030 = vunpack.c.l.b16 %v4008
        %v4031 = vunpack.c.l.b16 %v4009
        %v4032 = vunpack.c.l.b16 %v4010
        %v4033 = vunpack.c.l.b16 %v4011
        %v4034 = vunpack.c.l.b16 %v4012
        %v4035 = vunpack.c.l.b16 %v4013
        %v4036 = vpack.c.b16 %v4026, %v4025
        %v4037 = vpack.c.b16 %v4028, %v4027
        %v4038 = vpack.c.b16 %v4030, %v4029
        %v4039 = vpack.c.b16 %v4032, %v4031
        %v4040 = vpack.c.b16 %v4034, %v4033
        %v4041 = vpack.c.b16 %v4035, %v4035
        %v4048 = vsel %vm3170, %v4041, 0
        %4050 = vmatprep.subr.bf16.mxu0 0
        %4051 = vmatpush1.bf16.msra.mxu0 %v4036
        %4052 = vmatprep.subr.bf16.mxu0 0
        %4053 = vmatpush1.bf16.msra.mxu0 %v4037
        %4054 = vmatprep.subr.bf16.mxu0 0
        %4055 = vmatpush1.bf16.msra.mxu0 %v4038
        %4056 = vmatprep.subr.bf16.mxu0 0
        %4057 = vmatpush1.bf16.msra.mxu0 %v4039
        %4058 = vmatprep.subr.bf16.mxu0 0
        %4059 = vmatpush1.bf16.msra.mxu0 %v4040
        %4060 = vmatprep.subr.bf16.mxu0 0
        %4061 = vmatpush1.bf16.msra.mxu0 %v4048
        %4062 = vmatprep.subr.bf16.mxu0 0
        %4063 = vmatpush1.bf16.msra.mxu0 0
        %4064 = vmatprep.subr.bf16.mxu0 0
        %4065 = vmatpush1.bf16.msra.mxu0 0
        %4066 = vmatprep.subr.bf16.mxu0 0
        %4067 = vmatpush1.bf16.msra.mxu0 0
        %4068 = vmatprep.subr.bf16.mxu0 0
        %4069 = vmatpush1.bf16.msra.mxu0 0
        %4070 = vmatprep.subr.bf16.mxu0 0
        %4071 = vmatpush1.bf16.msra.mxu0 0
        %4072 = vmatprep.subr.bf16.mxu0 0
        %4073 = vmatpush1.bf16.msra.mxu0 0
        %4074 = vmatprep.subr.bf16.mxu0 0
        %4075 = vmatpush1.bf16.msra.mxu0 0
        %4076 = vmatprep.subr.bf16.mxu0 0
        %4077 = vmatpush1.bf16.msra.mxu0 0
        %4078 = vmatprep.subr.bf16.mxu0 0
        %4079 = vmatpush1.bf16.msra.mxu0 0
        %4080 = vmatprep.subr.bf16.mxu0 0
        %4081 = vmatpush1.bf16.msra.mxu0 0
        %4082 = vmatprep.mubr.bf16.mxu0 0
        %4083 = vmatmul.mubr.bf16.gmra.mrb[0].mxu0 %v3159
        %v4084 = vpop.f32.mrb[0].mxu0
        %v4085 = vadd.f32 0.0, %v4084
        %v4086 = vpop.f32.mrb[0].mxu0
        %v4087 = vpop.f32.mrb[0].mxu0
        %v4088 = vadd.f32 0.0, %v4087
        %v4089 = vpop.f32.mrb[0].mxu0
        %4090 = vmatprep.mubr.bf16.mxu0 0
        %4091 = vmatmul.mubr.bf16.gmra.mrb[0].mxu0 %v3162
        %v4092 = vpop.f32.mrb[0].mxu0
        %v4093 = vadd.f32 0.0, %v4092
        %v4094 = vpop.f32.mrb[0].mxu0
        %v4095 = vpop.f32.mrb[0].mxu0
        %v4096 = vadd.f32 0.0, %v4095
        %v4097 = vpop.f32.mrb[0].mxu0
        %4098 = vmatprep.mubr.bf16.mxu0 0
        %4099 = vmatmul.mubr.bf16.gmra.mrb[0].mxu0 %v3165
        %v4100 = vpop.f32.mrb[0].mxu0
        %v4101 = vadd.f32 0.0, %v4100
        %v4102 = vpop.f32.mrb[0].mxu0
        %v4103 = vpop.f32.mrb[0].mxu0
        %v4104 = vadd.f32 0.0, %v4103
        %v4105 = vpop.f32.mrb[0].mxu0
        %4106 = vmatprep.mubr.bf16.mxu0 0
        %4107 = vmatmul.mubr.bf16.gmra.mrb[0].mxu0 %v3168
        %v4108 = vpop.f32.mrb[0].mxu0
        %v4109 = vadd.f32 0.0, %v4108
        %v4110 = vpop.f32.mrb[0].mxu0
        %v4111 = vpop.f32.mrb[0].mxu0
        %v4112 = vadd.f32 0.0, %v4111
        %v4113 = vpop.f32.mrb[0].mxu0
        %4114 = vmatprep.mubr.bf16.mxu0 0
        %4115 = vmatmul.mubr.bf16.gmra.mrb[0].mxu0 %v3914
        %v4116 = vpop.f32.mrb[0].mxu0
        %v4117 = vadd.f32 0.0, %v4116
        %v4118 = vpop.f32.mrb[0].mxu0
        %v4119 = vpop.f32.mrb[0].mxu0
        %v4120 = vadd.f32 0.0, %v4119
        %v4121 = vpop.f32.mrb[0].mxu0
        %4122 = vdwg.mxu0
        %v4123 = vadd.f32 %v3857, %v4085
        %v4124 = vadd.f32 %v3858, %v4088
        %v4125 = vadd.f32 %v3859, %v4093
        %v4126 = vadd.f32 %v3860, %v4096
        %v4127 = vadd.f32 %v3861, %v4101
        %v4128 = vadd.f32 %v3862, %v4104
        %v4129 = vadd.f32 %v3863, %v4109
        %v4130 = vadd.f32 %v3864, %v4112
        %v4131 = vadd.f32 %v3865, %v4117
        %v4132 = vadd.f32 %v3866, %v4120
        %v4133 = vpack.c.bf16 %v3075, %v3074
        %s4134 = scalar_lea.vmem %s2, 352
        %v4135 = vld [vmem:[%s4134] sm:$0xf]
        %v4136 = vld [vmem:[%s4134 + $0x4] sm:$0xf]
        %v4137 = vld [vmem:[%s4134 + $0x8] sm:$0xf]
        %v4138 = vld [vmem:[%s4134 + $0xc] sm:$0xf]
        %v4139 = vld [vmem:[%s4134 + $0x10] sm:$0xf]
        %v4140 = vld [vmem:[%s4134 + $0x14] sm:$0xf]
        %v4141 = vld [vmem:[%s4134 + $0x18] sm:$0xf]
        %v4142 = vld [vmem:[%s4134 + $0x1c] sm:$0xf]
        %v4143 = vld [vmem:[%s4134 + $0x20] sm:$0xf]
        %v4144 = vld [vmem:[%s4134 + $0x24] sm:$0xf]
        %v4145 = vld [vmem:[%s4134 + $0x28] sm:$0x3]
        %v4157 = vunpack.c.l.b16 %v4135
        %v4158 = vunpack.c.l.b16 %v4136
        %v4159 = vunpack.c.l.b16 %v4137
        %v4160 = vunpack.c.l.b16 %v4138
        %v4161 = vunpack.c.l.b16 %v4139
        %v4162 = vunpack.c.l.b16 %v4140
        %v4163 = vunpack.c.l.b16 %v4141
        %v4164 = vunpack.c.l.b16 %v4142
        %v4165 = vunpack.c.l.b16 %v4143
        %v4166 = vunpack.c.l.b16 %v4144
        %v4167 = vunpack.c.l.b16 %v4145
        %v4168 = vpack.c.b16 %v4158, %v4157
        %v4169 = vpack.c.b16 %v4160, %v4159
        %v4170 = vpack.c.b16 %v4162, %v4161
        %v4171 = vpack.c.b16 %v4164, %v4163
        %v4172 = vpack.c.b16 %v4166, %v4165
        %v4173 = vpack.c.b16 %v4167, %v4167
        %v4180 = vsel %vm3154, %v4133, 0
        %v4183 = vsel %vm3170, %v4173, 0
        %4185 = vmatprep.subr.bf16.mxu0 0
        %4186 = vmatpush1.bf16.msra.mxu0 %v4168
        %4187 = vmatprep.subr.bf16.mxu0 0
        %4188 = vmatpush1.bf16.msra.mxu0 %v4169
        %4189 = vmatprep.subr.bf16.mxu0 0
        %4190 = vmatpush1.bf16.msra.mxu0 %v4170
        %4191 = vmatprep.subr.bf16.mxu0 0
        %4192 = vmatpush1.bf16.msra.mxu0 %v4171
        %4193 = vmatprep.subr.bf16.mxu0 0
        %4194 = vmatpush1.bf16.msra.mxu0 %v4172
        %4195 = vmatprep.subr.bf16.mxu0 0
        %4196 = vmatpush1.bf16.msra.mxu0 %v4183
        %4197 = vmatprep.subr.bf16.mxu0 0
        %4198 = vmatpush1.bf16.msra.mxu0 0
        %4199 = vmatprep.subr.bf16.mxu0 0
        %4200 = vmatpush1.bf16.msra.mxu0 0
        %4201 = vmatprep.subr.bf16.mxu0 0
        %4202 = vmatpush1.bf16.msra.mxu0 0
        %4203 = vmatprep.subr.bf16.mxu0 0
        %4204 = vmatpush1.bf16.msra.mxu0 0
        %4205 = vmatprep.subr.bf16.mxu0 0
        %4206 = vmatpush1.bf16.msra.mxu0 0
        %4207 = vmatprep.subr.bf16.mxu0 0
        %4208 = vmatpush1.bf16.msra.mxu0 0
        %4209 = vmatprep.subr.bf16.mxu0 0
        %4210 = vmatpush1.bf16.msra.mxu0 0
        %4211 = vmatprep.subr.bf16.mxu0 0
        %4212 = vmatpush1.bf16.msra.mxu0 0
        %4213 = vmatprep.subr.bf16.mxu0 0
        %4214 = vmatpush1.bf16.msra.mxu0 0
        %4215 = vmatprep.subr.bf16.mxu0 0
        %4216 = vmatpush1.bf16.msra.mxu0 0
        %4217 = vmatprep.mubr.bf16.mxu0 0
        %4218 = vmatmul.mubr.bf16.gmra.mrb[0].mxu0 %v3287
        %v4219 = vpop.f32.mrb[0].mxu0
        %v4220 = vadd.f32 0.0, %v4219
        %v4221 = vpop.f32.mrb[0].mxu0
        %v4222 = vpop.f32.mrb[0].mxu0
        %v4223 = vadd.f32 0.0, %v4222
        %v4224 = vpop.f32.mrb[0].mxu0
        %4225 = vmatprep.mubr.bf16.mxu0 0
        %4226 = vmatmul.mubr.bf16.gmra.mrb[0].mxu0 %v3290
        %v4227 = vpop.f32.mrb[0].mxu0
        %v4228 = vadd.f32 0.0, %v4227
        %v4229 = vpop.f32.mrb[0].mxu0
        %v4230 = vpop.f32.mrb[0].mxu0
        %v4231 = vadd.f32 0.0, %v4230
        %v4232 = vpop.f32.mrb[0].mxu0
        %4233 = vmatprep.mubr.bf16.mxu0 0
        %4234 = vmatmul.mubr.bf16.gmra.mrb[0].mxu0 %v3293
        %v4235 = vpop.f32.mrb[0].mxu0
        %v4236 = vadd.f32 0.0, %v4235
        %v4237 = vpop.f32.mrb[0].mxu0
        %v4238 = vpop.f32.mrb[0].mxu0
        %v4239 = vadd.f32 0.0, %v4238
        %v4240 = vpop.f32.mrb[0].mxu0
        %4241 = vmatprep.mubr.bf16.mxu0 0
        %4242 = vmatmul.mubr.bf16.gmra.mrb[0].mxu0 %v3648
        %v4243 = vpop.f32.mrb[0].mxu0
        %v4244 = vadd.f32 0.0, %v4243
        %v4245 = vpop.f32.mrb[0].mxu0
        %v4246 = vpop.f32.mrb[0].mxu0
        %v4247 = vadd.f32 0.0, %v4246
        %v4248 = vpop.f32.mrb[0].mxu0
        %4249 = vmatprep.mubr.bf16.mxu0 0
        %4250 = vmatmul.mubr.bf16.gmra.mrb[0].mxu0 %v4180
        %v4251 = vpop.f32.mrb[0].mxu0
        %v4252 = vadd.f32 0.0, %v4251
        %v4253 = vpop.f32.mrb[0].mxu0
        %v4254 = vpop.f32.mrb[0].mxu0
        %v4255 = vadd.f32 0.0, %v4254
        %v4256 = vpop.f32.mrb[0].mxu0
        %4257 = vdwg.mxu0
        %v4258 = vadd.f32 %v3992, %v4220
        %v4259 = vadd.f32 %v3993, %v4223
        %v4260 = vadd.f32 %v3994, %v4228
        %v4261 = vadd.f32 %v3995, %v4231
        %v4262 = vadd.f32 %v3996, %v4236
        %v4263 = vadd.f32 %v3997, %v4239
        %v4264 = vadd.f32 %v3998, %v4244
        %v4265 = vadd.f32 %v3999, %v4247
        %v4266 = vadd.f32 %v4000, %v4252
        %v4267 = vadd.f32 %v4001, %v4255
        %s4268 = scalar_lea.vmem %s2, 396
        %v4269 = vld [vmem:[%s4268] sm:$0xf]
        %v4270 = vld [vmem:[%s4268 + $0x4] sm:$0xf]
        %v4271 = vld [vmem:[%s4268 + $0x8] sm:$0xf]
        %v4272 = vld [vmem:[%s4268 + $0xc] sm:$0xf]
        %v4273 = vld [vmem:[%s4268 + $0x10] sm:$0xf]
        %v4274 = vld [vmem:[%s4268 + $0x14] sm:$0xf]
        %v4275 = vld [vmem:[%s4268 + $0x18] sm:$0xf]
        %v4276 = vld [vmem:[%s4268 + $0x1c] sm:$0xf]
        %v4277 = vld [vmem:[%s4268 + $0x20] sm:$0xf]
        %v4278 = vld [vmem:[%s4268 + $0x24] sm:$0xf]
        %v4279 = vld [vmem:[%s4268 + $0x28] sm:$0x3]
        %v4291 = vunpack.c.l.b16 %v4269
        %v4292 = vunpack.c.l.b16 %v4270
        %v4293 = vunpack.c.l.b16 %v4271
        %v4294 = vunpack.c.l.b16 %v4272
        %v4295 = vunpack.c.l.b16 %v4273
        %v4296 = vunpack.c.l.b16 %v4274
        %v4297 = vunpack.c.l.b16 %v4275
        %v4298 = vunpack.c.l.b16 %v4276
        %v4299 = vunpack.c.l.b16 %v4277
        %v4300 = vunpack.c.l.b16 %v4278
        %v4301 = vunpack.c.l.b16 %v4279
        %v4302 = vpack.c.b16 %v4292, %v4291
        %v4303 = vpack.c.b16 %v4294, %v4293
        %v4304 = vpack.c.b16 %v4296, %v4295
        %v4305 = vpack.c.b16 %v4298, %v4297
        %v4306 = vpack.c.b16 %v4300, %v4299
        %v4307 = vpack.c.b16 %v4301, %v4301
        %v4314 = vsel %vm3170, %v4307, 0
        %4316 = vmatprep.subr.bf16.mxu0 0
        %4317 = vmatpush1.bf16.msra.mxu0 %v4302
        %4318 = vmatprep.subr.bf16.mxu0 0
        %4319 = vmatpush1.bf16.msra.mxu0 %v4303
        %4320 = vmatprep.subr.bf16.mxu0 0
        %4321 = vmatpush1.bf16.msra.mxu0 %v4304
        %4322 = vmatprep.subr.bf16.mxu0 0
        %4323 = vmatpush1.bf16.msra.mxu0 %v4305
        %4324 = vmatprep.subr.bf16.mxu0 0
        %4325 = vmatpush1.bf16.msra.mxu0 %v4306
        %4326 = vmatprep.subr.bf16.mxu0 0
        %4327 = vmatpush1.bf16.msra.mxu0 %v4314
        %4328 = vmatprep.subr.bf16.mxu0 0
        %4329 = vmatpush1.bf16.msra.mxu0 0
        %4330 = vmatprep.subr.bf16.mxu0 0
        %4331 = vmatpush1.bf16.msra.mxu0 0
        %4332 = vmatprep.subr.bf16.mxu0 0
        %4333 = vmatpush1.bf16.msra.mxu0 0
        %4334 = vmatprep.subr.bf16.mxu0 0
        %4335 = vmatpush1.bf16.msra.mxu0 0
        %4336 = vmatprep.subr.bf16.mxu0 0
        %4337 = vmatpush1.bf16.msra.mxu0 0
        %4338 = vmatprep.subr.bf16.mxu0 0
        %4339 = vmatpush1.bf16.msra.mxu0 0
        %4340 = vmatprep.subr.bf16.mxu0 0
        %4341 = vmatpush1.bf16.msra.mxu0 0
        %4342 = vmatprep.subr.bf16.mxu0 0
        %4343 = vmatpush1.bf16.msra.mxu0 0
        %4344 = vmatprep.subr.bf16.mxu0 0
        %4345 = vmatpush1.bf16.msra.mxu0 0
        %4346 = vmatprep.subr.bf16.mxu0 0
        %4347 = vmatpush1.bf16.msra.mxu0 0
        %4348 = vmatprep.mubr.bf16.mxu0 0
        %4349 = vmatmul.mubr.bf16.gmra.mrb[0].mxu0 %v3287
        %v4350 = vpop.f32.mrb[0].mxu0
        %v4351 = vadd.f32 0.0, %v4350
        %v4352 = vpop.f32.mrb[0].mxu0
        %v4353 = vpop.f32.mrb[0].mxu0
        %v4354 = vadd.f32 0.0, %v4353
        %v4355 = vpop.f32.mrb[0].mxu0
        %4356 = vmatprep.mubr.bf16.mxu0 0
        %4357 = vmatmul.mubr.bf16.gmra.mrb[0].mxu0 %v3290
        %v4358 = vpop.f32.mrb[0].mxu0
        %v4359 = vadd.f32 0.0, %v4358
        %v4360 = vpop.f32.mrb[0].mxu0
        %v4361 = vpop.f32.mrb[0].mxu0
        %v4362 = vadd.f32 0.0, %v4361
        %v4363 = vpop.f32.mrb[0].mxu0
        %4364 = vmatprep.mubr.bf16.mxu0 0
        %4365 = vmatmul.mubr.bf16.gmra.mrb[0].mxu0 %v3293
        %v4366 = vpop.f32.mrb[0].mxu0
        %v4367 = vadd.f32 0.0, %v4366
        %v4368 = vpop.f32.mrb[0].mxu0
        %v4369 = vpop.f32.mrb[0].mxu0
        %v4370 = vadd.f32 0.0, %v4369
        %v4371 = vpop.f32.mrb[0].mxu0
        %4372 = vmatprep.mubr.bf16.mxu0 0
        %4373 = vmatmul.mubr.bf16.gmra.mrb[0].mxu0 %v3648
        %v4374 = vpop.f32.mrb[0].mxu0
        %v4375 = vadd.f32 0.0, %v4374
        %v4376 = vpop.f32.mrb[0].mxu0
        %v4377 = vpop.f32.mrb[0].mxu0
        %v4378 = vadd.f32 0.0, %v4377
        %v4379 = vpop.f32.mrb[0].mxu0
        %4380 = vmatprep.mubr.bf16.mxu0 0
        %4381 = vmatmul.mubr.bf16.gmra.mrb[0].mxu0 %v4180
        %v4382 = vpop.f32.mrb[0].mxu0
        %v4383 = vadd.f32 0.0, %v4382
        %v4384 = vpop.f32.mrb[0].mxu0
        %v4385 = vpop.f32.mrb[0].mxu0
        %v4386 = vadd.f32 0.0, %v4385
        %v4387 = vpop.f32.mrb[0].mxu0
        %4388 = vdwg.mxu0
        %v4389 = vadd.f32 %v4123, %v4351
        %v4390 = vadd.f32 %v4124, %v4354
        %v4391 = vadd.f32 %v4125, %v4359
        %v4392 = vadd.f32 %v4126, %v4362
        %v4393 = vadd.f32 %v4127, %v4367
        %v4394 = vadd.f32 %v4128, %v4370
        %v4395 = vadd.f32 %v4129, %v4375
        %v4396 = vadd.f32 %v4130, %v4378
        %v4397 = vadd.f32 %v4131, %v4383
        %v4398 = vadd.f32 %v4132, %v4386
        %v4399 = vlaneseq
        %v4400 = vshrl.u32 %v4399, 7
        %v4401 = vsub.s32 0, %v4400
        %v4402 = vrot.slane %v410, %v4401
        %v4403 = vadd.f32 %v4258, %v4402
        %v4404 = vadd.f32 %v4259, %v4402
        %v4405 = vadd.f32 %v4260, %v4402
        %v4406 = vadd.f32 %v4261, %v4402
        %v4407 = vadd.f32 %v4262, %v4402
        %v4408 = vadd.f32 %v4263, %v4402
        %v4409 = vadd.f32 %v4264, %v4402
        %v4410 = vadd.f32 %v4265, %v4402
        %v4411 = vadd.f32 %v4266, %v4402
        %v4412 = vadd.f32 %v4267, %v4402
        %v4413 = vadd.f32 %v4389, %v4402
        %v4414 = vadd.f32 %v4390, %v4402
        %v4415 = vadd.f32 %v4391, %v4402
        %v4416 = vadd.f32 %v4392, %v4402
        %v4417 = vadd.f32 %v4393, %v4402
        %v4418 = vadd.f32 %v4394, %v4402
        %v4419 = vadd.f32 %v4395, %v4402
        %v4420 = vadd.f32 %v4396, %v4402
        %v4421 = vadd.f32 %v4397, %v4402
        %v4422 = vadd.f32 %v4398, %v4402
        %v4423 = vmax.f32 %v4403, %v4413
        %v4424 = vmax.f32 %v4404, %v4414
        %v4425 = vmax.f32 %v4405, %v4415
        %v4426 = vmax.f32 %v4406, %v4416
        %v4427 = vmax.f32 %v4407, %v4417
        %v4428 = vmax.f32 %v4408, %v4418
        %v4429 = vmax.f32 %v4409, %v4419
        %v4430 = vmax.f32 %v4410, %v4420
        %v4431 = vmax.f32 %v4411, %v4421
        %v4432 = vmax.f32 %v4412, %v4422
        %v4433 = vmax.f32 %v4423, 0.0
        %v4434 = vmax.f32 %v4424, 0.0
        %v4435 = vmax.f32 %v4425, 0.0
        %v4436 = vmax.f32 %v4426, 0.0
        %v4437 = vmax.f32 %v4427, 0.0
        %v4438 = vmax.f32 %v4428, 0.0
        %v4439 = vmax.f32 %v4429, 0.0
        %v4440 = vmax.f32 %v4430, 0.0
        %v4441 = vmax.f32 %v4431, 0.0
        %v4442 = vmax.f32 %v4432, 0.0
        %v4443 = vmax.f32 %v4433, %v4434
        %v4444 = vmax.f32 %v4435, %v4436
        %v4445 = vmax.f32 %v4437, %v4438
        %v4446 = vmax.f32 %v4439, %v4440
        %v4447 = vmax.f32 %v4441, %v4442
        %v4448 = vpack.c.bf16 %v4443, %v4443
        %v4449 = vld [vmem:[%s3] sm:$0xf]
        %v4450 = vld [vmem:[%s3 + $0x4] sm:$0xf]
        %v4451 = vld [vmem:[%s3 + $0x8] sm:$0xf]
        %v4452 = vld [vmem:[%s3 + $0xc] sm:$0xf]
        %v4453 = vld [vmem:[%s3 + $0x10] sm:$0xf]
        %v4454 = vld [vmem:[%s3 + $0x14] sm:$0xf]
        %v4455 = vld [vmem:[%s3 + $0x18] sm:$0xf]
        %v4456 = vld [vmem:[%s3 + $0x1c] sm:$0xf]
        %v4457 = vld [vmem:[%s3 + $0x20] sm:$0xf]
        %v4458 = vld [vmem:[%s3 + $0x24] sm:$0xf]
        %v4459 = vpack.c.bf16 %v4444, %v4444
        %s4460 = scalar_lea.vmem %s3, 40
        %v4461 = vld [vmem:[%s4460] sm:$0xf]
        %v4462 = vld [vmem:[%s4460 + $0x4] sm:$0xf]
        %v4463 = vld [vmem:[%s4460 + $0x8] sm:$0xf]
        %v4464 = vld [vmem:[%s4460 + $0xc] sm:$0xf]
        %v4465 = vld [vmem:[%s4460 + $0x10] sm:$0xf]
        %v4466 = vld [vmem:[%s4460 + $0x14] sm:$0xf]
        %v4467 = vld [vmem:[%s4460 + $0x18] sm:$0xf]
        %v4468 = vld [vmem:[%s4460 + $0x1c] sm:$0xf]
        %v4469 = vld [vmem:[%s4460 + $0x20] sm:$0xf]
        %v4470 = vld [vmem:[%s4460 + $0x24] sm:$0xf]
        %v4481 = vunpack.c.l.b16 %v4461
        %v4482 = vunpack.c.l.b16 %v4462
        %v4483 = vunpack.c.l.b16 %v4463
        %v4484 = vunpack.c.l.b16 %v4464
        %v4485 = vunpack.c.l.b16 %v4465
        %v4486 = vunpack.c.l.b16 %v4466
        %v4487 = vunpack.c.l.b16 %v4467
        %v4488 = vunpack.c.l.b16 %v4468
        %v4489 = vunpack.c.l.b16 %v4469
        %v4490 = vunpack.c.l.b16 %v4470
        %v4491 = vpack.c.b16 %v4482, %v4481
        %v4492 = vpack.c.b16 %v4484, %v4483
        %v4493 = vpack.c.b16 %v4486, %v4485
        %v4494 = vpack.c.b16 %v4488, %v4487
        %v4495 = vpack.c.b16 %v4490, %v4489
        %vm4501 = vcmask 654336
        %v4503 = vsel %vm4501, %v4459, 0
        %4505 = vmatprep.subr.bf16.mxu0 0
        %4506 = vmatpush1.bf16.msra.mxu0 %v4491
        %4507 = vmatprep.subr.bf16.mxu0 0
        %4508 = vmatpush1.bf16.msra.mxu0 %v4492
        %4509 = vmatprep.subr.bf16.mxu0 0
        %4510 = vmatpush1.bf16.msra.mxu0 %v4493
        %4511 = vmatprep.subr.bf16.mxu0 0
        %4512 = vmatpush1.bf16.msra.mxu0 %v4494
        %4513 = vmatprep.subr.bf16.mxu0 0
        %4514 = vmatpush1.bf16.msra.mxu0 %v4495
        %4515 = vmatprep.subr.bf16.mxu0 0
        %4516 = vmatpush1.bf16.msra.mxu0 0
        %4517 = vmatprep.subr.bf16.mxu0 0
        %4518 = vmatpush1.bf16.msra.mxu0 0
        %4519 = vmatprep.subr.bf16.mxu0 0
        %4520 = vmatpush1.bf16.msra.mxu0 0
        %4521 = vmatprep.subr.bf16.mxu0 0
        %4522 = vmatpush1.bf16.msra.mxu0 0
        %4523 = vmatprep.subr.bf16.mxu0 0
        %4524 = vmatpush1.bf16.msra.mxu0 0
        %4525 = vmatprep.subr.bf16.mxu0 0
        %4526 = vmatpush1.bf16.msra.mxu0 0
        %4527 = vmatprep.subr.bf16.mxu0 0
        %4528 = vmatpush1.bf16.msra.mxu0 0
        %4529 = vmatprep.subr.bf16.mxu0 0
        %4530 = vmatpush1.bf16.msra.mxu0 0
        %4531 = vmatprep.subr.bf16.mxu0 0
        %4532 = vmatpush1.bf16.msra.mxu0 0
        %4533 = vmatprep.subr.bf16.mxu0 0
        %4534 = vmatpush1.bf16.msra.mxu0 0
        %4535 = vmatprep.subr.bf16.mxu0 0
        %4536 = vmatpush1.bf16.msra.mxu0 0
        %4537 = vmatprep.mubr.bf16.mxu0 0
        %4538 = vmatmul.mubr.bf16.gmra.mrb[0].mxu0 %v4503
        %v4539 = vpop.f32.mrb[0].mxu0
        %v4540 = vadd.f32 0.0, %v4539
        %v4541 = vpop.f32.mrb[0].mxu0
        %v4542 = vpop.f32.mrb[0].mxu0
        %v4543 = vpop.f32.mrb[0].mxu0
        %4544 = vdwg.mxu0
        %v4555 = vunpack.c.l.b16 %v4449
        %v4556 = vunpack.c.l.b16 %v4450
        %v4557 = vunpack.c.l.b16 %v4451
        %v4558 = vunpack.c.l.b16 %v4452
        %v4559 = vunpack.c.l.b16 %v4453
        %v4560 = vunpack.c.l.b16 %v4454
        %v4561 = vunpack.c.l.b16 %v4455
        %v4562 = vunpack.c.l.b16 %v4456
        %v4563 = vunpack.c.l.b16 %v4457
        %v4564 = vunpack.c.l.b16 %v4458
        %v4565 = vpack.c.b16 %v4556, %v4555
        %v4566 = vpack.c.b16 %v4558, %v4557
        %v4567 = vpack.c.b16 %v4560, %v4559
        %v4568 = vpack.c.b16 %v4562, %v4561
        %v4569 = vpack.c.b16 %v4564, %v4563
        %v4576 = vsel %vm4501, %v4448, 0
        %4578 = vmatprep.subr.bf16.mxu0 0
        %4579 = vmatpush1.bf16.msra.mxu0 %v4565
        %4580 = vmatprep.subr.bf16.mxu0 0
        %4581 = vmatpush1.bf16.msra.mxu0 %v4566
        %4582 = vmatprep.subr.bf16.mxu0 0
        %4583 = vmatpush1.bf16.msra.mxu0 %v4567
        %4584 = vmatprep.subr.bf16.mxu0 0
        %4585 = vmatpush1.bf16.msra.mxu0 %v4568
        %4586 = vmatprep.subr.bf16.mxu0 0
        %4587 = vmatpush1.bf16.msra.mxu0 %v4569
        %4588 = vmatprep.subr.bf16.mxu0 0
        %4589 = vmatpush1.bf16.msra.mxu0 0
        %4590 = vmatprep.subr.bf16.mxu0 0
        %4591 = vmatpush1.bf16.msra.mxu0 0
        %4592 = vmatprep.subr.bf16.mxu0 0
        %4593 = vmatpush1.bf16.msra.mxu0 0
        %4594 = vmatprep.subr.bf16.mxu0 0
        %4595 = vmatpush1.bf16.msra.mxu0 0
        %4596 = vmatprep.subr.bf16.mxu0 0
        %4597 = vmatpush1.bf16.msra.mxu0 0
        %4598 = vmatprep.subr.bf16.mxu0 0
        %4599 = vmatpush1.bf16.msra.mxu0 0
        %4600 = vmatprep.subr.bf16.mxu0 0
        %4601 = vmatpush1.bf16.msra.mxu0 0
        %4602 = vmatprep.subr.bf16.mxu0 0
        %4603 = vmatpush1.bf16.msra.mxu0 0
        %4604 = vmatprep.subr.bf16.mxu0 0
        %4605 = vmatpush1.bf16.msra.mxu0 0
        %4606 = vmatprep.subr.bf16.mxu0 0
        %4607 = vmatpush1.bf16.msra.mxu0 0
        %4608 = vmatprep.subr.bf16.mxu0 0
        %4609 = vmatpush1.bf16.msra.mxu0 0
        %4610 = vmatprep.mubr.bf16.mxu0 0
        %4611 = vmatmul.mubr.bf16.gmra.mrb[0].mxu0 %v4576
        %v4612 = vpop.f32.mrb[0].mxu0
        %v4613 = vadd.f32 %v4540, %v4612
        %v4614 = vpop.f32.mrb[0].mxu0
        %v4615 = vpop.f32.mrb[0].mxu0
        %v4616 = vpop.f32.mrb[0].mxu0
        %4617 = vdwg.mxu0
        %v4618 = vpack.c.bf16 %v4445, %v4445
        %s4619 = scalar_lea.vmem %s3, 80
        %v4620 = vld [vmem:[%s4619] sm:$0xf]
        %v4621 = vld [vmem:[%s4619 + $0x4] sm:$0xf]
        %v4622 = vld [vmem:[%s4619 + $0x8] sm:$0xf]
        %v4623 = vld [vmem:[%s4619 + $0xc] sm:$0xf]
        %v4624 = vld [vmem:[%s4619 + $0x10] sm:$0xf]
        %v4625 = vld [vmem:[%s4619 + $0x14] sm:$0xf]
        %v4626 = vld [vmem:[%s4619 + $0x18] sm:$0xf]
        %v4627 = vld [vmem:[%s4619 + $0x1c] sm:$0xf]
        %v4628 = vld [vmem:[%s4619 + $0x20] sm:$0xf]
        %v4629 = vld [vmem:[%s4619 + $0x24] sm:$0xf]
        %v4640 = vunpack.c.l.b16 %v4620
        %v4641 = vunpack.c.l.b16 %v4621
        %v4642 = vunpack.c.l.b16 %v4622
        %v4643 = vunpack.c.l.b16 %v4623
        %v4644 = vunpack.c.l.b16 %v4624
        %v4645 = vunpack.c.l.b16 %v4625
        %v4646 = vunpack.c.l.b16 %v4626
        %v4647 = vunpack.c.l.b16 %v4627
        %v4648 = vunpack.c.l.b16 %v4628
        %v4649 = vunpack.c.l.b16 %v4629
        %v4650 = vpack.c.b16 %v4641, %v4640
        %v4651 = vpack.c.b16 %v4643, %v4642
        %v4652 = vpack.c.b16 %v4645, %v4644
        %v4653 = vpack.c.b16 %v4647, %v4646
        %v4654 = vpack.c.b16 %v4649, %v4648
        %v4661 = vsel %vm4501, %v4618, 0
        %4663 = vmatprep.subr.bf16.mxu0 0
        %4664 = vmatpush1.bf16.msra.mxu0 %v4650
        %4665 = vmatprep.subr.bf16.mxu0 0
        %4666 = vmatpush1.bf16.msra.mxu0 %v4651
        %4667 = vmatprep.subr.bf16.mxu0 0
        %4668 = vmatpush1.bf16.msra.mxu0 %v4652
        %4669 = vmatprep.subr.bf16.mxu0 0
        %4670 = vmatpush1.bf16.msra.mxu0 %v4653
        %4671 = vmatprep.subr.bf16.mxu0 0
        %4672 = vmatpush1.bf16.msra.mxu0 %v4654
        %4673 = vmatprep.subr.bf16.mxu0 0
        %4674 = vmatpush1.bf16.msra.mxu0 0
        %4675 = vmatprep.subr.bf16.mxu0 0
        %4676 = vmatpush1.bf16.msra.mxu0 0
        %4677 = vmatprep.subr.bf16.mxu0 0
        %4678 = vmatpush1.bf16.msra.mxu0 0
        %4679 = vmatprep.subr.bf16.mxu0 0
        %4680 = vmatpush1.bf16.msra.mxu0 0
        %4681 = vmatprep.subr.bf16.mxu0 0
        %4682 = vmatpush1.bf16.msra.mxu0 0
        %4683 = vmatprep.subr.bf16.mxu0 0
        %4684 = vmatpush1.bf16.msra.mxu0 0
        %4685 = vmatprep.subr.bf16.mxu0 0
        %4686 = vmatpush1.bf16.msra.mxu0 0
        %4687 = vmatprep.subr.bf16.mxu0 0
        %4688 = vmatpush1.bf16.msra.mxu0 0
        %4689 = vmatprep.subr.bf16.mxu0 0
        %4690 = vmatpush1.bf16.msra.mxu0 0
        %4691 = vmatprep.subr.bf16.mxu0 0
        %4692 = vmatpush1.bf16.msra.mxu0 0
        %4693 = vmatprep.subr.bf16.mxu0 0
        %4694 = vmatpush1.bf16.msra.mxu0 0
        %4695 = vmatprep.mubr.bf16.mxu0 0
        %4696 = vmatmul.mubr.bf16.gmra.mrb[0].mxu0 %v4661
        %v4697 = vpop.f32.mrb[0].mxu0
        %v4698 = vadd.f32 0.0, %v4697
        %v4699 = vpop.f32.mrb[0].mxu0
        %v4700 = vpop.f32.mrb[0].mxu0
        %v4701 = vpop.f32.mrb[0].mxu0
        %4702 = vdwg.mxu0
        %v4703 = vadd.f32 %v4613, %v4698
        %v4704 = vpack.c.bf16 %v4446, %v4446
        %s4705 = scalar_lea.vmem %s3, 120
        %v4706 = vld [vmem:[%s4705] sm:$0xf]
        %v4707 = vld [vmem:[%s4705 + $0x4] sm:$0xf]
        %v4708 = vld [vmem:[%s4705 + $0x8] sm:$0xf]
        %v4709 = vld [vmem:[%s4705 + $0xc] sm:$0xf]
        %v4710 = vld [vmem:[%s4705 + $0x10] sm:$0xf]
        %v4711 = vld [vmem:[%s4705 + $0x14] sm:$0xf]
        %v4712 = vld [vmem:[%s4705 + $0x18] sm:$0xf]
        %v4713 = vld [vmem:[%s4705 + $0x1c] sm:$0xf]
        %v4714 = vld [vmem:[%s4705 + $0x20] sm:$0xf]
        %v4715 = vld [vmem:[%s4705 + $0x24] sm:$0xf]
        %v4726 = vunpack.c.l.b16 %v4706
        %v4727 = vunpack.c.l.b16 %v4707
        %v4728 = vunpack.c.l.b16 %v4708
        %v4729 = vunpack.c.l.b16 %v4709
        %v4730 = vunpack.c.l.b16 %v4710
        %v4731 = vunpack.c.l.b16 %v4711
        %v4732 = vunpack.c.l.b16 %v4712
        %v4733 = vunpack.c.l.b16 %v4713
        %v4734 = vunpack.c.l.b16 %v4714
        %v4735 = vunpack.c.l.b16 %v4715
        %v4736 = vpack.c.b16 %v4727, %v4726
        %v4737 = vpack.c.b16 %v4729, %v4728
        %v4738 = vpack.c.b16 %v4731, %v4730
        %v4739 = vpack.c.b16 %v4733, %v4732
        %v4740 = vpack.c.b16 %v4735, %v4734
        %v4747 = vsel %vm4501, %v4704, 0
        %4749 = vmatprep.subr.bf16.mxu0 0
        %4750 = vmatpush1.bf16.msra.mxu0 %v4736
        %4751 = vmatprep.subr.bf16.mxu0 0
        %4752 = vmatpush1.bf16.msra.mxu0 %v4737
        %4753 = vmatprep.subr.bf16.mxu0 0
        %4754 = vmatpush1.bf16.msra.mxu0 %v4738
        %4755 = vmatprep.subr.bf16.mxu0 0
        %4756 = vmatpush1.bf16.msra.mxu0 %v4739
        %4757 = vmatprep.subr.bf16.mxu0 0
        %4758 = vmatpush1.bf16.msra.mxu0 %v4740
        %4759 = vmatprep.subr.bf16.mxu0 0
        %4760 = vmatpush1.bf16.msra.mxu0 0
        %4761 = vmatprep.subr.bf16.mxu0 0
        %4762 = vmatpush1.bf16.msra.mxu0 0
        %4763 = vmatprep.subr.bf16.mxu0 0
        %4764 = vmatpush1.bf16.msra.mxu0 0
        %4765 = vmatprep.subr.bf16.mxu0 0
        %4766 = vmatpush1.bf16.msra.mxu0 0
        %4767 = vmatprep.subr.bf16.mxu0 0
        %4768 = vmatpush1.bf16.msra.mxu0 0
        %4769 = vmatprep.subr.bf16.mxu0 0
        %4770 = vmatpush1.bf16.msra.mxu0 0
        %4771 = vmatprep.subr.bf16.mxu0 0
        %4772 = vmatpush1.bf16.msra.mxu0 0
        %4773 = vmatprep.subr.bf16.mxu0 0
        %4774 = vmatpush1.bf16.msra.mxu0 0
        %4775 = vmatprep.subr.bf16.mxu0 0
        %4776 = vmatpush1.bf16.msra.mxu0 0
        %4777 = vmatprep.subr.bf16.mxu0 0
        %4778 = vmatpush1.bf16.msra.mxu0 0
        %4779 = vmatprep.subr.bf16.mxu0 0
        %4780 = vmatpush1.bf16.msra.mxu0 0
        %4781 = vmatprep.mubr.bf16.mxu0 0
        %4782 = vmatmul.mubr.bf16.gmra.mrb[0].mxu0 %v4747
        %v4783 = vpop.f32.mrb[0].mxu0
        %v4784 = vadd.f32 0.0, %v4783
        %v4785 = vpop.f32.mrb[0].mxu0
        %v4786 = vpop.f32.mrb[0].mxu0
        %v4787 = vpop.f32.mrb[0].mxu0
        %4788 = vdwg.mxu0
        %v4789 = vadd.f32 %v4703, %v4784
        %v4790 = vpack.c.bf16 %v4447, %v4447
        %s4791 = scalar_lea.vmem %s3, 160
        %v4792 = vld [vmem:[%s4791] sm:$0xf]
        %v4793 = vld [vmem:[%s4791 + $0x4] sm:$0xf]
        %v4794 = vld [vmem:[%s4791 + $0x8] sm:$0xf]
        %v4795 = vld [vmem:[%s4791 + $0xc] sm:$0xf]
        %v4796 = vld [vmem:[%s4791 + $0x10] sm:$0xf]
        %v4797 = vld [vmem:[%s4791 + $0x14] sm:$0xf]
        %v4798 = vld [vmem:[%s4791 + $0x18] sm:$0xf]
        %v4799 = vld [vmem:[%s4791 + $0x1c] sm:$0xf]
        %v4800 = vld [vmem:[%s4791 + $0x20] sm:$0xf]
        %v4801 = vld [vmem:[%s4791 + $0x24] sm:$0xf]
        %v4812 = vunpack.c.l.b16 %v4792
        %v4813 = vunpack.c.l.b16 %v4793
        %v4814 = vunpack.c.l.b16 %v4794
        %v4815 = vunpack.c.l.b16 %v4795
        %v4816 = vunpack.c.l.b16 %v4796
        %v4817 = vunpack.c.l.b16 %v4797
        %v4818 = vunpack.c.l.b16 %v4798
        %v4819 = vunpack.c.l.b16 %v4799
        %v4820 = vunpack.c.l.b16 %v4800
        %v4821 = vunpack.c.l.b16 %v4801
        %v4822 = vpack.c.b16 %v4813, %v4812
        %v4823 = vpack.c.b16 %v4815, %v4814
        %v4824 = vpack.c.b16 %v4817, %v4816
        %v4825 = vpack.c.b16 %v4819, %v4818
        %v4826 = vpack.c.b16 %v4821, %v4820
        %v4833 = vsel %vm4501, %v4790, 0
        %4835 = vmatprep.subr.bf16.mxu0 0
        %4836 = vmatpush1.bf16.msra.mxu0 %v4822
        %4837 = vmatprep.subr.bf16.mxu0 0
        %4838 = vmatpush1.bf16.msra.mxu0 %v4823
        %4839 = vmatprep.subr.bf16.mxu0 0
        %4840 = vmatpush1.bf16.msra.mxu0 %v4824
        %4841 = vmatprep.subr.bf16.mxu0 0
        %4842 = vmatpush1.bf16.msra.mxu0 %v4825
        %4843 = vmatprep.subr.bf16.mxu0 0
        %4844 = vmatpush1.bf16.msra.mxu0 %v4826
        %4845 = vmatprep.subr.bf16.mxu0 0
        %4846 = vmatpush1.bf16.msra.mxu0 0
        %4847 = vmatprep.subr.bf16.mxu0 0
        %4848 = vmatpush1.bf16.msra.mxu0 0
        %4849 = vmatprep.subr.bf16.mxu0 0
        %4850 = vmatpush1.bf16.msra.mxu0 0
        %4851 = vmatprep.subr.bf16.mxu0 0
        %4852 = vmatpush1.bf16.msra.mxu0 0
        %4853 = vmatprep.subr.bf16.mxu0 0
        %4854 = vmatpush1.bf16.msra.mxu0 0
        %4855 = vmatprep.subr.bf16.mxu0 0
        %4856 = vmatpush1.bf16.msra.mxu0 0
        %4857 = vmatprep.subr.bf16.mxu0 0
        %4858 = vmatpush1.bf16.msra.mxu0 0
        %4859 = vmatprep.subr.bf16.mxu0 0
        %4860 = vmatpush1.bf16.msra.mxu0 0
        %4861 = vmatprep.subr.bf16.mxu0 0
        %4862 = vmatpush1.bf16.msra.mxu0 0
        %4863 = vmatprep.subr.bf16.mxu0 0
        %4864 = vmatpush1.bf16.msra.mxu0 0
        %4865 = vmatprep.subr.bf16.mxu0 0
        %4866 = vmatpush1.bf16.msra.mxu0 0
        %4867 = vmatprep.mubr.bf16.mxu0 0
        %4868 = vmatmul.mubr.bf16.gmra.mrb[0].mxu0 %v4833
        %v4869 = vpop.f32.mrb[0].mxu0
        %v4870 = vadd.f32 0.0, %v4869
        %v4871 = vpop.f32.mrb[0].mxu0
        %v4872 = vpop.f32.mrb[0].mxu0
        %v4873 = vpop.f32.mrb[0].mxu0
        %4874 = vdwg.mxu0
        %v4875 = vadd.f32 %v4789, %v4870
        %v4876 = vlaneseq
        %v4877 = vshrl.u32 %v4876, 7
        %v4878 = vsub.s32 0, %v4877
        %v4879 = vrot.slane %v411, %v4878
        %v4880 = vadd.f32 %v4875, %v4879
        %v4881 = vmax.f32 %v4880, 0.0
        %v4882 = vpack.c.bf16 %v4881, %v4881
        %v4883 = vld [vmem:[%s4] sm:$0xf]
        %v4884 = vld [vmem:[%s4 + $0x4] sm:$0xf]
        %v4885 = vld [vmem:[%s4 + $0x8] sm:$0xf]
        %v4886 = vld [vmem:[%s4 + $0xc] sm:$0xf]
        %v4887 = vld [vmem:[%s4 + $0x10] sm:$0xf]
        %v4888 = vld [vmem:[%s4 + $0x14] sm:$0xf]
        %v4889 = vld [vmem:[%s4 + $0x18] sm:$0xf]
        %v4890 = vld [vmem:[%s4 + $0x1c] sm:$0xf]
        %v4891 = vld [vmem:[%s4 + $0x20] sm:$0xf]
        %v4892 = vld [vmem:[%s4 + $0x24] sm:$0xf]
        %v4893 = vld [vmem:[%s4 + $0x28] sm:$0xf]
        %v4894 = vld [vmem:[%s4 + $0x2c] sm:$0xf]
        %v4895 = vld [vmem:[%s4 + $0x30] sm:$0xf]
        %v4896 = vld [vmem:[%s4 + $0x34] sm:$0xf]
        %v4897 = vld [vmem:[%s4 + $0x38] sm:$0xf]
        %v4898 = vld [vmem:[%s4 + $0x3c] sm:$0xf]
        %v4899 = vlaneseq
        %v4900 = vshrl.u32 %v4899, 7
        %v4901 = vsub.s32 0, %v4900
        %v4902 = vrot.slane %v412, %v4901
        %v4919 = vunpack.c.l.b16 %v4883
        %v4920 = vunpack.c.l.b16 %v4884
        %v4921 = vunpack.c.l.b16 %v4885
        %v4922 = vunpack.c.l.b16 %v4886
        %v4923 = vunpack.c.l.b16 %v4887
        %v4924 = vunpack.c.l.b16 %v4888
        %v4925 = vunpack.c.l.b16 %v4889
        %v4926 = vunpack.c.l.b16 %v4890
        %v4927 = vunpack.c.l.b16 %v4891
        %v4928 = vunpack.c.l.b16 %v4892
        %v4929 = vunpack.c.l.b16 %v4893
        %v4930 = vunpack.c.l.b16 %v4894
        %v4931 = vunpack.c.l.b16 %v4895
        %v4932 = vunpack.c.l.b16 %v4896
        %v4933 = vunpack.c.l.b16 %v4897
        %v4934 = vunpack.c.l.b16 %v4898
        %v4935 = vpack.c.b16 %v4920, %v4919
        %v4936 = vpack.c.b16 %v4922, %v4921
        %v4937 = vpack.c.b16 %v4924, %v4923
        %v4938 = vpack.c.b16 %v4926, %v4925
        %v4939 = vpack.c.b16 %v4928, %v4927
        %v4940 = vpack.c.b16 %v4930, %v4929
        %v4941 = vpack.c.b16 %v4932, %v4931
        %v4942 = vpack.c.b16 %v4934, %v4933
        %4951 = vmatprep.subr.bf16.mxu0 0
        %4952 = vmatpush1.bf16.msra.mxu0 %v4935
        %4953 = vmatprep.subr.bf16.mxu0 0
        %4954 = vmatpush1.bf16.msra.mxu0 %v4936
        %4955 = vmatprep.subr.bf16.mxu0 0
        %4956 = vmatpush1.bf16.msra.mxu0 %v4937
        %4957 = vmatprep.subr.bf16.mxu0 0
        %4958 = vmatpush1.bf16.msra.mxu0 %v4938
        %4959 = vmatprep.subr.bf16.mxu0 0
        %4960 = vmatpush1.bf16.msra.mxu0 %v4939
        %4961 = vmatprep.subr.bf16.mxu0 0
        %4962 = vmatpush1.bf16.msra.mxu0 %v4940
        %4963 = vmatprep.subr.bf16.mxu0 0
        %4964 = vmatpush1.bf16.msra.mxu0 %v4941
        %4965 = vmatprep.subr.bf16.mxu0 0
        %4966 = vmatpush1.bf16.msra.mxu0 %v4942
        %4967 = vmatprep.subr.bf16.mxu0 0
        %4968 = vmatpush1.bf16.msra.mxu0 0
        %4969 = vmatprep.subr.bf16.mxu0 0
        %4970 = vmatpush1.bf16.msra.mxu0 0
        %4971 = vmatprep.subr.bf16.mxu0 0
        %4972 = vmatpush1.bf16.msra.mxu0 0
        %4973 = vmatprep.subr.bf16.mxu0 0
        %4974 = vmatpush1.bf16.msra.mxu0 0
        %4975 = vmatprep.subr.bf16.mxu0 0
        %4976 = vmatpush1.bf16.msra.mxu0 0
        %4977 = vmatprep.subr.bf16.mxu0 0
        %4978 = vmatpush1.bf16.msra.mxu0 0
        %4979 = vmatprep.subr.bf16.mxu0 0
        %4980 = vmatpush1.bf16.msra.mxu0 0
        %4981 = vmatprep.subr.bf16.mxu0 0
        %4982 = vmatpush1.bf16.msra.mxu0 0
        %4983 = vmatprep.mubr.bf16.mxu0 0
        %4984 = vmatmul.mubr.bf16.gmra.mrb[0].mxu0 %v4882
        %v4985 = vpop.f32.mrb[0].mxu0
        %v4986 = vadd.f32 %v4902, %v4985
        %v4987 = vpop.f32.mrb[0].mxu0
        %v4988 = vpop.f32.mrb[0].mxu0
        %v4989 = vpop.f32.mrb[0].mxu0
        %4990 = vdwg.mxu0
        %v4991 = vmax.f32 %v4986, 0.0
        %v4992 = vpack.c.bf16 %v4991, %v4991
        %s4993 = scalar_lea.vmem %s4, 64
        %v4994 = vld [vmem:[%s4993] sm:$0xf]
        %v4995 = vld [vmem:[%s4993 + $0x4] sm:$0xf]
        %v4996 = vld [vmem:[%s4993 + $0x8] sm:$0xf]
        %v4997 = vld [vmem:[%s4993 + $0xc] sm:$0xf]
        %v4998 = vld [vmem:[%s4993 + $0x10] sm:$0xf]
        %v4999 = vld [vmem:[%s4993 + $0x14] sm:$0xf]
        %v5000 = vld [vmem:[%s4993 + $0x18] sm:$0xf]
        %v5001 = vld [vmem:[%s4993 + $0x1c] sm:$0xf]
        %v5002 = vld [vmem:[%s4993 + $0x20] sm:$0xf]
        %v5003 = vld [vmem:[%s4993 + $0x24] sm:$0xf]
        %v5004 = vld [vmem:[%s4993 + $0x28] sm:$0xf]
        %v5005 = vld [vmem:[%s4993 + $0x2c] sm:$0xf]
        %v5006 = vld [vmem:[%s4993 + $0x30] sm:$0xf]
        %v5007 = vld [vmem:[%s4993 + $0x34] sm:$0xf]
        %v5008 = vld [vmem:[%s4993 + $0x38] sm:$0xf]
        %v5009 = vld [vmem:[%s4993 + $0x3c] sm:$0xf]
        %v5010 = vlaneseq
        %v5011 = vshrl.u32 %v5010, 7
        %v5012 = vsub.s32 0, %v5011
        %v5013 = vrot.slane %v413, %v5012
        %v5030 = vunpack.c.l.b16 %v4994
        %v5031 = vunpack.c.l.b16 %v4995
        %v5032 = vunpack.c.l.b16 %v4996
        %v5033 = vunpack.c.l.b16 %v4997
        %v5034 = vunpack.c.l.b16 %v4998
        %v5035 = vunpack.c.l.b16 %v4999
        %v5036 = vunpack.c.l.b16 %v5000
        %v5037 = vunpack.c.l.b16 %v5001
        %v5038 = vunpack.c.l.b16 %v5002
        %v5039 = vunpack.c.l.b16 %v5003
        %v5040 = vunpack.c.l.b16 %v5004
        %v5041 = vunpack.c.l.b16 %v5005
        %v5042 = vunpack.c.l.b16 %v5006
        %v5043 = vunpack.c.l.b16 %v5007
        %v5044 = vunpack.c.l.b16 %v5008
        %v5045 = vunpack.c.l.b16 %v5009
        %v5046 = vpack.c.b16 %v5031, %v5030
        %v5047 = vpack.c.b16 %v5033, %v5032
        %v5048 = vpack.c.b16 %v5035, %v5034
        %v5049 = vpack.c.b16 %v5037, %v5036
        %v5050 = vpack.c.b16 %v5039, %v5038
        %v5051 = vpack.c.b16 %v5041, %v5040
        %v5052 = vpack.c.b16 %v5043, %v5042
        %v5053 = vpack.c.b16 %v5045, %v5044
        %5062 = vmatprep.subr.bf16.mxu0 0
        %5063 = vmatpush1.bf16.msra.mxu0 %v5046
        %5064 = vmatprep.subr.bf16.mxu0 0
        %5065 = vmatpush1.bf16.msra.mxu0 %v5047
        %5066 = vmatprep.subr.bf16.mxu0 0
        %5067 = vmatpush1.bf16.msra.mxu0 %v5048
        %5068 = vmatprep.subr.bf16.mxu0 0
        %5069 = vmatpush1.bf16.msra.mxu0 %v5049
        %5070 = vmatprep.subr.bf16.mxu0 0
        %5071 = vmatpush1.bf16.msra.mxu0 %v5050
        %5072 = vmatprep.subr.bf16.mxu0 0
        %5073 = vmatpush1.bf16.msra.mxu0 %v5051
        %5074 = vmatprep.subr.bf16.mxu0 0
        %5075 = vmatpush1.bf16.msra.mxu0 %v5052
        %5076 = vmatprep.subr.bf16.mxu0 0
        %5077 = vmatpush1.bf16.msra.mxu0 %v5053
        %5078 = vmatprep.subr.bf16.mxu0 0
        %5079 = vmatpush1.bf16.msra.mxu0 0
        %5080 = vmatprep.subr.bf16.mxu0 0
        %5081 = vmatpush1.bf16.msra.mxu0 0
        %5082 = vmatprep.subr.bf16.mxu0 0
        %5083 = vmatpush1.bf16.msra.mxu0 0
        %5084 = vmatprep.subr.bf16.mxu0 0
        %5085 = vmatpush1.bf16.msra.mxu0 0
        %5086 = vmatprep.subr.bf16.mxu0 0
        %5087 = vmatpush1.bf16.msra.mxu0 0
        %5088 = vmatprep.subr.bf16.mxu0 0
        %5089 = vmatpush1.bf16.msra.mxu0 0
        %5090 = vmatprep.subr.bf16.mxu0 0
        %5091 = vmatpush1.bf16.msra.mxu0 0
        %5092 = vmatprep.subr.bf16.mxu0 0
        %5093 = vmatpush1.bf16.msra.mxu0 0
        %5094 = vmatprep.mubr.bf16.mxu0 0
        %5095 = vmatmul.mubr.bf16.gmra.mrb[0].mxu0 %v4992
        %v5096 = vpop.f32.mrb[0].mxu0
        %v5097 = vadd.f32 %v5013, %v5096
        %v5098 = vpop.f32.mrb[0].mxu0
        %v5099 = vpop.f32.mrb[0].mxu0
        %v5100 = vpop.f32.mrb[0].mxu0
        %5101 = vdwg.mxu0
        %5102 = vst [vmem:[%s407] sm:$0xff] %v5097
        %s5103 = sand.u32 %s159, 1
        %s5104 = scalar_lea.sflag [#allocation4], %s5103
        %s5105 = sand.u32 %s159, 1
        %s5106 = smul.addr %s5105, 8
        %s5107 = scalar_lea.vmem [#allocation3], %s5106
        // Predicated region
        $region83: #{net_forward.1} parent=77 // pred_check
          %p5108 = pneg %p169
        $region84: #{net_forward.1} parent=77 // pred_check_branch
          %5110 = sbr.rel (%p5108) target = $region86
        $region85: #{net_forward.1} parent=77 // pred_region
          %s5112 = ssub.s32 128, 128
          %5113 = vsyncadd %s5104, %s5112
          %s5114 = smul.addr %s20, 128
          %s5115 = scalar_lea.hbm %s6, %s5114
          %s5117 = sshll.u32 %s5107, 4
          %s5118 = int_to_ptr.vmem [resolvable:$true] %s5117
          %5120 = dma.vmem_to_hbm [thread:$0]  %s5118, 128, %s5115, %s5104
        $region86: #{net_forward.1} parent=77 // pred_fallthru
          _
      $region78: #{net_forward.1} parent=5 // pred_fallthru
        _
      %p5121 = scmp.le.s32.totalorder 2, %s15
      // Predicated region
      $region87: #{net_forward.1} parent=5 // pred_check
        %p5122 = pneg %p5121
      $region88: #{net_forward.1} parent=5 // pred_check_branch
        %5124 = sbr.rel (%p5122) target = $region90
      $region89: #{net_forward.1} parent=5 // pred_region
        %s5125 = ssub.s32 %s15, 2
        // Predicated region
        $region91: #{net_forward.1} parent=89 // pred_check
          %p5126 = pneg %p175
        $region92: #{net_forward.1} parent=89 // pred_check_branch
          %5128 = sbr.rel (%p5126) target = $region94
        $region93: #{net_forward.1} parent=89 // pred_region
          %s5129 = sand.u32 %s160, 1
          %s5130 = scalar_lea.sflag [#allocation4], %s5129
          %s5131 = sand.u32 %s160, 1
          %s5132 = smul.addr %s5131, 8
          %s5133 = scalar_lea.vmem [#allocation3], %s5132
          %5134 = dma.done %s5130, 128
        $region94: #{net_forward.1} parent=89 // pred_fallthru
          _
      $region90: #{net_forward.1} parent=5 // pred_fallthru
        _
    $region6: #{net_forward.1} parent=1 // loop_footer
      %s19 = sadd.s32 1, %s15
    $region7: #{net_forward.1} parent=1 // loop_footer_branch
      %14 = sbr.rel target = $region3
    $region8: #{net_forward.1} parent=1 // loop_exit
      _
    %5135 = vsyncpa [#allocation4], 1
    %s5136 = scalar_lea.sflag [#allocation4], 1
    %5137 = vsyncpa %s5136, 1

</llo_original>
